<compile_context>
chip_gen: v7x
topology: tpu7x:2x2x1
jax: 0.10.0
libtpu: 0.0.40
codegen_flags: <defaults>
</compile_context>

<pallas_src>
import jax
import jax.numpy as jnp
from jax.experimental import pallas as pl
from jax.experimental.pallas import tpu as pltpu


def _make_fused_kernel(kz, C, H, W):
    """Fused residual-block kernel body for fixed static shapes."""
    p = kz // 2
    He, We = H + 2 * p, W + 2 * p          # halo-extended domain for h

    def widx(dy, dx, ci, co):
        # flat index into a raveled (kz, kz, Cin, Cout) weight tensor
        return ((dy * kz + dx) * C + ci) * C + co

    def kernel(xpp_ref, w1_ref, b1_ref, w2_ref, b2_ref, o_ref):
        # Padded input tile (C, H+4p, W+4p): load once, slice the value.
        xpp = xpp_ref[0].astype(jnp.float32)

        # Mask selecting the valid h region inside the halo-extended domain
        # (outside it, zero == conv2's "same" zero padding of h).
        row = jax.lax.broadcasted_iota(jnp.int32, (He, We), 0)
        col = jax.lax.broadcasted_iota(jnp.int32, (He, We), 1)
        interior = (row >= p) & (row < p + H) & (col >= p) & (col < p + W)

        # ---- conv1 + bias + ReLU on the extended domain (pure VPU) ----
        acc1 = [jnp.full((He, We), b1_ref[co], jnp.float32) for co in range(C)]
        for dy in range(kz):
            for dx in range(kz):
                for ci in range(C):
                    xs = xpp[ci, dy:dy + He, dx:dx + We]      # sliced once
                    for co in range(C):
                        acc1[co] = acc1[co] + w1_ref[widx(dy, dx, ci, co)] * xs
        hext = [jnp.where(interior, jnp.maximum(a, 0.0), 0.0) for a in acc1]

        # ---- conv2 + bias + residual (residual reuses the resident tile) ----
        acc2 = [jnp.full((H, W), b2_ref[co], jnp.float32) for co in range(C)]
        for dy in range(kz):
            for dx in range(kz):
                for ci in range(C):
                    hs = hext[ci][dy:dy + H, dx:dx + W]       # sliced once
                    for co in range(C):
                        acc2[co] = acc2[co] + w2_ref[widx(dy, dx, ci, co)] * hs
        for co in range(C):
            res = xpp[co, 2 * p:2 * p + H, 2 * p:2 * p + W]
            o_ref[0, co] = (acc2[co] + res).astype(o_ref.dtype)

    return kernel


def residual_block(x_nchw, w1, b1, w2, b2):
    """ResidualBlock forward: x + conv2(relu(conv1(x))). NCHW in / NCHW out.

    w1, w2: (kz, kz, C, C) HWIO conv weights; b1, b2: (C,) biases.
    """
    N, C, H, W = x_nchw.shape
    kz = w1.shape[0]
    assert kz % 2 == 1, "fused same-padding path assumes odd kernel size"
    p = kz // 2

    # One pre-pad by 2p: gives conv1 its halo so everything else fuses.
    xpp = jnp.pad(x_nchw, ((0, 0), (0, 0), (2 * p, 2 * p), (2 * p, 2 * p)))
    Hpp, Wpp = H + 4 * p, W + 4 * p

    kernel = _make_fused_kernel(kz, C, H, W)
    smem = pl.BlockSpec(memory_space=pltpu.MemorySpace.SMEM)

    return pl.pallas_call(
        kernel,
        out_shape=jax.ShapeDtypeStruct((N, C, H, W), x_nchw.dtype),
        grid=(N,),
        in_specs=[
            pl.BlockSpec((1, C, Hpp, Wpp), lambda n: (n, 0, 0, 0)),  # padded x
            smem, smem, smem, smem,                                  # w1,b1,w2,b2
        ],
        out_specs=pl.BlockSpec((1, C, H, W), lambda n: (n, 0, 0, 0)),
        compiler_params=pltpu.CompilerParams(
            dimension_semantics=("parallel",)),
    )(xpp, w1.reshape(-1), b1.reshape(-1), w2.reshape(-1), b2.reshape(-1))


residual_block_jit = jax.jit(residual_block)


def _reference(x_nchw, w1, b1, w2, b2):
    """Plain-JAX reference for correctness checking (NCHW)."""
    dn = ("NCHW", "HWIO", "NCHW")
    h = jax.lax.conv_general_dilated(x_nchw, w1, (1, 1), "SAME",
                                     dimension_numbers=dn)
    h = jnp.maximum(h + b1.reshape(1, -1, 1, 1), 0.0)
    y = jax.lax.conv_general_dilated(h, w2, (1, 1), "SAME",
                                     dimension_numbers=dn)
    y = y + b2.reshape(1, -1, 1, 1)
    return x_nchw + y


if __name__ == "__main__":
    # Module config: ResidualBlock(nf=4, kz=3, bias=True)
    nf, kz = 4, 3
    N, H, W = 2, 16, 16

    key = jax.random.PRNGKey(0)
    kx, kw1, kb1, kw2, kb2 = jax.random.split(key, 5)

    x = jax.random.normal(kx, (N, nf, H, W), dtype=jnp.float32)       # NCHW
    w1 = jax.random.normal(kw1, (kz, kz, nf, nf), dtype=jnp.float32) * 0.1
    b1 = jax.random.normal(kb1, (nf,), dtype=jnp.float32) * 0.1
    w2 = jax.random.normal(kw2, (kz, kz, nf, nf), dtype=jnp.float32) * 0.1
    b2 = jax.random.normal(kb2, (nf,), dtype=jnp.float32) * 0.1

    out = jax.block_until_ready(residual_block_jit(x, w1, b1, w2, b2))
    ref = jax.block_until_ready(_reference(x, w1, b1, w2, b2))

    assert out.shape == (N, nf, H, W)
    assert jnp.max(jnp.abs(out - ref)) < 1e-4, "mismatch vs reference"

    print("KERNEL_OK")
</pallas_src>

<mosaic_0001>
module attributes {stable_mosaic.version = 11 : i64} {
  func.func @kernel(%arg0: i32, %arg1: memref<1x4x20x20xf32, #tpu.memory_space<vmem>>, %arg2: memref<144xf32, #tpu.memory_space<smem>>, %arg3: memref<4xf32, #tpu.memory_space<smem>>, %arg4: memref<144xf32, #tpu.memory_space<smem>>, %arg5: memref<4xf32, #tpu.memory_space<smem>>, %arg6: memref<1x4x16x16xf32, #tpu.memory_space<vmem>>) attributes {dimension_semantics = [#tpu.dimension_semantics<parallel>], iteration_bounds = array<i64: 2>, scalar_prefetch = 0 : i64, scratch_operands = 0 : i64, tpu.core_type = #tpu.core_type<tc>, window_params = [{transform_indices = @transform_0, window_bounds = array<i64: 1, 4, 20, 20>}, {transform_indices = @transform_1, window_bounds = array<i64: 144>}, {transform_indices = @transform_2, window_bounds = array<i64: 4>}, {transform_indices = @transform_3, window_bounds = array<i64: 144>}, {transform_indices = @transform_4, window_bounds = array<i64: 4>}, {transform_indices = @transform_5, window_bounds = array<i64: 1, 4, 16, 16>}]} {
    %c0 = arith.constant 0 : index
    %c0_0 = arith.constant 0 : index
    %c0_1 = arith.constant 0 : index
    %c0_2 = arith.constant 0 : index
    %0 = vector.load %arg1[%c0, %c0_0, %c0_1, %c0_2] : memref<1x4x20x20xf32, #tpu.memory_space<vmem>>, vector<1x4x20x20xf32>
    %1 = vector.shape_cast %0 : vector<1x4x20x20xf32> to vector<4x20x20xf32>
    %2 = tpu.iota {dimensions = array<i32: 0>} : vector<18x18xi32>
    %3 = tpu.iota {dimensions = array<i32: 1>} : vector<18x18xi32>
    %c1_i32 = arith.constant 1 : i32
    %4 = vector.broadcast %c1_i32 : i32 to vector<18x18xi32>
    %5 = arith.cmpi sge, %2, %4 : vector<18x18xi32>
    %c17_i32 = arith.constant 17 : i32
    %6 = vector.broadcast %c17_i32 : i32 to vector<18x18xi32>
    %7 = arith.cmpi slt, %2, %6 : vector<18x18xi32>
    %8 = arith.andi %5, %7 : vector<18x18xi1>
    %c1_i32_3 = arith.constant 1 : i32
    %9 = vector.broadcast %c1_i32_3 : i32 to vector<18x18xi32>
    %10 = arith.cmpi sge, %3, %9 : vector<18x18xi32>
    %11 = arith.andi %8, %10 : vector<18x18xi1>
    %c17_i32_4 = arith.constant 17 : i32
    %12 = vector.broadcast %c17_i32_4 : i32 to vector<18x18xi32>
    %13 = arith.cmpi slt, %3, %12 : vector<18x18xi32>
    %14 = arith.andi %11, %13 : vector<18x18xi1>
    %c0_5 = arith.constant 0 : index
    %15 = memref.load %arg3[%c0_5] : memref<4xf32, #tpu.memory_space<smem>>
    %16 = vector.broadcast %15 : f32 to vector<18x18xf32>
    %c1 = arith.constant 1 : index
    %17 = memref.load %arg3[%c1] : memref<4xf32, #tpu.memory_space<smem>>
    %18 = vector.broadcast %17 : f32 to vector<18x18xf32>
    %c2 = arith.constant 2 : index
    %19 = memref.load %arg3[%c2] : memref<4xf32, #tpu.memory_space<smem>>
    %20 = vector.broadcast %19 : f32 to vector<18x18xf32>
    %c3 = arith.constant 3 : index
    %21 = memref.load %arg3[%c3] : memref<4xf32, #tpu.memory_space<smem>>
    %22 = vector.broadcast %21 : f32 to vector<18x18xf32>
    %23 = vector.extract_strided_slice %1 {offsets = [0, 0, 0], sizes = [1, 18, 18], strides = [1, 1, 1]} : vector<4x20x20xf32> to vector<1x18x18xf32>
    %24 = vector.shape_cast %23 : vector<1x18x18xf32> to vector<18x18xf32>
    %c0_6 = arith.constant 0 : index
    %25 = memref.load %arg2[%c0_6] : memref<144xf32, #tpu.memory_space<smem>>
    %26 = vector.broadcast %25 : f32 to vector<18x18xf32>
    %27 = arith.mulf %26, %24 : vector<18x18xf32>
    %28 = arith.addf %16, %27 : vector<18x18xf32>
    %c1_7 = arith.constant 1 : index
    %29 = memref.load %arg2[%c1_7] : memref<144xf32, #tpu.memory_space<smem>>
    %30 = vector.broadcast %29 : f32 to vector<18x18xf32>
    %31 = arith.mulf %30, %24 : vector<18x18xf32>
    %32 = arith.addf %18, %31 : vector<18x18xf32>
    %c2_8 = arith.constant 2 : index
    %33 = memref.load %arg2[%c2_8] : memref<144xf32, #tpu.memory_space<smem>>
    %34 = vector.broadcast %33 : f32 to vector<18x18xf32>
    %35 = arith.mulf %34, %24 : vector<18x18xf32>
    %36 = arith.addf %20, %35 : vector<18x18xf32>
    %c3_9 = arith.constant 3 : index
    %37 = memref.load %arg2[%c3_9] : memref<144xf32, #tpu.memory_space<smem>>
    %38 = vector.broadcast %37 : f32 to vector<18x18xf32>
    %39 = arith.mulf %38, %24 : vector<18x18xf32>
    %40 = arith.addf %22, %39 : vector<18x18xf32>
    %41 = vector.extract_strided_slice %1 {offsets = [1, 0, 0], sizes = [1, 18, 18], strides = [1, 1, 1]} : vector<4x20x20xf32> to vector<1x18x18xf32>
    %42 = vector.shape_cast %41 : vector<1x18x18xf32> to vector<18x18xf32>
    %c4 = arith.constant 4 : index
    %43 = memref.load %arg2[%c4] : memref<144xf32, #tpu.memory_space<smem>>
    %44 = vector.broadcast %43 : f32 to vector<18x18xf32>
    %45 = arith.mulf %44, %42 : vector<18x18xf32>
    %46 = arith.addf %28, %45 : vector<18x18xf32>
    %c5 = arith.constant 5 : index
    %47 = memref.load %arg2[%c5] : memref<144xf32, #tpu.memory_space<smem>>
    %48 = vector.broadcast %47 : f32 to vector<18x18xf32>
    %49 = arith.mulf %48, %42 : vector<18x18xf32>
    %50 = arith.addf %32, %49 : vector<18x18xf32>
    %c6 = arith.constant 6 : index
    %51 = memref.load %arg2[%c6] : memref<144xf32, #tpu.memory_space<smem>>
    %52 = vector.broadcast %51 : f32 to vector<18x18xf32>
    %53 = arith.mulf %52, %42 : vector<18x18xf32>
    %54 = arith.addf %36, %53 : vector<18x18xf32>
    %c7 = arith.constant 7 : index
    %55 = memref.load %arg2[%c7] : memref<144xf32, #tpu.memory_space<smem>>
    %56 = vector.broadcast %55 : f32 to vector<18x18xf32>
    %57 = arith.mulf %56, %42 : vector<18x18xf32>
    %58 = arith.addf %40, %57 : vector<18x18xf32>
    %59 = vector.extract_strided_slice %1 {offsets = [2, 0, 0], sizes = [1, 18, 18], strides = [1, 1, 1]} : vector<4x20x20xf32> to vector<1x18x18xf32>
    %60 = vector.shape_cast %59 : vector<1x18x18xf32> to vector<18x18xf32>
    %c8 = arith.constant 8 : index
    %61 = memref.load %arg2[%c8] : memref<144xf32, #tpu.memory_space<smem>>
    %62 = vector.broadcast %61 : f32 to vector<18x18xf32>
    %63 = arith.mulf %62, %60 : vector<18x18xf32>
    %64 = arith.addf %46, %63 : vector<18x18xf32>
    %c9 = arith.constant 9 : index
    %65 = memref.load %arg2[%c9] : memref<144xf32, #tpu.memory_space<smem>>
    %66 = vector.broadcast %65 : f32 to vector<18x18xf32>
    %67 = arith.mulf %66, %60 : vector<18x18xf32>
    %68 = arith.addf %50, %67 : vector<18x18xf32>
    %c10 = arith.constant 10 : index
    %69 = memref.load %arg2[%c10] : memref<144xf32, #tpu.memory_space<smem>>
    %70 = vector.broadcast %69 : f32 to vector<18x18xf32>
    %71 = arith.mulf %70, %60 : vector<18x18xf32>
    %72 = arith.addf %54, %71 : vector<18x18xf32>
    %c11 = arith.constant 11 : index
    %73 = memref.load %arg2[%c11] : memref<144xf32, #tpu.memory_space<smem>>
    %74 = vector.broadcast %73 : f32 to vector<18x18xf32>
    %75 = arith.mulf %74, %60 : vector<18x18xf32>
    %76 = arith.addf %58, %75 : vector<18x18xf32>
    %77 = vector.extract_strided_slice %1 {offsets = [3, 0, 0], sizes = [1, 18, 18], strides = [1, 1, 1]} : vector<4x20x20xf32> to vector<1x18x18xf32>
    %78 = vector.shape_cast %77 : vector<1x18x18xf32> to vector<18x18xf32>
    %c12 = arith.constant 12 : index
    %79 = memref.load %arg2[%c12] : memref<144xf32, #tpu.memory_space<smem>>
    %80 = vector.broadcast %79 : f32 to vector<18x18xf32>
    %81 = arith.mulf %80, %78 : vector<18x18xf32>
    %82 = arith.addf %64, %81 : vector<18x18xf32>
    %c13 = arith.constant 13 : index
    %83 = memref.load %arg2[%c13] : memref<144xf32, #tpu.memory_space<smem>>
    %84 = vector.broadcast %83 : f32 to vector<18x18xf32>
    %85 = arith.mulf %84, %78 : vector<18x18xf32>
    %86 = arith.addf %68, %85 : vector<18x18xf32>
    %c14 = arith.constant 14 : index
    %87 = memref.load %arg2[%c14] : memref<144xf32, #tpu.memory_space<smem>>
    %88 = vector.broadcast %87 : f32 to vector<18x18xf32>
    %89 = arith.mulf %88, %78 : vector<18x18xf32>
    %90 = arith.addf %72, %89 : vector<18x18xf32>
    %c15 = arith.constant 15 : index
    %91 = memref.load %arg2[%c15] : memref<144xf32, #tpu.memory_space<smem>>
    %92 = vector.broadcast %91 : f32 to vector<18x18xf32>
    %93 = arith.mulf %92, %78 : vector<18x18xf32>
    %94 = arith.addf %76, %93 : vector<18x18xf32>
    %95 = vector.extract_strided_slice %1 {offsets = [0, 0, 1], sizes = [1, 18, 18], strides = [1, 1, 1]} : vector<4x20x20xf32> to vector<1x18x18xf32>
    %96 = vector.shape_cast %95 : vector<1x18x18xf32> to vector<18x18xf32>
    %c16 = arith.constant 16 : index
    %97 = memref.load %arg2[%c16] : memref<144xf32, #tpu.memory_space<smem>>
    %98 = vector.broadcast %97 : f32 to vector<18x18xf32>
    %99 = arith.mulf %98, %96 : vector<18x18xf32>
    %100 = arith.addf %82, %99 : vector<18x18xf32>
    %c17 = arith.constant 17 : index
    %101 = memref.load %arg2[%c17] : memref<144xf32, #tpu.memory_space<smem>>
    %102 = vector.broadcast %101 : f32 to vector<18x18xf32>
    %103 = arith.mulf %102, %96 : vector<18x18xf32>
    %104 = arith.addf %86, %103 : vector<18x18xf32>
    %c18 = arith.constant 18 : index
    %105 = memref.load %arg2[%c18] : memref<144xf32, #tpu.memory_space<smem>>
    %106 = vector.broadcast %105 : f32 to vector<18x18xf32>
    %107 = arith.mulf %106, %96 : vector<18x18xf32>
    %108 = arith.addf %90, %107 : vector<18x18xf32>
    %c19 = arith.constant 19 : index
    %109 = memref.load %arg2[%c19] : memref<144xf32, #tpu.memory_space<smem>>
    %110 = vector.broadcast %109 : f32 to vector<18x18xf32>
    %111 = arith.mulf %110, %96 : vector<18x18xf32>
    %112 = arith.addf %94, %111 : vector<18x18xf32>
    %113 = vector.extract_strided_slice %1 {offsets = [1, 0, 1], sizes = [1, 18, 18], strides = [1, 1, 1]} : vector<4x20x20xf32> to vector<1x18x18xf32>
    %114 = vector.shape_cast %113 : vector<1x18x18xf32> to vector<18x18xf32>
    %c20 = arith.constant 20 : index
    %115 = memref.load %arg2[%c20] : memref<144xf32, #tpu.memory_space<smem>>
    %116 = vector.broadcast %115 : f32 to vector<18x18xf32>
    %117 = arith.mulf %116, %114 : vector<18x18xf32>
    %118 = arith.addf %100, %117 : vector<18x18xf32>
    %c21 = arith.constant 21 : index
    %119 = memref.load %arg2[%c21] : memref<144xf32, #tpu.memory_space<smem>>
    %120 = vector.broadcast %119 : f32 to vector<18x18xf32>
    %121 = arith.mulf %120, %114 : vector<18x18xf32>
    %122 = arith.addf %104, %121 : vector<18x18xf32>
    %c22 = arith.constant 22 : index
    %123 = memref.load %arg2[%c22] : memref<144xf32, #tpu.memory_space<smem>>
    %124 = vector.broadcast %123 : f32 to vector<18x18xf32>
    %125 = arith.mulf %124, %114 : vector<18x18xf32>
    %126 = arith.addf %108, %125 : vector<18x18xf32>
    %c23 = arith.constant 23 : index
    %127 = memref.load %arg2[%c23] : memref<144xf32, #tpu.memory_space<smem>>
    %128 = vector.broadcast %127 : f32 to vector<18x18xf32>
    %129 = arith.mulf %128, %114 : vector<18x18xf32>
    %130 = arith.addf %112, %129 : vector<18x18xf32>
    %131 = vector.extract_strided_slice %1 {offsets = [2, 0, 1], sizes = [1, 18, 18], strides = [1, 1, 1]} : vector<4x20x20xf32> to vector<1x18x18xf32>
    %132 = vector.shape_cast %131 : vector<1x18x18xf32> to vector<18x18xf32>
    %c24 = arith.constant 24 : index
    %133 = memref.load %arg2[%c24] : memref<144xf32, #tpu.memory_space<smem>>
    %134 = vector.broadcast %133 : f32 to vector<18x18xf32>
    %135 = arith.mulf %134, %132 : vector<18x18xf32>
    %136 = arith.addf %118, %135 : vector<18x18xf32>
    %c25 = arith.constant 25 : index
    %137 = memref.load %arg2[%c25] : memref<144xf32, #tpu.memory_space<smem>>
    %138 = vector.broadcast %137 : f32 to vector<18x18xf32>
    %139 = arith.mulf %138, %132 : vector<18x18xf32>
    %140 = arith.addf %122, %139 : vector<18x18xf32>
    %c26 = arith.constant 26 : index
    %141 = memref.load %arg2[%c26] : memref<144xf32, #tpu.memory_space<smem>>
    %142 = vector.broadcast %141 : f32 to vector<18x18xf32>
    %143 = arith.mulf %142, %132 : vector<18x18xf32>
    %144 = arith.addf %126, %143 : vector<18x18xf32>
    %c27 = arith.constant 27 : index
    %145 = memref.load %arg2[%c27] : memref<144xf32, #tpu.memory_space<smem>>
    %146 = vector.broadcast %145 : f32 to vector<18x18xf32>
    %147 = arith.mulf %146, %132 : vector<18x18xf32>
    %148 = arith.addf %130, %147 : vector<18x18xf32>
    %149 = vector.extract_strided_slice %1 {offsets = [3, 0, 1], sizes = [1, 18, 18], strides = [1, 1, 1]} : vector<4x20x20xf32> to vector<1x18x18xf32>
    %150 = vector.shape_cast %149 : vector<1x18x18xf32> to vector<18x18xf32>
    %c28 = arith.constant 28 : index
    %151 = memref.load %arg2[%c28] : memref<144xf32, #tpu.memory_space<smem>>
    %152 = vector.broadcast %151 : f32 to vector<18x18xf32>
    %153 = arith.mulf %152, %150 : vector<18x18xf32>
    %154 = arith.addf %136, %153 : vector<18x18xf32>
    %c29 = arith.constant 29 : index
    %155 = memref.load %arg2[%c29] : memref<144xf32, #tpu.memory_space<smem>>
    %156 = vector.broadcast %155 : f32 to vector<18x18xf32>
    %157 = arith.mulf %156, %150 : vector<18x18xf32>
    %158 = arith.addf %140, %157 : vector<18x18xf32>
    %c30 = arith.constant 30 : index
    %159 = memref.load %arg2[%c30] : memref<144xf32, #tpu.memory_space<smem>>
    %160 = vector.broadcast %159 : f32 to vector<18x18xf32>
    %161 = arith.mulf %160, %150 : vector<18x18xf32>
    %162 = arith.addf %144, %161 : vector<18x18xf32>
    %c31 = arith.constant 31 : index
    %163 = memref.load %arg2[%c31] : memref<144xf32, #tpu.memory_space<smem>>
    %164 = vector.broadcast %163 : f32 to vector<18x18xf32>
    %165 = arith.mulf %164, %150 : vector<18x18xf32>
    %166 = arith.addf %148, %165 : vector<18x18xf32>
    %167 = vector.extract_strided_slice %1 {offsets = [0, 0, 2], sizes = [1, 18, 18], strides = [1, 1, 1]} : vector<4x20x20xf32> to vector<1x18x18xf32>
    %168 = vector.shape_cast %167 : vector<1x18x18xf32> to vector<18x18xf32>
    %c32 = arith.constant 32 : index
    %169 = memref.load %arg2[%c32] : memref<144xf32, #tpu.memory_space<smem>>
    %170 = vector.broadcast %169 : f32 to vector<18x18xf32>
    %171 = arith.mulf %170, %168 : vector<18x18xf32>
    %172 = arith.addf %154, %171 : vector<18x18xf32>
    %c33 = arith.constant 33 : index
    %173 = memref.load %arg2[%c33] : memref<144xf32, #tpu.memory_space<smem>>
    %174 = vector.broadcast %173 : f32 to vector<18x18xf32>
    %175 = arith.mulf %174, %168 : vector<18x18xf32>
    %176 = arith.addf %158, %175 : vector<18x18xf32>
    %c34 = arith.constant 34 : index
    %177 = memref.load %arg2[%c34] : memref<144xf32, #tpu.memory_space<smem>>
    %178 = vector.broadcast %177 : f32 to vector<18x18xf32>
    %179 = arith.mulf %178, %168 : vector<18x18xf32>
    %180 = arith.addf %162, %179 : vector<18x18xf32>
    %c35 = arith.constant 35 : index
    %181 = memref.load %arg2[%c35] : memref<144xf32, #tpu.memory_space<smem>>
    %182 = vector.broadcast %181 : f32 to vector<18x18xf32>
    %183 = arith.mulf %182, %168 : vector<18x18xf32>
    %184 = arith.addf %166, %183 : vector<18x18xf32>
    %185 = vector.extract_strided_slice %1 {offsets = [1, 0, 2], sizes = [1, 18, 18], strides = [1, 1, 1]} : vector<4x20x20xf32> to vector<1x18x18xf32>
    %186 = vector.shape_cast %185 : vector<1x18x18xf32> to vector<18x18xf32>
    %c36 = arith.constant 36 : index
    %187 = memref.load %arg2[%c36] : memref<144xf32, #tpu.memory_space<smem>>
    %188 = vector.broadcast %187 : f32 to vector<18x18xf32>
    %189 = arith.mulf %188, %186 : vector<18x18xf32>
    %190 = arith.addf %172, %189 : vector<18x18xf32>
    %c37 = arith.constant 37 : index
    %191 = memref.load %arg2[%c37] : memref<144xf32, #tpu.memory_space<smem>>
    %192 = vector.broadcast %191 : f32 to vector<18x18xf32>
    %193 = arith.mulf %192, %186 : vector<18x18xf32>
    %194 = arith.addf %176, %193 : vector<18x18xf32>
    %c38 = arith.constant 38 : index
    %195 = memref.load %arg2[%c38] : memref<144xf32, #tpu.memory_space<smem>>
    %196 = vector.broadcast %195 : f32 to vector<18x18xf32>
    %197 = arith.mulf %196, %186 : vector<18x18xf32>
    %198 = arith.addf %180, %197 : vector<18x18xf32>
    %c39 = arith.constant 39 : index
    %199 = memref.load %arg2[%c39] : memref<144xf32, #tpu.memory_space<smem>>
    %200 = vector.broadcast %199 : f32 to vector<18x18xf32>
    %201 = arith.mulf %200, %186 : vector<18x18xf32>
    %202 = arith.addf %184, %201 : vector<18x18xf32>
    %203 = vector.extract_strided_slice %1 {offsets = [2, 0, 2], sizes = [1, 18, 18], strides = [1, 1, 1]} : vector<4x20x20xf32> to vector<1x18x18xf32>
    %204 = vector.shape_cast %203 : vector<1x18x18xf32> to vector<18x18xf32>
    %c40 = arith.constant 40 : index
    %205 = memref.load %arg2[%c40] : memref<144xf32, #tpu.memory_space<smem>>
    %206 = vector.broadcast %205 : f32 to vector<18x18xf32>
    %207 = arith.mulf %206, %204 : vector<18x18xf32>
    %208 = arith.addf %190, %207 : vector<18x18xf32>
    %c41 = arith.constant 41 : index
    %209 = memref.load %arg2[%c41] : memref<144xf32, #tpu.memory_space<smem>>
    %210 = vector.broadcast %209 : f32 to vector<18x18xf32>
    %211 = arith.mulf %210, %204 : vector<18x18xf32>
    %212 = arith.addf %194, %211 : vector<18x18xf32>
    %c42 = arith.constant 42 : index
    %213 = memref.load %arg2[%c42] : memref<144xf32, #tpu.memory_space<smem>>
    %214 = vector.broadcast %213 : f32 to vector<18x18xf32>
    %215 = arith.mulf %214, %204 : vector<18x18xf32>
    %216 = arith.addf %198, %215 : vector<18x18xf32>
    %c43 = arith.constant 43 : index
    %217 = memref.load %arg2[%c43] : memref<144xf32, #tpu.memory_space<smem>>
    %218 = vector.broadcast %217 : f32 to vector<18x18xf32>
    %219 = arith.mulf %218, %204 : vector<18x18xf32>
    %220 = arith.addf %202, %219 : vector<18x18xf32>
    %221 = vector.extract_strided_slice %1 {offsets = [3, 0, 2], sizes = [1, 18, 18], strides = [1, 1, 1]} : vector<4x20x20xf32> to vector<1x18x18xf32>
    %222 = vector.shape_cast %221 : vector<1x18x18xf32> to vector<18x18xf32>
    %c44 = arith.constant 44 : index
    %223 = memref.load %arg2[%c44] : memref<144xf32, #tpu.memory_space<smem>>
    %224 = vector.broadcast %223 : f32 to vector<18x18xf32>
    %225 = arith.mulf %224, %222 : vector<18x18xf32>
    %226 = arith.addf %208, %225 : vector<18x18xf32>
    %c45 = arith.constant 45 : index
    %227 = memref.load %arg2[%c45] : memref<144xf32, #tpu.memory_space<smem>>
    %228 = vector.broadcast %227 : f32 to vector<18x18xf32>
    %229 = arith.mulf %228, %222 : vector<18x18xf32>
    %230 = arith.addf %212, %229 : vector<18x18xf32>
    %c46 = arith.constant 46 : index
    %231 = memref.load %arg2[%c46] : memref<144xf32, #tpu.memory_space<smem>>
    %232 = vector.broadcast %231 : f32 to vector<18x18xf32>
    %233 = arith.mulf %232, %222 : vector<18x18xf32>
    %234 = arith.addf %216, %233 : vector<18x18xf32>
    %c47 = arith.constant 47 : index
    %235 = memref.load %arg2[%c47] : memref<144xf32, #tpu.memory_space<smem>>
    %236 = vector.broadcast %235 : f32 to vector<18x18xf32>
    %237 = arith.mulf %236, %222 : vector<18x18xf32>
    %238 = arith.addf %220, %237 : vector<18x18xf32>
    %239 = vector.extract_strided_slice %1 {offsets = [0, 1, 0], sizes = [1, 18, 18], strides = [1, 1, 1]} : vector<4x20x20xf32> to vector<1x18x18xf32>
    %240 = vector.shape_cast %239 : vector<1x18x18xf32> to vector<18x18xf32>
    %c48 = arith.constant 48 : index
    %241 = memref.load %arg2[%c48] : memref<144xf32, #tpu.memory_space<smem>>
    %242 = vector.broadcast %241 : f32 to vector<18x18xf32>
    %243 = arith.mulf %242, %240 : vector<18x18xf32>
    %244 = arith.addf %226, %243 : vector<18x18xf32>
    %c49 = arith.constant 49 : index
    %245 = memref.load %arg2[%c49] : memref<144xf32, #tpu.memory_space<smem>>
    %246 = vector.broadcast %245 : f32 to vector<18x18xf32>
    %247 = arith.mulf %246, %240 : vector<18x18xf32>
    %248 = arith.addf %230, %247 : vector<18x18xf32>
    %c50 = arith.constant 50 : index
    %249 = memref.load %arg2[%c50] : memref<144xf32, #tpu.memory_space<smem>>
    %250 = vector.broadcast %249 : f32 to vector<18x18xf32>
    %251 = arith.mulf %250, %240 : vector<18x18xf32>
    %252 = arith.addf %234, %251 : vector<18x18xf32>
    %c51 = arith.constant 51 : index
    %253 = memref.load %arg2[%c51] : memref<144xf32, #tpu.memory_space<smem>>
    %254 = vector.broadcast %253 : f32 to vector<18x18xf32>
    %255 = arith.mulf %254, %240 : vector<18x18xf32>
    %256 = arith.addf %238, %255 : vector<18x18xf32>
    %257 = vector.extract_strided_slice %1 {offsets = [1, 1, 0], sizes = [1, 18, 18], strides = [1, 1, 1]} : vector<4x20x20xf32> to vector<1x18x18xf32>
    %258 = vector.shape_cast %257 : vector<1x18x18xf32> to vector<18x18xf32>
    %c52 = arith.constant 52 : index
    %259 = memref.load %arg2[%c52] : memref<144xf32, #tpu.memory_space<smem>>
    %260 = vector.broadcast %259 : f32 to vector<18x18xf32>
    %261 = arith.mulf %260, %258 : vector<18x18xf32>
    %262 = arith.addf %244, %261 : vector<18x18xf32>
    %c53 = arith.constant 53 : index
    %263 = memref.load %arg2[%c53] : memref<144xf32, #tpu.memory_space<smem>>
    %264 = vector.broadcast %263 : f32 to vector<18x18xf32>
    %265 = arith.mulf %264, %258 : vector<18x18xf32>
    %266 = arith.addf %248, %265 : vector<18x18xf32>
    %c54 = arith.constant 54 : index
    %267 = memref.load %arg2[%c54] : memref<144xf32, #tpu.memory_space<smem>>
    %268 = vector.broadcast %267 : f32 to vector<18x18xf32>
    %269 = arith.mulf %268, %258 : vector<18x18xf32>
    %270 = arith.addf %252, %269 : vector<18x18xf32>
    %c55 = arith.constant 55 : index
    %271 = memref.load %arg2[%c55] : memref<144xf32, #tpu.memory_space<smem>>
    %272 = vector.broadcast %271 : f32 to vector<18x18xf32>
    %273 = arith.mulf %272, %258 : vector<18x18xf32>
    %274 = arith.addf %256, %273 : vector<18x18xf32>
    %275 = vector.extract_strided_slice %1 {offsets = [2, 1, 0], sizes = [1, 18, 18], strides = [1, 1, 1]} : vector<4x20x20xf32> to vector<1x18x18xf32>
    %276 = vector.shape_cast %275 : vector<1x18x18xf32> to vector<18x18xf32>
    %c56 = arith.constant 56 : index
    %277 = memref.load %arg2[%c56] : memref<144xf32, #tpu.memory_space<smem>>
    %278 = vector.broadcast %277 : f32 to vector<18x18xf32>
    %279 = arith.mulf %278, %276 : vector<18x18xf32>
    %280 = arith.addf %262, %279 : vector<18x18xf32>
    %c57 = arith.constant 57 : index
    %281 = memref.load %arg2[%c57] : memref<144xf32, #tpu.memory_space<smem>>
    %282 = vector.broadcast %281 : f32 to vector<18x18xf32>
    %283 = arith.mulf %282, %276 : vector<18x18xf32>
    %284 = arith.addf %266, %283 : vector<18x18xf32>
    %c58 = arith.constant 58 : index
    %285 = memref.load %arg2[%c58] : memref<144xf32, #tpu.memory_space<smem>>
    %286 = vector.broadcast %285 : f32 to vector<18x18xf32>
    %287 = arith.mulf %286, %276 : vector<18x18xf32>
    %288 = arith.addf %270, %287 : vector<18x18xf32>
    %c59 = arith.constant 59 : index
    %289 = memref.load %arg2[%c59] : memref<144xf32, #tpu.memory_space<smem>>
    %290 = vector.broadcast %289 : f32 to vector<18x18xf32>
    %291 = arith.mulf %290, %276 : vector<18x18xf32>
    %292 = arith.addf %274, %291 : vector<18x18xf32>
    %293 = vector.extract_strided_slice %1 {offsets = [3, 1, 0], sizes = [1, 18, 18], strides = [1, 1, 1]} : vector<4x20x20xf32> to vector<1x18x18xf32>
    %294 = vector.shape_cast %293 : vector<1x18x18xf32> to vector<18x18xf32>
    %c60 = arith.constant 60 : index
    %295 = memref.load %arg2[%c60] : memref<144xf32, #tpu.memory_space<smem>>
    %296 = vector.broadcast %295 : f32 to vector<18x18xf32>
    %297 = arith.mulf %296, %294 : vector<18x18xf32>
    %298 = arith.addf %280, %297 : vector<18x18xf32>
    %c61 = arith.constant 61 : index
    %299 = memref.load %arg2[%c61] : memref<144xf32, #tpu.memory_space<smem>>
    %300 = vector.broadcast %299 : f32 to vector<18x18xf32>
    %301 = arith.mulf %300, %294 : vector<18x18xf32>
    %302 = arith.addf %284, %301 : vector<18x18xf32>
    %c62 = arith.constant 62 : index
    %303 = memref.load %arg2[%c62] : memref<144xf32, #tpu.memory_space<smem>>
    %304 = vector.broadcast %303 : f32 to vector<18x18xf32>
    %305 = arith.mulf %304, %294 : vector<18x18xf32>
    %306 = arith.addf %288, %305 : vector<18x18xf32>
    %c63 = arith.constant 63 : index
    %307 = memref.load %arg2[%c63] : memref<144xf32, #tpu.memory_space<smem>>
    %308 = vector.broadcast %307 : f32 to vector<18x18xf32>
    %309 = arith.mulf %308, %294 : vector<18x18xf32>
    %310 = arith.addf %292, %309 : vector<18x18xf32>
    %311 = vector.extract_strided_slice %1 {offsets = [0, 1, 1], sizes = [1, 18, 18], strides = [1, 1, 1]} : vector<4x20x20xf32> to vector<1x18x18xf32>
    %312 = vector.shape_cast %311 : vector<1x18x18xf32> to vector<18x18xf32>
    %c64 = arith.constant 64 : index
    %313 = memref.load %arg2[%c64] : memref<144xf32, #tpu.memory_space<smem>>
    %314 = vector.broadcast %313 : f32 to vector<18x18xf32>
    %315 = arith.mulf %314, %312 : vector<18x18xf32>
    %316 = arith.addf %298, %315 : vector<18x18xf32>
    %c65 = arith.constant 65 : index
    %317 = memref.load %arg2[%c65] : memref<144xf32, #tpu.memory_space<smem>>
    %318 = vector.broadcast %317 : f32 to vector<18x18xf32>
    %319 = arith.mulf %318, %312 : vector<18x18xf32>
    %320 = arith.addf %302, %319 : vector<18x18xf32>
    %c66 = arith.constant 66 : index
    %321 = memref.load %arg2[%c66] : memref<144xf32, #tpu.memory_space<smem>>
    %322 = vector.broadcast %321 : f32 to vector<18x18xf32>
    %323 = arith.mulf %322, %312 : vector<18x18xf32>
    %324 = arith.addf %306, %323 : vector<18x18xf32>
    %c67 = arith.constant 67 : index
    %325 = memref.load %arg2[%c67] : memref<144xf32, #tpu.memory_space<smem>>
    %326 = vector.broadcast %325 : f32 to vector<18x18xf32>
    %327 = arith.mulf %326, %312 : vector<18x18xf32>
    %328 = arith.addf %310, %327 : vector<18x18xf32>
    %329 = vector.extract_strided_slice %1 {offsets = [1, 1, 1], sizes = [1, 18, 18], strides = [1, 1, 1]} : vector<4x20x20xf32> to vector<1x18x18xf32>
    %330 = vector.shape_cast %329 : vector<1x18x18xf32> to vector<18x18xf32>
    %c68 = arith.constant 68 : index
    %331 = memref.load %arg2[%c68] : memref<144xf32, #tpu.memory_space<smem>>
    %332 = vector.broadcast %331 : f32 to vector<18x18xf32>
    %333 = arith.mulf %332, %330 : vector<18x18xf32>
    %334 = arith.addf %316, %333 : vector<18x18xf32>
    %c69 = arith.constant 69 : index
    %335 = memref.load %arg2[%c69] : memref<144xf32, #tpu.memory_space<smem>>
    %336 = vector.broadcast %335 : f32 to vector<18x18xf32>
    %337 = arith.mulf %336, %330 : vector<18x18xf32>
    %338 = arith.addf %320, %337 : vector<18x18xf32>
    %c70 = arith.constant 70 : index
    %339 = memref.load %arg2[%c70] : memref<144xf32, #tpu.memory_space<smem>>
    %340 = vector.broadcast %339 : f32 to vector<18x18xf32>
    %341 = arith.mulf %340, %330 : vector<18x18xf32>
    %342 = arith.addf %324, %341 : vector<18x18xf32>
    %c71 = arith.constant 71 : index
    %343 = memref.load %arg2[%c71] : memref<144xf32, #tpu.memory_space<smem>>
    %344 = vector.broadcast %343 : f32 to vector<18x18xf32>
    %345 = arith.mulf %344, %330 : vector<18x18xf32>
    %346 = arith.addf %328, %345 : vector<18x18xf32>
    %347 = vector.extract_strided_slice %1 {offsets = [2, 1, 1], sizes = [1, 18, 18], strides = [1, 1, 1]} : vector<4x20x20xf32> to vector<1x18x18xf32>
    %348 = vector.shape_cast %347 : vector<1x18x18xf32> to vector<18x18xf32>
    %c72 = arith.constant 72 : index
    %349 = memref.load %arg2[%c72] : memref<144xf32, #tpu.memory_space<smem>>
    %350 = vector.broadcast %349 : f32 to vector<18x18xf32>
    %351 = arith.mulf %350, %348 : vector<18x18xf32>
    %352 = arith.addf %334, %351 : vector<18x18xf32>
    %c73 = arith.constant 73 : index
    %353 = memref.load %arg2[%c73] : memref<144xf32, #tpu.memory_space<smem>>
    %354 = vector.broadcast %353 : f32 to vector<18x18xf32>
    %355 = arith.mulf %354, %348 : vector<18x18xf32>
    %356 = arith.addf %338, %355 : vector<18x18xf32>
    %c74 = arith.constant 74 : index
    %357 = memref.load %arg2[%c74] : memref<144xf32, #tpu.memory_space<smem>>
    %358 = vector.broadcast %357 : f32 to vector<18x18xf32>
    %359 = arith.mulf %358, %348 : vector<18x18xf32>
    %360 = arith.addf %342, %359 : vector<18x18xf32>
    %c75 = arith.constant 75 : index
    %361 = memref.load %arg2[%c75] : memref<144xf32, #tpu.memory_space<smem>>
    %362 = vector.broadcast %361 : f32 to vector<18x18xf32>
    %363 = arith.mulf %362, %348 : vector<18x18xf32>
    %364 = arith.addf %346, %363 : vector<18x18xf32>
    %365 = vector.extract_strided_slice %1 {offsets = [3, 1, 1], sizes = [1, 18, 18], strides = [1, 1, 1]} : vector<4x20x20xf32> to vector<1x18x18xf32>
    %366 = vector.shape_cast %365 : vector<1x18x18xf32> to vector<18x18xf32>
    %c76 = arith.constant 76 : index
    %367 = memref.load %arg2[%c76] : memref<144xf32, #tpu.memory_space<smem>>
    %368 = vector.broadcast %367 : f32 to vector<18x18xf32>
    %369 = arith.mulf %368, %366 : vector<18x18xf32>
    %370 = arith.addf %352, %369 : vector<18x18xf32>
    %c77 = arith.constant 77 : index
    %371 = memref.load %arg2[%c77] : memref<144xf32, #tpu.memory_space<smem>>
    %372 = vector.broadcast %371 : f32 to vector<18x18xf32>
    %373 = arith.mulf %372, %366 : vector<18x18xf32>
    %374 = arith.addf %356, %373 : vector<18x18xf32>
    %c78 = arith.constant 78 : index
    %375 = memref.load %arg2[%c78] : memref<144xf32, #tpu.memory_space<smem>>
    %376 = vector.broadcast %375 : f32 to vector<18x18xf32>
    %377 = arith.mulf %376, %366 : vector<18x18xf32>
    %378 = arith.addf %360, %377 : vector<18x18xf32>
    %c79 = arith.constant 79 : index
    %379 = memref.load %arg2[%c79] : memref<144xf32, #tpu.memory_space<smem>>
    %380 = vector.broadcast %379 : f32 to vector<18x18xf32>
    %381 = arith.mulf %380, %366 : vector<18x18xf32>
    %382 = arith.addf %364, %381 : vector<18x18xf32>
    %383 = vector.extract_strided_slice %1 {offsets = [0, 1, 2], sizes = [1, 18, 18], strides = [1, 1, 1]} : vector<4x20x20xf32> to vector<1x18x18xf32>
    %384 = vector.shape_cast %383 : vector<1x18x18xf32> to vector<18x18xf32>
    %c80 = arith.constant 80 : index
    %385 = memref.load %arg2[%c80] : memref<144xf32, #tpu.memory_space<smem>>
    %386 = vector.broadcast %385 : f32 to vector<18x18xf32>
    %387 = arith.mulf %386, %384 : vector<18x18xf32>
    %388 = arith.addf %370, %387 : vector<18x18xf32>
    %c81 = arith.constant 81 : index
    %389 = memref.load %arg2[%c81] : memref<144xf32, #tpu.memory_space<smem>>
    %390 = vector.broadcast %389 : f32 to vector<18x18xf32>
    %391 = arith.mulf %390, %384 : vector<18x18xf32>
    %392 = arith.addf %374, %391 : vector<18x18xf32>
    %c82 = arith.constant 82 : index
    %393 = memref.load %arg2[%c82] : memref<144xf32, #tpu.memory_space<smem>>
    %394 = vector.broadcast %393 : f32 to vector<18x18xf32>
    %395 = arith.mulf %394, %384 : vector<18x18xf32>
    %396 = arith.addf %378, %395 : vector<18x18xf32>
    %c83 = arith.constant 83 : index
    %397 = memref.load %arg2[%c83] : memref<144xf32, #tpu.memory_space<smem>>
    %398 = vector.broadcast %397 : f32 to vector<18x18xf32>
    %399 = arith.mulf %398, %384 : vector<18x18xf32>
    %400 = arith.addf %382, %399 : vector<18x18xf32>
    %401 = vector.extract_strided_slice %1 {offsets = [1, 1, 2], sizes = [1, 18, 18], strides = [1, 1, 1]} : vector<4x20x20xf32> to vector<1x18x18xf32>
    %402 = vector.shape_cast %401 : vector<1x18x18xf32> to vector<18x18xf32>
    %c84 = arith.constant 84 : index
    %403 = memref.load %arg2[%c84] : memref<144xf32, #tpu.memory_space<smem>>
    %404 = vector.broadcast %403 : f32 to vector<18x18xf32>
    %405 = arith.mulf %404, %402 : vector<18x18xf32>
    %406 = arith.addf %388, %405 : vector<18x18xf32>
    %c85 = arith.constant 85 : index
    %407 = memref.load %arg2[%c85] : memref<144xf32, #tpu.memory_space<smem>>
    %408 = vector.broadcast %407 : f32 to vector<18x18xf32>
    %409 = arith.mulf %408, %402 : vector<18x18xf32>
    %410 = arith.addf %392, %409 : vector<18x18xf32>
    %c86 = arith.constant 86 : index
    %411 = memref.load %arg2[%c86] : memref<144xf32, #tpu.memory_space<smem>>
    %412 = vector.broadcast %411 : f32 to vector<18x18xf32>
    %413 = arith.mulf %412, %402 : vector<18x18xf32>
    %414 = arith.addf %396, %413 : vector<18x18xf32>
    %c87 = arith.constant 87 : index
    %415 = memref.load %arg2[%c87] : memref<144xf32, #tpu.memory_space<smem>>
    %416 = vector.broadcast %415 : f32 to vector<18x18xf32>
    %417 = arith.mulf %416, %402 : vector<18x18xf32>
    %418 = arith.addf %400, %417 : vector<18x18xf32>
    %419 = vector.extract_strided_slice %1 {offsets = [2, 1, 2], sizes = [1, 18, 18], strides = [1, 1, 1]} : vector<4x20x20xf32> to vector<1x18x18xf32>
    %420 = vector.shape_cast %419 : vector<1x18x18xf32> to vector<18x18xf32>
    %c88 = arith.constant 88 : index
    %421 = memref.load %arg2[%c88] : memref<144xf32, #tpu.memory_space<smem>>
    %422 = vector.broadcast %421 : f32 to vector<18x18xf32>
    %423 = arith.mulf %422, %420 : vector<18x18xf32>
    %424 = arith.addf %406, %423 : vector<18x18xf32>
    %c89 = arith.constant 89 : index
    %425 = memref.load %arg2[%c89] : memref<144xf32, #tpu.memory_space<smem>>
    %426 = vector.broadcast %425 : f32 to vector<18x18xf32>
    %427 = arith.mulf %426, %420 : vector<18x18xf32>
    %428 = arith.addf %410, %427 : vector<18x18xf32>
    %c90 = arith.constant 90 : index
    %429 = memref.load %arg2[%c90] : memref<144xf32, #tpu.memory_space<smem>>
    %430 = vector.broadcast %429 : f32 to vector<18x18xf32>
    %431 = arith.mulf %430, %420 : vector<18x18xf32>
    %432 = arith.addf %414, %431 : vector<18x18xf32>
    %c91 = arith.constant 91 : index
    %433 = memref.load %arg2[%c91] : memref<144xf32, #tpu.memory_space<smem>>
    %434 = vector.broadcast %433 : f32 to vector<18x18xf32>
    %435 = arith.mulf %434, %420 : vector<18x18xf32>
    %436 = arith.addf %418, %435 : vector<18x18xf32>
    %437 = vector.extract_strided_slice %1 {offsets = [3, 1, 2], sizes = [1, 18, 18], strides = [1, 1, 1]} : vector<4x20x20xf32> to vector<1x18x18xf32>
    %438 = vector.shape_cast %437 : vector<1x18x18xf32> to vector<18x18xf32>
    %c92 = arith.constant 92 : index
    %439 = memref.load %arg2[%c92] : memref<144xf32, #tpu.memory_space<smem>>
    %440 = vector.broadcast %439 : f32 to vector<18x18xf32>
    %441 = arith.mulf %440, %438 : vector<18x18xf32>
    %442 = arith.addf %424, %441 : vector<18x18xf32>
    %c93 = arith.constant 93 : index
    %443 = memref.load %arg2[%c93] : memref<144xf32, #tpu.memory_space<smem>>
    %444 = vector.broadcast %443 : f32 to vector<18x18xf32>
    %445 = arith.mulf %444, %438 : vector<18x18xf32>
    %446 = arith.addf %428, %445 : vector<18x18xf32>
    %c94 = arith.constant 94 : index
    %447 = memref.load %arg2[%c94] : memref<144xf32, #tpu.memory_space<smem>>
    %448 = vector.broadcast %447 : f32 to vector<18x18xf32>
    %449 = arith.mulf %448, %438 : vector<18x18xf32>
    %450 = arith.addf %432, %449 : vector<18x18xf32>
    %c95 = arith.constant 95 : index
    %451 = memref.load %arg2[%c95] : memref<144xf32, #tpu.memory_space<smem>>
    %452 = vector.broadcast %451 : f32 to vector<18x18xf32>
    %453 = arith.mulf %452, %438 : vector<18x18xf32>
    %454 = arith.addf %436, %453 : vector<18x18xf32>
    %455 = vector.extract_strided_slice %1 {offsets = [0, 2, 0], sizes = [1, 18, 18], strides = [1, 1, 1]} : vector<4x20x20xf32> to vector<1x18x18xf32>
    %456 = vector.shape_cast %455 : vector<1x18x18xf32> to vector<18x18xf32>
    %c96 = arith.constant 96 : index
    %457 = memref.load %arg2[%c96] : memref<144xf32, #tpu.memory_space<smem>>
    %458 = vector.broadcast %457 : f32 to vector<18x18xf32>
    %459 = arith.mulf %458, %456 : vector<18x18xf32>
    %460 = arith.addf %442, %459 : vector<18x18xf32>
    %c97 = arith.constant 97 : index
    %461 = memref.load %arg2[%c97] : memref<144xf32, #tpu.memory_space<smem>>
    %462 = vector.broadcast %461 : f32 to vector<18x18xf32>
    %463 = arith.mulf %462, %456 : vector<18x18xf32>
    %464 = arith.addf %446, %463 : vector<18x18xf32>
    %c98 = arith.constant 98 : index
    %465 = memref.load %arg2[%c98] : memref<144xf32, #tpu.memory_space<smem>>
    %466 = vector.broadcast %465 : f32 to vector<18x18xf32>
    %467 = arith.mulf %466, %456 : vector<18x18xf32>
    %468 = arith.addf %450, %467 : vector<18x18xf32>
    %c99 = arith.constant 99 : index
    %469 = memref.load %arg2[%c99] : memref<144xf32, #tpu.memory_space<smem>>
    %470 = vector.broadcast %469 : f32 to vector<18x18xf32>
    %471 = arith.mulf %470, %456 : vector<18x18xf32>
    %472 = arith.addf %454, %471 : vector<18x18xf32>
    %473 = vector.extract_strided_slice %1 {offsets = [1, 2, 0], sizes = [1, 18, 18], strides = [1, 1, 1]} : vector<4x20x20xf32> to vector<1x18x18xf32>
    %474 = vector.shape_cast %473 : vector<1x18x18xf32> to vector<18x18xf32>
    %c100 = arith.constant 100 : index
    %475 = memref.load %arg2[%c100] : memref<144xf32, #tpu.memory_space<smem>>
    %476 = vector.broadcast %475 : f32 to vector<18x18xf32>
    %477 = arith.mulf %476, %474 : vector<18x18xf32>
    %478 = arith.addf %460, %477 : vector<18x18xf32>
    %c101 = arith.constant 101 : index
    %479 = memref.load %arg2[%c101] : memref<144xf32, #tpu.memory_space<smem>>
    %480 = vector.broadcast %479 : f32 to vector<18x18xf32>
    %481 = arith.mulf %480, %474 : vector<18x18xf32>
    %482 = arith.addf %464, %481 : vector<18x18xf32>
    %c102 = arith.constant 102 : index
    %483 = memref.load %arg2[%c102] : memref<144xf32, #tpu.memory_space<smem>>
    %484 = vector.broadcast %483 : f32 to vector<18x18xf32>
    %485 = arith.mulf %484, %474 : vector<18x18xf32>
    %486 = arith.addf %468, %485 : vector<18x18xf32>
    %c103 = arith.constant 103 : index
    %487 = memref.load %arg2[%c103] : memref<144xf32, #tpu.memory_space<smem>>
    %488 = vector.broadcast %487 : f32 to vector<18x18xf32>
    %489 = arith.mulf %488, %474 : vector<18x18xf32>
    %490 = arith.addf %472, %489 : vector<18x18xf32>
    %491 = vector.extract_strided_slice %1 {offsets = [2, 2, 0], sizes = [1, 18, 18], strides = [1, 1, 1]} : vector<4x20x20xf32> to vector<1x18x18xf32>
    %492 = vector.shape_cast %491 : vector<1x18x18xf32> to vector<18x18xf32>
    %c104 = arith.constant 104 : index
    %493 = memref.load %arg2[%c104] : memref<144xf32, #tpu.memory_space<smem>>
    %494 = vector.broadcast %493 : f32 to vector<18x18xf32>
    %495 = arith.mulf %494, %492 : vector<18x18xf32>
    %496 = arith.addf %478, %495 : vector<18x18xf32>
    %c105 = arith.constant 105 : index
    %497 = memref.load %arg2[%c105] : memref<144xf32, #tpu.memory_space<smem>>
    %498 = vector.broadcast %497 : f32 to vector<18x18xf32>
    %499 = arith.mulf %498, %492 : vector<18x18xf32>
    %500 = arith.addf %482, %499 : vector<18x18xf32>
    %c106 = arith.constant 106 : index
    %501 = memref.load %arg2[%c106] : memref<144xf32, #tpu.memory_space<smem>>
    %502 = vector.broadcast %501 : f32 to vector<18x18xf32>
    %503 = arith.mulf %502, %492 : vector<18x18xf32>
    %504 = arith.addf %486, %503 : vector<18x18xf32>
    %c107 = arith.constant 107 : index
    %505 = memref.load %arg2[%c107] : memref<144xf32, #tpu.memory_space<smem>>
    %506 = vector.broadcast %505 : f32 to vector<18x18xf32>
    %507 = arith.mulf %506, %492 : vector<18x18xf32>
    %508 = arith.addf %490, %507 : vector<18x18xf32>
    %509 = vector.extract_strided_slice %1 {offsets = [3, 2, 0], sizes = [1, 18, 18], strides = [1, 1, 1]} : vector<4x20x20xf32> to vector<1x18x18xf32>
    %510 = vector.shape_cast %509 : vector<1x18x18xf32> to vector<18x18xf32>
    %c108 = arith.constant 108 : index
    %511 = memref.load %arg2[%c108] : memref<144xf32, #tpu.memory_space<smem>>
    %512 = vector.broadcast %511 : f32 to vector<18x18xf32>
    %513 = arith.mulf %512, %510 : vector<18x18xf32>
    %514 = arith.addf %496, %513 : vector<18x18xf32>
    %c109 = arith.constant 109 : index
    %515 = memref.load %arg2[%c109] : memref<144xf32, #tpu.memory_space<smem>>
    %516 = vector.broadcast %515 : f32 to vector<18x18xf32>
    %517 = arith.mulf %516, %510 : vector<18x18xf32>
    %518 = arith.addf %500, %517 : vector<18x18xf32>
    %c110 = arith.constant 110 : index
    %519 = memref.load %arg2[%c110] : memref<144xf32, #tpu.memory_space<smem>>
    %520 = vector.broadcast %519 : f32 to vector<18x18xf32>
    %521 = arith.mulf %520, %510 : vector<18x18xf32>
    %522 = arith.addf %504, %521 : vector<18x18xf32>
    %c111 = arith.constant 111 : index
    %523 = memref.load %arg2[%c111] : memref<144xf32, #tpu.memory_space<smem>>
    %524 = vector.broadcast %523 : f32 to vector<18x18xf32>
    %525 = arith.mulf %524, %510 : vector<18x18xf32>
    %526 = arith.addf %508, %525 : vector<18x18xf32>
    %527 = vector.extract_strided_slice %1 {offsets = [0, 2, 1], sizes = [1, 18, 18], strides = [1, 1, 1]} : vector<4x20x20xf32> to vector<1x18x18xf32>
    %528 = vector.shape_cast %527 : vector<1x18x18xf32> to vector<18x18xf32>
    %c112 = arith.constant 112 : index
    %529 = memref.load %arg2[%c112] : memref<144xf32, #tpu.memory_space<smem>>
    %530 = vector.broadcast %529 : f32 to vector<18x18xf32>
    %531 = arith.mulf %530, %528 : vector<18x18xf32>
    %532 = arith.addf %514, %531 : vector<18x18xf32>
    %c113 = arith.constant 113 : index
    %533 = memref.load %arg2[%c113] : memref<144xf32, #tpu.memory_space<smem>>
    %534 = vector.broadcast %533 : f32 to vector<18x18xf32>
    %535 = arith.mulf %534, %528 : vector<18x18xf32>
    %536 = arith.addf %518, %535 : vector<18x18xf32>
    %c114 = arith.constant 114 : index
    %537 = memref.load %arg2[%c114] : memref<144xf32, #tpu.memory_space<smem>>
    %538 = vector.broadcast %537 : f32 to vector<18x18xf32>
    %539 = arith.mulf %538, %528 : vector<18x18xf32>
    %540 = arith.addf %522, %539 : vector<18x18xf32>
    %c115 = arith.constant 115 : index
    %541 = memref.load %arg2[%c115] : memref<144xf32, #tpu.memory_space<smem>>
    %542 = vector.broadcast %541 : f32 to vector<18x18xf32>
    %543 = arith.mulf %542, %528 : vector<18x18xf32>
    %544 = arith.addf %526, %543 : vector<18x18xf32>
    %545 = vector.extract_strided_slice %1 {offsets = [1, 2, 1], sizes = [1, 18, 18], strides = [1, 1, 1]} : vector<4x20x20xf32> to vector<1x18x18xf32>
    %546 = vector.shape_cast %545 : vector<1x18x18xf32> to vector<18x18xf32>
    %c116 = arith.constant 116 : index
    %547 = memref.load %arg2[%c116] : memref<144xf32, #tpu.memory_space<smem>>
    %548 = vector.broadcast %547 : f32 to vector<18x18xf32>
    %549 = arith.mulf %548, %546 : vector<18x18xf32>
    %550 = arith.addf %532, %549 : vector<18x18xf32>
    %c117 = arith.constant 117 : index
    %551 = memref.load %arg2[%c117] : memref<144xf32, #tpu.memory_space<smem>>
    %552 = vector.broadcast %551 : f32 to vector<18x18xf32>
    %553 = arith.mulf %552, %546 : vector<18x18xf32>
    %554 = arith.addf %536, %553 : vector<18x18xf32>
    %c118 = arith.constant 118 : index
    %555 = memref.load %arg2[%c118] : memref<144xf32, #tpu.memory_space<smem>>
    %556 = vector.broadcast %555 : f32 to vector<18x18xf32>
    %557 = arith.mulf %556, %546 : vector<18x18xf32>
    %558 = arith.addf %540, %557 : vector<18x18xf32>
    %c119 = arith.constant 119 : index
    %559 = memref.load %arg2[%c119] : memref<144xf32, #tpu.memory_space<smem>>
    %560 = vector.broadcast %559 : f32 to vector<18x18xf32>
    %561 = arith.mulf %560, %546 : vector<18x18xf32>
    %562 = arith.addf %544, %561 : vector<18x18xf32>
    %563 = vector.extract_strided_slice %1 {offsets = [2, 2, 1], sizes = [1, 18, 18], strides = [1, 1, 1]} : vector<4x20x20xf32> to vector<1x18x18xf32>
    %564 = vector.shape_cast %563 : vector<1x18x18xf32> to vector<18x18xf32>
    %c120 = arith.constant 120 : index
    %565 = memref.load %arg2[%c120] : memref<144xf32, #tpu.memory_space<smem>>
    %566 = vector.broadcast %565 : f32 to vector<18x18xf32>
    %567 = arith.mulf %566, %564 : vector<18x18xf32>
    %568 = arith.addf %550, %567 : vector<18x18xf32>
    %c121 = arith.constant 121 : index
    %569 = memref.load %arg2[%c121] : memref<144xf32, #tpu.memory_space<smem>>
    %570 = vector.broadcast %569 : f32 to vector<18x18xf32>
    %571 = arith.mulf %570, %564 : vector<18x18xf32>
    %572 = arith.addf %554, %571 : vector<18x18xf32>
    %c122 = arith.constant 122 : index
    %573 = memref.load %arg2[%c122] : memref<144xf32, #tpu.memory_space<smem>>
    %574 = vector.broadcast %573 : f32 to vector<18x18xf32>
    %575 = arith.mulf %574, %564 : vector<18x18xf32>
    %576 = arith.addf %558, %575 : vector<18x18xf32>
    %c123 = arith.constant 123 : index
    %577 = memref.load %arg2[%c123] : memref<144xf32, #tpu.memory_space<smem>>
    %578 = vector.broadcast %577 : f32 to vector<18x18xf32>
    %579 = arith.mulf %578, %564 : vector<18x18xf32>
    %580 = arith.addf %562, %579 : vector<18x18xf32>
    %581 = vector.extract_strided_slice %1 {offsets = [3, 2, 1], sizes = [1, 18, 18], strides = [1, 1, 1]} : vector<4x20x20xf32> to vector<1x18x18xf32>
    %582 = vector.shape_cast %581 : vector<1x18x18xf32> to vector<18x18xf32>
    %c124 = arith.constant 124 : index
    %583 = memref.load %arg2[%c124] : memref<144xf32, #tpu.memory_space<smem>>
    %584 = vector.broadcast %583 : f32 to vector<18x18xf32>
    %585 = arith.mulf %584, %582 : vector<18x18xf32>
    %586 = arith.addf %568, %585 : vector<18x18xf32>
    %c125 = arith.constant 125 : index
    %587 = memref.load %arg2[%c125] : memref<144xf32, #tpu.memory_space<smem>>
    %588 = vector.broadcast %587 : f32 to vector<18x18xf32>
    %589 = arith.mulf %588, %582 : vector<18x18xf32>
    %590 = arith.addf %572, %589 : vector<18x18xf32>
    %c126 = arith.constant 126 : index
    %591 = memref.load %arg2[%c126] : memref<144xf32, #tpu.memory_space<smem>>
    %592 = vector.broadcast %591 : f32 to vector<18x18xf32>
    %593 = arith.mulf %592, %582 : vector<18x18xf32>
    %594 = arith.addf %576, %593 : vector<18x18xf32>
    %c127 = arith.constant 127 : index
    %595 = memref.load %arg2[%c127] : memref<144xf32, #tpu.memory_space<smem>>
    %596 = vector.broadcast %595 : f32 to vector<18x18xf32>
    %597 = arith.mulf %596, %582 : vector<18x18xf32>
    %598 = arith.addf %580, %597 : vector<18x18xf32>
    %599 = vector.extract_strided_slice %1 {offsets = [0, 2, 2], sizes = [1, 18, 18], strides = [1, 1, 1]} : vector<4x20x20xf32> to vector<1x18x18xf32>
    %600 = vector.shape_cast %599 : vector<1x18x18xf32> to vector<18x18xf32>
    %c128 = arith.constant 128 : index
    %601 = memref.load %arg2[%c128] : memref<144xf32, #tpu.memory_space<smem>>
    %602 = vector.broadcast %601 : f32 to vector<18x18xf32>
    %603 = arith.mulf %602, %600 : vector<18x18xf32>
    %604 = arith.addf %586, %603 : vector<18x18xf32>
    %c129 = arith.constant 129 : index
    %605 = memref.load %arg2[%c129] : memref<144xf32, #tpu.memory_space<smem>>
    %606 = vector.broadcast %605 : f32 to vector<18x18xf32>
    %607 = arith.mulf %606, %600 : vector<18x18xf32>
    %608 = arith.addf %590, %607 : vector<18x18xf32>
    %c130 = arith.constant 130 : index
    %609 = memref.load %arg2[%c130] : memref<144xf32, #tpu.memory_space<smem>>
    %610 = vector.broadcast %609 : f32 to vector<18x18xf32>
    %611 = arith.mulf %610, %600 : vector<18x18xf32>
    %612 = arith.addf %594, %611 : vector<18x18xf32>
    %c131 = arith.constant 131 : index
    %613 = memref.load %arg2[%c131] : memref<144xf32, #tpu.memory_space<smem>>
    %614 = vector.broadcast %613 : f32 to vector<18x18xf32>
    %615 = arith.mulf %614, %600 : vector<18x18xf32>
    %616 = arith.addf %598, %615 : vector<18x18xf32>
    %617 = vector.extract_strided_slice %1 {offsets = [1, 2, 2], sizes = [1, 18, 18], strides = [1, 1, 1]} : vector<4x20x20xf32> to vector<1x18x18xf32>
    %618 = vector.shape_cast %617 : vector<1x18x18xf32> to vector<18x18xf32>
    %c132 = arith.constant 132 : index
    %619 = memref.load %arg2[%c132] : memref<144xf32, #tpu.memory_space<smem>>
    %620 = vector.broadcast %619 : f32 to vector<18x18xf32>
    %621 = arith.mulf %620, %618 : vector<18x18xf32>
    %622 = arith.addf %604, %621 : vector<18x18xf32>
    %c133 = arith.constant 133 : index
    %623 = memref.load %arg2[%c133] : memref<144xf32, #tpu.memory_space<smem>>
    %624 = vector.broadcast %623 : f32 to vector<18x18xf32>
    %625 = arith.mulf %624, %618 : vector<18x18xf32>
    %626 = arith.addf %608, %625 : vector<18x18xf32>
    %c134 = arith.constant 134 : index
    %627 = memref.load %arg2[%c134] : memref<144xf32, #tpu.memory_space<smem>>
    %628 = vector.broadcast %627 : f32 to vector<18x18xf32>
    %629 = arith.mulf %628, %618 : vector<18x18xf32>
    %630 = arith.addf %612, %629 : vector<18x18xf32>
    %c135 = arith.constant 135 : index
    %631 = memref.load %arg2[%c135] : memref<144xf32, #tpu.memory_space<smem>>
    %632 = vector.broadcast %631 : f32 to vector<18x18xf32>
    %633 = arith.mulf %632, %618 : vector<18x18xf32>
    %634 = arith.addf %616, %633 : vector<18x18xf32>
    %635 = vector.extract_strided_slice %1 {offsets = [2, 2, 2], sizes = [1, 18, 18], strides = [1, 1, 1]} : vector<4x20x20xf32> to vector<1x18x18xf32>
    %636 = vector.shape_cast %635 : vector<1x18x18xf32> to vector<18x18xf32>
    %c136 = arith.constant 136 : index
    %637 = memref.load %arg2[%c136] : memref<144xf32, #tpu.memory_space<smem>>
    %638 = vector.broadcast %637 : f32 to vector<18x18xf32>
    %639 = arith.mulf %638, %636 : vector<18x18xf32>
    %640 = arith.addf %622, %639 : vector<18x18xf32>
    %c137 = arith.constant 137 : index
    %641 = memref.load %arg2[%c137] : memref<144xf32, #tpu.memory_space<smem>>
    %642 = vector.broadcast %641 : f32 to vector<18x18xf32>
    %643 = arith.mulf %642, %636 : vector<18x18xf32>
    %644 = arith.addf %626, %643 : vector<18x18xf32>
    %c138 = arith.constant 138 : index
    %645 = memref.load %arg2[%c138] : memref<144xf32, #tpu.memory_space<smem>>
    %646 = vector.broadcast %645 : f32 to vector<18x18xf32>
    %647 = arith.mulf %646, %636 : vector<18x18xf32>
    %648 = arith.addf %630, %647 : vector<18x18xf32>
    %c139 = arith.constant 139 : index
    %649 = memref.load %arg2[%c139] : memref<144xf32, #tpu.memory_space<smem>>
    %650 = vector.broadcast %649 : f32 to vector<18x18xf32>
    %651 = arith.mulf %650, %636 : vector<18x18xf32>
    %652 = arith.addf %634, %651 : vector<18x18xf32>
    %653 = vector.extract_strided_slice %1 {offsets = [3, 2, 2], sizes = [1, 18, 18], strides = [1, 1, 1]} : vector<4x20x20xf32> to vector<1x18x18xf32>
    %654 = vector.shape_cast %653 : vector<1x18x18xf32> to vector<18x18xf32>
    %c140 = arith.constant 140 : index
    %655 = memref.load %arg2[%c140] : memref<144xf32, #tpu.memory_space<smem>>
    %656 = vector.broadcast %655 : f32 to vector<18x18xf32>
    %657 = arith.mulf %656, %654 : vector<18x18xf32>
    %658 = arith.addf %640, %657 : vector<18x18xf32>
    %c141 = arith.constant 141 : index
    %659 = memref.load %arg2[%c141] : memref<144xf32, #tpu.memory_space<smem>>
    %660 = vector.broadcast %659 : f32 to vector<18x18xf32>
    %661 = arith.mulf %660, %654 : vector<18x18xf32>
    %662 = arith.addf %644, %661 : vector<18x18xf32>
    %c142 = arith.constant 142 : index
    %663 = memref.load %arg2[%c142] : memref<144xf32, #tpu.memory_space<smem>>
    %664 = vector.broadcast %663 : f32 to vector<18x18xf32>
    %665 = arith.mulf %664, %654 : vector<18x18xf32>
    %666 = arith.addf %648, %665 : vector<18x18xf32>
    %c143 = arith.constant 143 : index
    %667 = memref.load %arg2[%c143] : memref<144xf32, #tpu.memory_space<smem>>
    %668 = vector.broadcast %667 : f32 to vector<18x18xf32>
    %669 = arith.mulf %668, %654 : vector<18x18xf32>
    %670 = arith.addf %652, %669 : vector<18x18xf32>
    %cst = arith.constant 0.000000e+00 : f32
    %671 = vector.broadcast %cst : f32 to vector<18x18xf32>
    %672 = arith.maximumf %658, %671 : vector<18x18xf32>
    %cst_10 = arith.constant 0.000000e+00 : f32
    %673 = vector.broadcast %cst_10 : f32 to vector<18x18xf32>
    %674 = arith.select %14, %672, %673 : vector<18x18xi1>, vector<18x18xf32>
    %cst_11 = arith.constant 0.000000e+00 : f32
    %675 = vector.broadcast %cst_11 : f32 to vector<18x18xf32>
    %676 = arith.maximumf %662, %675 : vector<18x18xf32>
    %cst_12 = arith.constant 0.000000e+00 : f32
    %677 = vector.broadcast %cst_12 : f32 to vector<18x18xf32>
    %678 = arith.select %14, %676, %677 : vector<18x18xi1>, vector<18x18xf32>
    %cst_13 = arith.constant 0.000000e+00 : f32
    %679 = vector.broadcast %cst_13 : f32 to vector<18x18xf32>
    %680 = arith.maximumf %666, %679 : vector<18x18xf32>
    %cst_14 = arith.constant 0.000000e+00 : f32
    %681 = vector.broadcast %cst_14 : f32 to vector<18x18xf32>
    %682 = arith.select %14, %680, %681 : vector<18x18xi1>, vector<18x18xf32>
    %cst_15 = arith.constant 0.000000e+00 : f32
    %683 = vector.broadcast %cst_15 : f32 to vector<18x18xf32>
    %684 = arith.maximumf %670, %683 : vector<18x18xf32>
    %cst_16 = arith.constant 0.000000e+00 : f32
    %685 = vector.broadcast %cst_16 : f32 to vector<18x18xf32>
    %686 = arith.select %14, %684, %685 : vector<18x18xi1>, vector<18x18xf32>
    %c0_17 = arith.constant 0 : index
    %687 = memref.load %arg5[%c0_17] : memref<4xf32, #tpu.memory_space<smem>>
    %688 = vector.broadcast %687 : f32 to vector<16x16xf32>
    %c1_18 = arith.constant 1 : index
    %689 = memref.load %arg5[%c1_18] : memref<4xf32, #tpu.memory_space<smem>>
    %690 = vector.broadcast %689 : f32 to vector<16x16xf32>
    %c2_19 = arith.constant 2 : index
    %691 = memref.load %arg5[%c2_19] : memref<4xf32, #tpu.memory_space<smem>>
    %692 = vector.broadcast %691 : f32 to vector<16x16xf32>
    %c3_20 = arith.constant 3 : index
    %693 = memref.load %arg5[%c3_20] : memref<4xf32, #tpu.memory_space<smem>>
    %694 = vector.broadcast %693 : f32 to vector<16x16xf32>
    %695 = vector.extract_strided_slice %674 {offsets = [0, 0], sizes = [16, 16], strides = [1, 1]} : vector<18x18xf32> to vector<16x16xf32>
    %c0_21 = arith.constant 0 : index
    %696 = memref.load %arg4[%c0_21] : memref<144xf32, #tpu.memory_space<smem>>
    %697 = vector.broadcast %696 : f32 to vector<16x16xf32>
    %698 = arith.mulf %697, %695 : vector<16x16xf32>
    %699 = arith.addf %688, %698 : vector<16x16xf32>
    %c1_22 = arith.constant 1 : index
    %700 = memref.load %arg4[%c1_22] : memref<144xf32, #tpu.memory_space<smem>>
    %701 = vector.broadcast %700 : f32 to vector<16x16xf32>
    %702 = arith.mulf %701, %695 : vector<16x16xf32>
    %703 = arith.addf %690, %702 : vector<16x16xf32>
    %c2_23 = arith.constant 2 : index
    %704 = memref.load %arg4[%c2_23] : memref<144xf32, #tpu.memory_space<smem>>
    %705 = vector.broadcast %704 : f32 to vector<16x16xf32>
    %706 = arith.mulf %705, %695 : vector<16x16xf32>
    %707 = arith.addf %692, %706 : vector<16x16xf32>
    %c3_24 = arith.constant 3 : index
    %708 = memref.load %arg4[%c3_24] : memref<144xf32, #tpu.memory_space<smem>>
    %709 = vector.broadcast %708 : f32 to vector<16x16xf32>
    %710 = arith.mulf %709, %695 : vector<16x16xf32>
    %711 = arith.addf %694, %710 : vector<16x16xf32>
    %712 = vector.extract_strided_slice %678 {offsets = [0, 0], sizes = [16, 16], strides = [1, 1]} : vector<18x18xf32> to vector<16x16xf32>
    %c4_25 = arith.constant 4 : index
    %713 = memref.load %arg4[%c4_25] : memref<144xf32, #tpu.memory_space<smem>>
    %714 = vector.broadcast %713 : f32 to vector<16x16xf32>
    %715 = arith.mulf %714, %712 : vector<16x16xf32>
    %716 = arith.addf %699, %715 : vector<16x16xf32>
    %c5_26 = arith.constant 5 : index
    %717 = memref.load %arg4[%c5_26] : memref<144xf32, #tpu.memory_space<smem>>
    %718 = vector.broadcast %717 : f32 to vector<16x16xf32>
    %719 = arith.mulf %718, %712 : vector<16x16xf32>
    %720 = arith.addf %703, %719 : vector<16x16xf32>
    %c6_27 = arith.constant 6 : index
    %721 = memref.load %arg4[%c6_27] : memref<144xf32, #tpu.memory_space<smem>>
    %722 = vector.broadcast %721 : f32 to vector<16x16xf32>
    %723 = arith.mulf %722, %712 : vector<16x16xf32>
    %724 = arith.addf %707, %723 : vector<16x16xf32>
    %c7_28 = arith.constant 7 : index
    %725 = memref.load %arg4[%c7_28] : memref<144xf32, #tpu.memory_space<smem>>
    %726 = vector.broadcast %725 : f32 to vector<16x16xf32>
    %727 = arith.mulf %726, %712 : vector<16x16xf32>
    %728 = arith.addf %711, %727 : vector<16x16xf32>
    %729 = vector.extract_strided_slice %682 {offsets = [0, 0], sizes = [16, 16], strides = [1, 1]} : vector<18x18xf32> to vector<16x16xf32>
    %c8_29 = arith.constant 8 : index
    %730 = memref.load %arg4[%c8_29] : memref<144xf32, #tpu.memory_space<smem>>
    %731 = vector.broadcast %730 : f32 to vector<16x16xf32>
    %732 = arith.mulf %731, %729 : vector<16x16xf32>
    %733 = arith.addf %716, %732 : vector<16x16xf32>
    %c9_30 = arith.constant 9 : index
    %734 = memref.load %arg4[%c9_30] : memref<144xf32, #tpu.memory_space<smem>>
    %735 = vector.broadcast %734 : f32 to vector<16x16xf32>
    %736 = arith.mulf %735, %729 : vector<16x16xf32>
    %737 = arith.addf %720, %736 : vector<16x16xf32>
    %c10_31 = arith.constant 10 : index
    %738 = memref.load %arg4[%c10_31] : memref<144xf32, #tpu.memory_space<smem>>
    %739 = vector.broadcast %738 : f32 to vector<16x16xf32>
    %740 = arith.mulf %739, %729 : vector<16x16xf32>
    %741 = arith.addf %724, %740 : vector<16x16xf32>
    %c11_32 = arith.constant 11 : index
    %742 = memref.load %arg4[%c11_32] : memref<144xf32, #tpu.memory_space<smem>>
    %743 = vector.broadcast %742 : f32 to vector<16x16xf32>
    %744 = arith.mulf %743, %729 : vector<16x16xf32>
    %745 = arith.addf %728, %744 : vector<16x16xf32>
    %746 = vector.extract_strided_slice %686 {offsets = [0, 0], sizes = [16, 16], strides = [1, 1]} : vector<18x18xf32> to vector<16x16xf32>
    %c12_33 = arith.constant 12 : index
    %747 = memref.load %arg4[%c12_33] : memref<144xf32, #tpu.memory_space<smem>>
    %748 = vector.broadcast %747 : f32 to vector<16x16xf32>
    %749 = arith.mulf %748, %746 : vector<16x16xf32>
    %750 = arith.addf %733, %749 : vector<16x16xf32>
    %c13_34 = arith.constant 13 : index
    %751 = memref.load %arg4[%c13_34] : memref<144xf32, #tpu.memory_space<smem>>
    %752 = vector.broadcast %751 : f32 to vector<16x16xf32>
    %753 = arith.mulf %752, %746 : vector<16x16xf32>
    %754 = arith.addf %737, %753 : vector<16x16xf32>
    %c14_35 = arith.constant 14 : index
    %755 = memref.load %arg4[%c14_35] : memref<144xf32, #tpu.memory_space<smem>>
    %756 = vector.broadcast %755 : f32 to vector<16x16xf32>
    %757 = arith.mulf %756, %746 : vector<16x16xf32>
    %758 = arith.addf %741, %757 : vector<16x16xf32>
    %c15_36 = arith.constant 15 : index
    %759 = memref.load %arg4[%c15_36] : memref<144xf32, #tpu.memory_space<smem>>
    %760 = vector.broadcast %759 : f32 to vector<16x16xf32>
    %761 = arith.mulf %760, %746 : vector<16x16xf32>
    %762 = arith.addf %745, %761 : vector<16x16xf32>
    %763 = vector.extract_strided_slice %674 {offsets = [0, 1], sizes = [16, 16], strides = [1, 1]} : vector<18x18xf32> to vector<16x16xf32>
    %c16_37 = arith.constant 16 : index
    %764 = memref.load %arg4[%c16_37] : memref<144xf32, #tpu.memory_space<smem>>
    %765 = vector.broadcast %764 : f32 to vector<16x16xf32>
    %766 = arith.mulf %765, %763 : vector<16x16xf32>
    %767 = arith.addf %750, %766 : vector<16x16xf32>
    %c17_38 = arith.constant 17 : index
    %768 = memref.load %arg4[%c17_38] : memref<144xf32, #tpu.memory_space<smem>>
    %769 = vector.broadcast %768 : f32 to vector<16x16xf32>
    %770 = arith.mulf %769, %763 : vector<16x16xf32>
    %771 = arith.addf %754, %770 : vector<16x16xf32>
    %c18_39 = arith.constant 18 : index
    %772 = memref.load %arg4[%c18_39] : memref<144xf32, #tpu.memory_space<smem>>
    %773 = vector.broadcast %772 : f32 to vector<16x16xf32>
    %774 = arith.mulf %773, %763 : vector<16x16xf32>
    %775 = arith.addf %758, %774 : vector<16x16xf32>
    %c19_40 = arith.constant 19 : index
    %776 = memref.load %arg4[%c19_40] : memref<144xf32, #tpu.memory_space<smem>>
    %777 = vector.broadcast %776 : f32 to vector<16x16xf32>
    %778 = arith.mulf %777, %763 : vector<16x16xf32>
    %779 = arith.addf %762, %778 : vector<16x16xf32>
    %780 = vector.extract_strided_slice %678 {offsets = [0, 1], sizes = [16, 16], strides = [1, 1]} : vector<18x18xf32> to vector<16x16xf32>
    %c20_41 = arith.constant 20 : index
    %781 = memref.load %arg4[%c20_41] : memref<144xf32, #tpu.memory_space<smem>>
    %782 = vector.broadcast %781 : f32 to vector<16x16xf32>
    %783 = arith.mulf %782, %780 : vector<16x16xf32>
    %784 = arith.addf %767, %783 : vector<16x16xf32>
    %c21_42 = arith.constant 21 : index
    %785 = memref.load %arg4[%c21_42] : memref<144xf32, #tpu.memory_space<smem>>
    %786 = vector.broadcast %785 : f32 to vector<16x16xf32>
    %787 = arith.mulf %786, %780 : vector<16x16xf32>
    %788 = arith.addf %771, %787 : vector<16x16xf32>
    %c22_43 = arith.constant 22 : index
    %789 = memref.load %arg4[%c22_43] : memref<144xf32, #tpu.memory_space<smem>>
    %790 = vector.broadcast %789 : f32 to vector<16x16xf32>
    %791 = arith.mulf %790, %780 : vector<16x16xf32>
    %792 = arith.addf %775, %791 : vector<16x16xf32>
    %c23_44 = arith.constant 23 : index
    %793 = memref.load %arg4[%c23_44] : memref<144xf32, #tpu.memory_space<smem>>
    %794 = vector.broadcast %793 : f32 to vector<16x16xf32>
    %795 = arith.mulf %794, %780 : vector<16x16xf32>
    %796 = arith.addf %779, %795 : vector<16x16xf32>
    %797 = vector.extract_strided_slice %682 {offsets = [0, 1], sizes = [16, 16], strides = [1, 1]} : vector<18x18xf32> to vector<16x16xf32>
    %c24_45 = arith.constant 24 : index
    %798 = memref.load %arg4[%c24_45] : memref<144xf32, #tpu.memory_space<smem>>
    %799 = vector.broadcast %798 : f32 to vector<16x16xf32>
    %800 = arith.mulf %799, %797 : vector<16x16xf32>
    %801 = arith.addf %784, %800 : vector<16x16xf32>
    %c25_46 = arith.constant 25 : index
    %802 = memref.load %arg4[%c25_46] : memref<144xf32, #tpu.memory_space<smem>>
    %803 = vector.broadcast %802 : f32 to vector<16x16xf32>
    %804 = arith.mulf %803, %797 : vector<16x16xf32>
    %805 = arith.addf %788, %804 : vector<16x16xf32>
    %c26_47 = arith.constant 26 : index
    %806 = memref.load %arg4[%c26_47] : memref<144xf32, #tpu.memory_space<smem>>
    %807 = vector.broadcast %806 : f32 to vector<16x16xf32>
    %808 = arith.mulf %807, %797 : vector<16x16xf32>
    %809 = arith.addf %792, %808 : vector<16x16xf32>
    %c27_48 = arith.constant 27 : index
    %810 = memref.load %arg4[%c27_48] : memref<144xf32, #tpu.memory_space<smem>>
    %811 = vector.broadcast %810 : f32 to vector<16x16xf32>
    %812 = arith.mulf %811, %797 : vector<16x16xf32>
    %813 = arith.addf %796, %812 : vector<16x16xf32>
    %814 = vector.extract_strided_slice %686 {offsets = [0, 1], sizes = [16, 16], strides = [1, 1]} : vector<18x18xf32> to vector<16x16xf32>
    %c28_49 = arith.constant 28 : index
    %815 = memref.load %arg4[%c28_49] : memref<144xf32, #tpu.memory_space<smem>>
    %816 = vector.broadcast %815 : f32 to vector<16x16xf32>
    %817 = arith.mulf %816, %814 : vector<16x16xf32>
    %818 = arith.addf %801, %817 : vector<16x16xf32>
    %c29_50 = arith.constant 29 : index
    %819 = memref.load %arg4[%c29_50] : memref<144xf32, #tpu.memory_space<smem>>
    %820 = vector.broadcast %819 : f32 to vector<16x16xf32>
    %821 = arith.mulf %820, %814 : vector<16x16xf32>
    %822 = arith.addf %805, %821 : vector<16x16xf32>
    %c30_51 = arith.constant 30 : index
    %823 = memref.load %arg4[%c30_51] : memref<144xf32, #tpu.memory_space<smem>>
    %824 = vector.broadcast %823 : f32 to vector<16x16xf32>
    %825 = arith.mulf %824, %814 : vector<16x16xf32>
    %826 = arith.addf %809, %825 : vector<16x16xf32>
    %c31_52 = arith.constant 31 : index
    %827 = memref.load %arg4[%c31_52] : memref<144xf32, #tpu.memory_space<smem>>
    %828 = vector.broadcast %827 : f32 to vector<16x16xf32>
    %829 = arith.mulf %828, %814 : vector<16x16xf32>
    %830 = arith.addf %813, %829 : vector<16x16xf32>
    %831 = vector.extract_strided_slice %674 {offsets = [0, 2], sizes = [16, 16], strides = [1, 1]} : vector<18x18xf32> to vector<16x16xf32>
    %c32_53 = arith.constant 32 : index
    %832 = memref.load %arg4[%c32_53] : memref<144xf32, #tpu.memory_space<smem>>
    %833 = vector.broadcast %832 : f32 to vector<16x16xf32>
    %834 = arith.mulf %833, %831 : vector<16x16xf32>
    %835 = arith.addf %818, %834 : vector<16x16xf32>
    %c33_54 = arith.constant 33 : index
    %836 = memref.load %arg4[%c33_54] : memref<144xf32, #tpu.memory_space<smem>>
    %837 = vector.broadcast %836 : f32 to vector<16x16xf32>
    %838 = arith.mulf %837, %831 : vector<16x16xf32>
    %839 = arith.addf %822, %838 : vector<16x16xf32>
    %c34_55 = arith.constant 34 : index
    %840 = memref.load %arg4[%c34_55] : memref<144xf32, #tpu.memory_space<smem>>
    %841 = vector.broadcast %840 : f32 to vector<16x16xf32>
    %842 = arith.mulf %841, %831 : vector<16x16xf32>
    %843 = arith.addf %826, %842 : vector<16x16xf32>
    %c35_56 = arith.constant 35 : index
    %844 = memref.load %arg4[%c35_56] : memref<144xf32, #tpu.memory_space<smem>>
    %845 = vector.broadcast %844 : f32 to vector<16x16xf32>
    %846 = arith.mulf %845, %831 : vector<16x16xf32>
    %847 = arith.addf %830, %846 : vector<16x16xf32>
    %848 = vector.extract_strided_slice %678 {offsets = [0, 2], sizes = [16, 16], strides = [1, 1]} : vector<18x18xf32> to vector<16x16xf32>
    %c36_57 = arith.constant 36 : index
    %849 = memref.load %arg4[%c36_57] : memref<144xf32, #tpu.memory_space<smem>>
    %850 = vector.broadcast %849 : f32 to vector<16x16xf32>
    %851 = arith.mulf %850, %848 : vector<16x16xf32>
    %852 = arith.addf %835, %851 : vector<16x16xf32>
    %c37_58 = arith.constant 37 : index
    %853 = memref.load %arg4[%c37_58] : memref<144xf32, #tpu.memory_space<smem>>
    %854 = vector.broadcast %853 : f32 to vector<16x16xf32>
    %855 = arith.mulf %854, %848 : vector<16x16xf32>
    %856 = arith.addf %839, %855 : vector<16x16xf32>
    %c38_59 = arith.constant 38 : index
    %857 = memref.load %arg4[%c38_59] : memref<144xf32, #tpu.memory_space<smem>>
    %858 = vector.broadcast %857 : f32 to vector<16x16xf32>
    %859 = arith.mulf %858, %848 : vector<16x16xf32>
    %860 = arith.addf %843, %859 : vector<16x16xf32>
    %c39_60 = arith.constant 39 : index
    %861 = memref.load %arg4[%c39_60] : memref<144xf32, #tpu.memory_space<smem>>
    %862 = vector.broadcast %861 : f32 to vector<16x16xf32>
    %863 = arith.mulf %862, %848 : vector<16x16xf32>
    %864 = arith.addf %847, %863 : vector<16x16xf32>
    %865 = vector.extract_strided_slice %682 {offsets = [0, 2], sizes = [16, 16], strides = [1, 1]} : vector<18x18xf32> to vector<16x16xf32>
    %c40_61 = arith.constant 40 : index
    %866 = memref.load %arg4[%c40_61] : memref<144xf32, #tpu.memory_space<smem>>
    %867 = vector.broadcast %866 : f32 to vector<16x16xf32>
    %868 = arith.mulf %867, %865 : vector<16x16xf32>
    %869 = arith.addf %852, %868 : vector<16x16xf32>
    %c41_62 = arith.constant 41 : index
    %870 = memref.load %arg4[%c41_62] : memref<144xf32, #tpu.memory_space<smem>>
    %871 = vector.broadcast %870 : f32 to vector<16x16xf32>
    %872 = arith.mulf %871, %865 : vector<16x16xf32>
    %873 = arith.addf %856, %872 : vector<16x16xf32>
    %c42_63 = arith.constant 42 : index
    %874 = memref.load %arg4[%c42_63] : memref<144xf32, #tpu.memory_space<smem>>
    %875 = vector.broadcast %874 : f32 to vector<16x16xf32>
    %876 = arith.mulf %875, %865 : vector<16x16xf32>
    %877 = arith.addf %860, %876 : vector<16x16xf32>
    %c43_64 = arith.constant 43 : index
    %878 = memref.load %arg4[%c43_64] : memref<144xf32, #tpu.memory_space<smem>>
    %879 = vector.broadcast %878 : f32 to vector<16x16xf32>
    %880 = arith.mulf %879, %865 : vector<16x16xf32>
    %881 = arith.addf %864, %880 : vector<16x16xf32>
    %882 = vector.extract_strided_slice %686 {offsets = [0, 2], sizes = [16, 16], strides = [1, 1]} : vector<18x18xf32> to vector<16x16xf32>
    %c44_65 = arith.constant 44 : index
    %883 = memref.load %arg4[%c44_65] : memref<144xf32, #tpu.memory_space<smem>>
    %884 = vector.broadcast %883 : f32 to vector<16x16xf32>
    %885 = arith.mulf %884, %882 : vector<16x16xf32>
    %886 = arith.addf %869, %885 : vector<16x16xf32>
    %c45_66 = arith.constant 45 : index
    %887 = memref.load %arg4[%c45_66] : memref<144xf32, #tpu.memory_space<smem>>
    %888 = vector.broadcast %887 : f32 to vector<16x16xf32>
    %889 = arith.mulf %888, %882 : vector<16x16xf32>
    %890 = arith.addf %873, %889 : vector<16x16xf32>
    %c46_67 = arith.constant 46 : index
    %891 = memref.load %arg4[%c46_67] : memref<144xf32, #tpu.memory_space<smem>>
    %892 = vector.broadcast %891 : f32 to vector<16x16xf32>
    %893 = arith.mulf %892, %882 : vector<16x16xf32>
    %894 = arith.addf %877, %893 : vector<16x16xf32>
    %c47_68 = arith.constant 47 : index
    %895 = memref.load %arg4[%c47_68] : memref<144xf32, #tpu.memory_space<smem>>
    %896 = vector.broadcast %895 : f32 to vector<16x16xf32>
    %897 = arith.mulf %896, %882 : vector<16x16xf32>
    %898 = arith.addf %881, %897 : vector<16x16xf32>
    %899 = vector.extract_strided_slice %674 {offsets = [1, 0], sizes = [16, 16], strides = [1, 1]} : vector<18x18xf32> to vector<16x16xf32>
    %c48_69 = arith.constant 48 : index
    %900 = memref.load %arg4[%c48_69] : memref<144xf32, #tpu.memory_space<smem>>
    %901 = vector.broadcast %900 : f32 to vector<16x16xf32>
    %902 = arith.mulf %901, %899 : vector<16x16xf32>
    %903 = arith.addf %886, %902 : vector<16x16xf32>
    %c49_70 = arith.constant 49 : index
    %904 = memref.load %arg4[%c49_70] : memref<144xf32, #tpu.memory_space<smem>>
    %905 = vector.broadcast %904 : f32 to vector<16x16xf32>
    %906 = arith.mulf %905, %899 : vector<16x16xf32>
    %907 = arith.addf %890, %906 : vector<16x16xf32>
    %c50_71 = arith.constant 50 : index
    %908 = memref.load %arg4[%c50_71] : memref<144xf32, #tpu.memory_space<smem>>
    %909 = vector.broadcast %908 : f32 to vector<16x16xf32>
    %910 = arith.mulf %909, %899 : vector<16x16xf32>
    %911 = arith.addf %894, %910 : vector<16x16xf32>
    %c51_72 = arith.constant 51 : index
    %912 = memref.load %arg4[%c51_72] : memref<144xf32, #tpu.memory_space<smem>>
    %913 = vector.broadcast %912 : f32 to vector<16x16xf32>
    %914 = arith.mulf %913, %899 : vector<16x16xf32>
    %915 = arith.addf %898, %914 : vector<16x16xf32>
    %916 = vector.extract_strided_slice %678 {offsets = [1, 0], sizes = [16, 16], strides = [1, 1]} : vector<18x18xf32> to vector<16x16xf32>
    %c52_73 = arith.constant 52 : index
    %917 = memref.load %arg4[%c52_73] : memref<144xf32, #tpu.memory_space<smem>>
    %918 = vector.broadcast %917 : f32 to vector<16x16xf32>
    %919 = arith.mulf %918, %916 : vector<16x16xf32>
    %920 = arith.addf %903, %919 : vector<16x16xf32>
    %c53_74 = arith.constant 53 : index
    %921 = memref.load %arg4[%c53_74] : memref<144xf32, #tpu.memory_space<smem>>
    %922 = vector.broadcast %921 : f32 to vector<16x16xf32>
    %923 = arith.mulf %922, %916 : vector<16x16xf32>
    %924 = arith.addf %907, %923 : vector<16x16xf32>
    %c54_75 = arith.constant 54 : index
    %925 = memref.load %arg4[%c54_75] : memref<144xf32, #tpu.memory_space<smem>>
    %926 = vector.broadcast %925 : f32 to vector<16x16xf32>
    %927 = arith.mulf %926, %916 : vector<16x16xf32>
    %928 = arith.addf %911, %927 : vector<16x16xf32>
    %c55_76 = arith.constant 55 : index
    %929 = memref.load %arg4[%c55_76] : memref<144xf32, #tpu.memory_space<smem>>
    %930 = vector.broadcast %929 : f32 to vector<16x16xf32>
    %931 = arith.mulf %930, %916 : vector<16x16xf32>
    %932 = arith.addf %915, %931 : vector<16x16xf32>
    %933 = vector.extract_strided_slice %682 {offsets = [1, 0], sizes = [16, 16], strides = [1, 1]} : vector<18x18xf32> to vector<16x16xf32>
    %c56_77 = arith.constant 56 : index
    %934 = memref.load %arg4[%c56_77] : memref<144xf32, #tpu.memory_space<smem>>
    %935 = vector.broadcast %934 : f32 to vector<16x16xf32>
    %936 = arith.mulf %935, %933 : vector<16x16xf32>
    %937 = arith.addf %920, %936 : vector<16x16xf32>
    %c57_78 = arith.constant 57 : index
    %938 = memref.load %arg4[%c57_78] : memref<144xf32, #tpu.memory_space<smem>>
    %939 = vector.broadcast %938 : f32 to vector<16x16xf32>
    %940 = arith.mulf %939, %933 : vector<16x16xf32>
    %941 = arith.addf %924, %940 : vector<16x16xf32>
    %c58_79 = arith.constant 58 : index
    %942 = memref.load %arg4[%c58_79] : memref<144xf32, #tpu.memory_space<smem>>
    %943 = vector.broadcast %942 : f32 to vector<16x16xf32>
    %944 = arith.mulf %943, %933 : vector<16x16xf32>
    %945 = arith.addf %928, %944 : vector<16x16xf32>
    %c59_80 = arith.constant 59 : index
    %946 = memref.load %arg4[%c59_80] : memref<144xf32, #tpu.memory_space<smem>>
    %947 = vector.broadcast %946 : f32 to vector<16x16xf32>
    %948 = arith.mulf %947, %933 : vector<16x16xf32>
    %949 = arith.addf %932, %948 : vector<16x16xf32>
    %950 = vector.extract_strided_slice %686 {offsets = [1, 0], sizes = [16, 16], strides = [1, 1]} : vector<18x18xf32> to vector<16x16xf32>
    %c60_81 = arith.constant 60 : index
    %951 = memref.load %arg4[%c60_81] : memref<144xf32, #tpu.memory_space<smem>>
    %952 = vector.broadcast %951 : f32 to vector<16x16xf32>
    %953 = arith.mulf %952, %950 : vector<16x16xf32>
    %954 = arith.addf %937, %953 : vector<16x16xf32>
    %c61_82 = arith.constant 61 : index
    %955 = memref.load %arg4[%c61_82] : memref<144xf32, #tpu.memory_space<smem>>
    %956 = vector.broadcast %955 : f32 to vector<16x16xf32>
    %957 = arith.mulf %956, %950 : vector<16x16xf32>
    %958 = arith.addf %941, %957 : vector<16x16xf32>
    %c62_83 = arith.constant 62 : index
    %959 = memref.load %arg4[%c62_83] : memref<144xf32, #tpu.memory_space<smem>>
    %960 = vector.broadcast %959 : f32 to vector<16x16xf32>
    %961 = arith.mulf %960, %950 : vector<16x16xf32>
    %962 = arith.addf %945, %961 : vector<16x16xf32>
    %c63_84 = arith.constant 63 : index
    %963 = memref.load %arg4[%c63_84] : memref<144xf32, #tpu.memory_space<smem>>
    %964 = vector.broadcast %963 : f32 to vector<16x16xf32>
    %965 = arith.mulf %964, %950 : vector<16x16xf32>
    %966 = arith.addf %949, %965 : vector<16x16xf32>
    %967 = vector.extract_strided_slice %674 {offsets = [1, 1], sizes = [16, 16], strides = [1, 1]} : vector<18x18xf32> to vector<16x16xf32>
    %c64_85 = arith.constant 64 : index
    %968 = memref.load %arg4[%c64_85] : memref<144xf32, #tpu.memory_space<smem>>
    %969 = vector.broadcast %968 : f32 to vector<16x16xf32>
    %970 = arith.mulf %969, %967 : vector<16x16xf32>
    %971 = arith.addf %954, %970 : vector<16x16xf32>
    %c65_86 = arith.constant 65 : index
    %972 = memref.load %arg4[%c65_86] : memref<144xf32, #tpu.memory_space<smem>>
    %973 = vector.broadcast %972 : f32 to vector<16x16xf32>
    %974 = arith.mulf %973, %967 : vector<16x16xf32>
    %975 = arith.addf %958, %974 : vector<16x16xf32>
    %c66_87 = arith.constant 66 : index
    %976 = memref.load %arg4[%c66_87] : memref<144xf32, #tpu.memory_space<smem>>
    %977 = vector.broadcast %976 : f32 to vector<16x16xf32>
    %978 = arith.mulf %977, %967 : vector<16x16xf32>
    %979 = arith.addf %962, %978 : vector<16x16xf32>
    %c67_88 = arith.constant 67 : index
    %980 = memref.load %arg4[%c67_88] : memref<144xf32, #tpu.memory_space<smem>>
    %981 = vector.broadcast %980 : f32 to vector<16x16xf32>
    %982 = arith.mulf %981, %967 : vector<16x16xf32>
    %983 = arith.addf %966, %982 : vector<16x16xf32>
    %984 = vector.extract_strided_slice %678 {offsets = [1, 1], sizes = [16, 16], strides = [1, 1]} : vector<18x18xf32> to vector<16x16xf32>
    %c68_89 = arith.constant 68 : index
    %985 = memref.load %arg4[%c68_89] : memref<144xf32, #tpu.memory_space<smem>>
    %986 = vector.broadcast %985 : f32 to vector<16x16xf32>
    %987 = arith.mulf %986, %984 : vector<16x16xf32>
    %988 = arith.addf %971, %987 : vector<16x16xf32>
    %c69_90 = arith.constant 69 : index
    %989 = memref.load %arg4[%c69_90] : memref<144xf32, #tpu.memory_space<smem>>
    %990 = vector.broadcast %989 : f32 to vector<16x16xf32>
    %991 = arith.mulf %990, %984 : vector<16x16xf32>
    %992 = arith.addf %975, %991 : vector<16x16xf32>
    %c70_91 = arith.constant 70 : index
    %993 = memref.load %arg4[%c70_91] : memref<144xf32, #tpu.memory_space<smem>>
    %994 = vector.broadcast %993 : f32 to vector<16x16xf32>
    %995 = arith.mulf %994, %984 : vector<16x16xf32>
    %996 = arith.addf %979, %995 : vector<16x16xf32>
    %c71_92 = arith.constant 71 : index
    %997 = memref.load %arg4[%c71_92] : memref<144xf32, #tpu.memory_space<smem>>
    %998 = vector.broadcast %997 : f32 to vector<16x16xf32>
    %999 = arith.mulf %998, %984 : vector<16x16xf32>
    %1000 = arith.addf %983, %999 : vector<16x16xf32>
    %1001 = vector.extract_strided_slice %682 {offsets = [1, 1], sizes = [16, 16], strides = [1, 1]} : vector<18x18xf32> to vector<16x16xf32>
    %c72_93 = arith.constant 72 : index
    %1002 = memref.load %arg4[%c72_93] : memref<144xf32, #tpu.memory_space<smem>>
    %1003 = vector.broadcast %1002 : f32 to vector<16x16xf32>
    %1004 = arith.mulf %1003, %1001 : vector<16x16xf32>
    %1005 = arith.addf %988, %1004 : vector<16x16xf32>
    %c73_94 = arith.constant 73 : index
    %1006 = memref.load %arg4[%c73_94] : memref<144xf32, #tpu.memory_space<smem>>
    %1007 = vector.broadcast %1006 : f32 to vector<16x16xf32>
    %1008 = arith.mulf %1007, %1001 : vector<16x16xf32>
    %1009 = arith.addf %992, %1008 : vector<16x16xf32>
    %c74_95 = arith.constant 74 : index
    %1010 = memref.load %arg4[%c74_95] : memref<144xf32, #tpu.memory_space<smem>>
    %1011 = vector.broadcast %1010 : f32 to vector<16x16xf32>
    %1012 = arith.mulf %1011, %1001 : vector<16x16xf32>
    %1013 = arith.addf %996, %1012 : vector<16x16xf32>
    %c75_96 = arith.constant 75 : index
    %1014 = memref.load %arg4[%c75_96] : memref<144xf32, #tpu.memory_space<smem>>
    %1015 = vector.broadcast %1014 : f32 to vector<16x16xf32>
    %1016 = arith.mulf %1015, %1001 : vector<16x16xf32>
    %1017 = arith.addf %1000, %1016 : vector<16x16xf32>
    %1018 = vector.extract_strided_slice %686 {offsets = [1, 1], sizes = [16, 16], strides = [1, 1]} : vector<18x18xf32> to vector<16x16xf32>
    %c76_97 = arith.constant 76 : index
    %1019 = memref.load %arg4[%c76_97] : memref<144xf32, #tpu.memory_space<smem>>
    %1020 = vector.broadcast %1019 : f32 to vector<16x16xf32>
    %1021 = arith.mulf %1020, %1018 : vector<16x16xf32>
    %1022 = arith.addf %1005, %1021 : vector<16x16xf32>
    %c77_98 = arith.constant 77 : index
    %1023 = memref.load %arg4[%c77_98] : memref<144xf32, #tpu.memory_space<smem>>
    %1024 = vector.broadcast %1023 : f32 to vector<16x16xf32>
    %1025 = arith.mulf %1024, %1018 : vector<16x16xf32>
    %1026 = arith.addf %1009, %1025 : vector<16x16xf32>
    %c78_99 = arith.constant 78 : index
    %1027 = memref.load %arg4[%c78_99] : memref<144xf32, #tpu.memory_space<smem>>
    %1028 = vector.broadcast %1027 : f32 to vector<16x16xf32>
    %1029 = arith.mulf %1028, %1018 : vector<16x16xf32>
    %1030 = arith.addf %1013, %1029 : vector<16x16xf32>
    %c79_100 = arith.constant 79 : index
    %1031 = memref.load %arg4[%c79_100] : memref<144xf32, #tpu.memory_space<smem>>
    %1032 = vector.broadcast %1031 : f32 to vector<16x16xf32>
    %1033 = arith.mulf %1032, %1018 : vector<16x16xf32>
    %1034 = arith.addf %1017, %1033 : vector<16x16xf32>
    %1035 = vector.extract_strided_slice %674 {offsets = [1, 2], sizes = [16, 16], strides = [1, 1]} : vector<18x18xf32> to vector<16x16xf32>
    %c80_101 = arith.constant 80 : index
    %1036 = memref.load %arg4[%c80_101] : memref<144xf32, #tpu.memory_space<smem>>
    %1037 = vector.broadcast %1036 : f32 to vector<16x16xf32>
    %1038 = arith.mulf %1037, %1035 : vector<16x16xf32>
    %1039 = arith.addf %1022, %1038 : vector<16x16xf32>
    %c81_102 = arith.constant 81 : index
    %1040 = memref.load %arg4[%c81_102] : memref<144xf32, #tpu.memory_space<smem>>
    %1041 = vector.broadcast %1040 : f32 to vector<16x16xf32>
    %1042 = arith.mulf %1041, %1035 : vector<16x16xf32>
    %1043 = arith.addf %1026, %1042 : vector<16x16xf32>
    %c82_103 = arith.constant 82 : index
    %1044 = memref.load %arg4[%c82_103] : memref<144xf32, #tpu.memory_space<smem>>
    %1045 = vector.broadcast %1044 : f32 to vector<16x16xf32>
    %1046 = arith.mulf %1045, %1035 : vector<16x16xf32>
    %1047 = arith.addf %1030, %1046 : vector<16x16xf32>
    %c83_104 = arith.constant 83 : index
    %1048 = memref.load %arg4[%c83_104] : memref<144xf32, #tpu.memory_space<smem>>
    %1049 = vector.broadcast %1048 : f32 to vector<16x16xf32>
    %1050 = arith.mulf %1049, %1035 : vector<16x16xf32>
    %1051 = arith.addf %1034, %1050 : vector<16x16xf32>
    %1052 = vector.extract_strided_slice %678 {offsets = [1, 2], sizes = [16, 16], strides = [1, 1]} : vector<18x18xf32> to vector<16x16xf32>
    %c84_105 = arith.constant 84 : index
    %1053 = memref.load %arg4[%c84_105] : memref<144xf32, #tpu.memory_space<smem>>
    %1054 = vector.broadcast %1053 : f32 to vector<16x16xf32>
    %1055 = arith.mulf %1054, %1052 : vector<16x16xf32>
    %1056 = arith.addf %1039, %1055 : vector<16x16xf32>
    %c85_106 = arith.constant 85 : index
    %1057 = memref.load %arg4[%c85_106] : memref<144xf32, #tpu.memory_space<smem>>
    %1058 = vector.broadcast %1057 : f32 to vector<16x16xf32>
    %1059 = arith.mulf %1058, %1052 : vector<16x16xf32>
    %1060 = arith.addf %1043, %1059 : vector<16x16xf32>
    %c86_107 = arith.constant 86 : index
    %1061 = memref.load %arg4[%c86_107] : memref<144xf32, #tpu.memory_space<smem>>
    %1062 = vector.broadcast %1061 : f32 to vector<16x16xf32>
    %1063 = arith.mulf %1062, %1052 : vector<16x16xf32>
    %1064 = arith.addf %1047, %1063 : vector<16x16xf32>
    %c87_108 = arith.constant 87 : index
    %1065 = memref.load %arg4[%c87_108] : memref<144xf32, #tpu.memory_space<smem>>
    %1066 = vector.broadcast %1065 : f32 to vector<16x16xf32>
    %1067 = arith.mulf %1066, %1052 : vector<16x16xf32>
    %1068 = arith.addf %1051, %1067 : vector<16x16xf32>
    %1069 = vector.extract_strided_slice %682 {offsets = [1, 2], sizes = [16, 16], strides = [1, 1]} : vector<18x18xf32> to vector<16x16xf32>
    %c88_109 = arith.constant 88 : index
    %1070 = memref.load %arg4[%c88_109] : memref<144xf32, #tpu.memory_space<smem>>
    %1071 = vector.broadcast %1070 : f32 to vector<16x16xf32>
    %1072 = arith.mulf %1071, %1069 : vector<16x16xf32>
    %1073 = arith.addf %1056, %1072 : vector<16x16xf32>
    %c89_110 = arith.constant 89 : index
    %1074 = memref.load %arg4[%c89_110] : memref<144xf32, #tpu.memory_space<smem>>
    %1075 = vector.broadcast %1074 : f32 to vector<16x16xf32>
    %1076 = arith.mulf %1075, %1069 : vector<16x16xf32>
    %1077 = arith.addf %1060, %1076 : vector<16x16xf32>
    %c90_111 = arith.constant 90 : index
    %1078 = memref.load %arg4[%c90_111] : memref<144xf32, #tpu.memory_space<smem>>
    %1079 = vector.broadcast %1078 : f32 to vector<16x16xf32>
    %1080 = arith.mulf %1079, %1069 : vector<16x16xf32>
    %1081 = arith.addf %1064, %1080 : vector<16x16xf32>
    %c91_112 = arith.constant 91 : index
    %1082 = memref.load %arg4[%c91_112] : memref<144xf32, #tpu.memory_space<smem>>
    %1083 = vector.broadcast %1082 : f32 to vector<16x16xf32>
    %1084 = arith.mulf %1083, %1069 : vector<16x16xf32>
    %1085 = arith.addf %1068, %1084 : vector<16x16xf32>
    %1086 = vector.extract_strided_slice %686 {offsets = [1, 2], sizes = [16, 16], strides = [1, 1]} : vector<18x18xf32> to vector<16x16xf32>
    %c92_113 = arith.constant 92 : index
    %1087 = memref.load %arg4[%c92_113] : memref<144xf32, #tpu.memory_space<smem>>
    %1088 = vector.broadcast %1087 : f32 to vector<16x16xf32>
    %1089 = arith.mulf %1088, %1086 : vector<16x16xf32>
    %1090 = arith.addf %1073, %1089 : vector<16x16xf32>
    %c93_114 = arith.constant 93 : index
    %1091 = memref.load %arg4[%c93_114] : memref<144xf32, #tpu.memory_space<smem>>
    %1092 = vector.broadcast %1091 : f32 to vector<16x16xf32>
    %1093 = arith.mulf %1092, %1086 : vector<16x16xf32>
    %1094 = arith.addf %1077, %1093 : vector<16x16xf32>
    %c94_115 = arith.constant 94 : index
    %1095 = memref.load %arg4[%c94_115] : memref<144xf32, #tpu.memory_space<smem>>
    %1096 = vector.broadcast %1095 : f32 to vector<16x16xf32>
    %1097 = arith.mulf %1096, %1086 : vector<16x16xf32>
    %1098 = arith.addf %1081, %1097 : vector<16x16xf32>
    %c95_116 = arith.constant 95 : index
    %1099 = memref.load %arg4[%c95_116] : memref<144xf32, #tpu.memory_space<smem>>
    %1100 = vector.broadcast %1099 : f32 to vector<16x16xf32>
    %1101 = arith.mulf %1100, %1086 : vector<16x16xf32>
    %1102 = arith.addf %1085, %1101 : vector<16x16xf32>
    %1103 = vector.extract_strided_slice %674 {offsets = [2, 0], sizes = [16, 16], strides = [1, 1]} : vector<18x18xf32> to vector<16x16xf32>
    %c96_117 = arith.constant 96 : index
    %1104 = memref.load %arg4[%c96_117] : memref<144xf32, #tpu.memory_space<smem>>
    %1105 = vector.broadcast %1104 : f32 to vector<16x16xf32>
    %1106 = arith.mulf %1105, %1103 : vector<16x16xf32>
    %1107 = arith.addf %1090, %1106 : vector<16x16xf32>
    %c97_118 = arith.constant 97 : index
    %1108 = memref.load %arg4[%c97_118] : memref<144xf32, #tpu.memory_space<smem>>
    %1109 = vector.broadcast %1108 : f32 to vector<16x16xf32>
    %1110 = arith.mulf %1109, %1103 : vector<16x16xf32>
    %1111 = arith.addf %1094, %1110 : vector<16x16xf32>
    %c98_119 = arith.constant 98 : index
    %1112 = memref.load %arg4[%c98_119] : memref<144xf32, #tpu.memory_space<smem>>
    %1113 = vector.broadcast %1112 : f32 to vector<16x16xf32>
    %1114 = arith.mulf %1113, %1103 : vector<16x16xf32>
    %1115 = arith.addf %1098, %1114 : vector<16x16xf32>
    %c99_120 = arith.constant 99 : index
    %1116 = memref.load %arg4[%c99_120] : memref<144xf32, #tpu.memory_space<smem>>
    %1117 = vector.broadcast %1116 : f32 to vector<16x16xf32>
    %1118 = arith.mulf %1117, %1103 : vector<16x16xf32>
    %1119 = arith.addf %1102, %1118 : vector<16x16xf32>
    %1120 = vector.extract_strided_slice %678 {offsets = [2, 0], sizes = [16, 16], strides = [1, 1]} : vector<18x18xf32> to vector<16x16xf32>
    %c100_121 = arith.constant 100 : index
    %1121 = memref.load %arg4[%c100_121] : memref<144xf32, #tpu.memory_space<smem>>
    %1122 = vector.broadcast %1121 : f32 to vector<16x16xf32>
    %1123 = arith.mulf %1122, %1120 : vector<16x16xf32>
    %1124 = arith.addf %1107, %1123 : vector<16x16xf32>
    %c101_122 = arith.constant 101 : index
    %1125 = memref.load %arg4[%c101_122] : memref<144xf32, #tpu.memory_space<smem>>
    %1126 = vector.broadcast %1125 : f32 to vector<16x16xf32>
    %1127 = arith.mulf %1126, %1120 : vector<16x16xf32>
    %1128 = arith.addf %1111, %1127 : vector<16x16xf32>
    %c102_123 = arith.constant 102 : index
    %1129 = memref.load %arg4[%c102_123] : memref<144xf32, #tpu.memory_space<smem>>
    %1130 = vector.broadcast %1129 : f32 to vector<16x16xf32>
    %1131 = arith.mulf %1130, %1120 : vector<16x16xf32>
    %1132 = arith.addf %1115, %1131 : vector<16x16xf32>
    %c103_124 = arith.constant 103 : index
    %1133 = memref.load %arg4[%c103_124] : memref<144xf32, #tpu.memory_space<smem>>
    %1134 = vector.broadcast %1133 : f32 to vector<16x16xf32>
    %1135 = arith.mulf %1134, %1120 : vector<16x16xf32>
    %1136 = arith.addf %1119, %1135 : vector<16x16xf32>
    %1137 = vector.extract_strided_slice %682 {offsets = [2, 0], sizes = [16, 16], strides = [1, 1]} : vector<18x18xf32> to vector<16x16xf32>
    %c104_125 = arith.constant 104 : index
    %1138 = memref.load %arg4[%c104_125] : memref<144xf32, #tpu.memory_space<smem>>
    %1139 = vector.broadcast %1138 : f32 to vector<16x16xf32>
    %1140 = arith.mulf %1139, %1137 : vector<16x16xf32>
    %1141 = arith.addf %1124, %1140 : vector<16x16xf32>
    %c105_126 = arith.constant 105 : index
    %1142 = memref.load %arg4[%c105_126] : memref<144xf32, #tpu.memory_space<smem>>
    %1143 = vector.broadcast %1142 : f32 to vector<16x16xf32>
    %1144 = arith.mulf %1143, %1137 : vector<16x16xf32>
    %1145 = arith.addf %1128, %1144 : vector<16x16xf32>
    %c106_127 = arith.constant 106 : index
    %1146 = memref.load %arg4[%c106_127] : memref<144xf32, #tpu.memory_space<smem>>
    %1147 = vector.broadcast %1146 : f32 to vector<16x16xf32>
    %1148 = arith.mulf %1147, %1137 : vector<16x16xf32>
    %1149 = arith.addf %1132, %1148 : vector<16x16xf32>
    %c107_128 = arith.constant 107 : index
    %1150 = memref.load %arg4[%c107_128] : memref<144xf32, #tpu.memory_space<smem>>
    %1151 = vector.broadcast %1150 : f32 to vector<16x16xf32>
    %1152 = arith.mulf %1151, %1137 : vector<16x16xf32>
    %1153 = arith.addf %1136, %1152 : vector<16x16xf32>
    %1154 = vector.extract_strided_slice %686 {offsets = [2, 0], sizes = [16, 16], strides = [1, 1]} : vector<18x18xf32> to vector<16x16xf32>
    %c108_129 = arith.constant 108 : index
    %1155 = memref.load %arg4[%c108_129] : memref<144xf32, #tpu.memory_space<smem>>
    %1156 = vector.broadcast %1155 : f32 to vector<16x16xf32>
    %1157 = arith.mulf %1156, %1154 : vector<16x16xf32>
    %1158 = arith.addf %1141, %1157 : vector<16x16xf32>
    %c109_130 = arith.constant 109 : index
    %1159 = memref.load %arg4[%c109_130] : memref<144xf32, #tpu.memory_space<smem>>
    %1160 = vector.broadcast %1159 : f32 to vector<16x16xf32>
    %1161 = arith.mulf %1160, %1154 : vector<16x16xf32>
    %1162 = arith.addf %1145, %1161 : vector<16x16xf32>
    %c110_131 = arith.constant 110 : index
    %1163 = memref.load %arg4[%c110_131] : memref<144xf32, #tpu.memory_space<smem>>
    %1164 = vector.broadcast %1163 : f32 to vector<16x16xf32>
    %1165 = arith.mulf %1164, %1154 : vector<16x16xf32>
    %1166 = arith.addf %1149, %1165 : vector<16x16xf32>
    %c111_132 = arith.constant 111 : index
    %1167 = memref.load %arg4[%c111_132] : memref<144xf32, #tpu.memory_space<smem>>
    %1168 = vector.broadcast %1167 : f32 to vector<16x16xf32>
    %1169 = arith.mulf %1168, %1154 : vector<16x16xf32>
    %1170 = arith.addf %1153, %1169 : vector<16x16xf32>
    %1171 = vector.extract_strided_slice %674 {offsets = [2, 1], sizes = [16, 16], strides = [1, 1]} : vector<18x18xf32> to vector<16x16xf32>
    %c112_133 = arith.constant 112 : index
    %1172 = memref.load %arg4[%c112_133] : memref<144xf32, #tpu.memory_space<smem>>
    %1173 = vector.broadcast %1172 : f32 to vector<16x16xf32>
    %1174 = arith.mulf %1173, %1171 : vector<16x16xf32>
    %1175 = arith.addf %1158, %1174 : vector<16x16xf32>
    %c113_134 = arith.constant 113 : index
    %1176 = memref.load %arg4[%c113_134] : memref<144xf32, #tpu.memory_space<smem>>
    %1177 = vector.broadcast %1176 : f32 to vector<16x16xf32>
    %1178 = arith.mulf %1177, %1171 : vector<16x16xf32>
    %1179 = arith.addf %1162, %1178 : vector<16x16xf32>
    %c114_135 = arith.constant 114 : index
    %1180 = memref.load %arg4[%c114_135] : memref<144xf32, #tpu.memory_space<smem>>
    %1181 = vector.broadcast %1180 : f32 to vector<16x16xf32>
    %1182 = arith.mulf %1181, %1171 : vector<16x16xf32>
    %1183 = arith.addf %1166, %1182 : vector<16x16xf32>
    %c115_136 = arith.constant 115 : index
    %1184 = memref.load %arg4[%c115_136] : memref<144xf32, #tpu.memory_space<smem>>
    %1185 = vector.broadcast %1184 : f32 to vector<16x16xf32>
    %1186 = arith.mulf %1185, %1171 : vector<16x16xf32>
    %1187 = arith.addf %1170, %1186 : vector<16x16xf32>
    %1188 = vector.extract_strided_slice %678 {offsets = [2, 1], sizes = [16, 16], strides = [1, 1]} : vector<18x18xf32> to vector<16x16xf32>
    %c116_137 = arith.constant 116 : index
    %1189 = memref.load %arg4[%c116_137] : memref<144xf32, #tpu.memory_space<smem>>
    %1190 = vector.broadcast %1189 : f32 to vector<16x16xf32>
    %1191 = arith.mulf %1190, %1188 : vector<16x16xf32>
    %1192 = arith.addf %1175, %1191 : vector<16x16xf32>
    %c117_138 = arith.constant 117 : index
    %1193 = memref.load %arg4[%c117_138] : memref<144xf32, #tpu.memory_space<smem>>
    %1194 = vector.broadcast %1193 : f32 to vector<16x16xf32>
    %1195 = arith.mulf %1194, %1188 : vector<16x16xf32>
    %1196 = arith.addf %1179, %1195 : vector<16x16xf32>
    %c118_139 = arith.constant 118 : index
    %1197 = memref.load %arg4[%c118_139] : memref<144xf32, #tpu.memory_space<smem>>
    %1198 = vector.broadcast %1197 : f32 to vector<16x16xf32>
    %1199 = arith.mulf %1198, %1188 : vector<16x16xf32>
    %1200 = arith.addf %1183, %1199 : vector<16x16xf32>
    %c119_140 = arith.constant 119 : index
    %1201 = memref.load %arg4[%c119_140] : memref<144xf32, #tpu.memory_space<smem>>
    %1202 = vector.broadcast %1201 : f32 to vector<16x16xf32>
    %1203 = arith.mulf %1202, %1188 : vector<16x16xf32>
    %1204 = arith.addf %1187, %1203 : vector<16x16xf32>
    %1205 = vector.extract_strided_slice %682 {offsets = [2, 1], sizes = [16, 16], strides = [1, 1]} : vector<18x18xf32> to vector<16x16xf32>
    %c120_141 = arith.constant 120 : index
    %1206 = memref.load %arg4[%c120_141] : memref<144xf32, #tpu.memory_space<smem>>
    %1207 = vector.broadcast %1206 : f32 to vector<16x16xf32>
    %1208 = arith.mulf %1207, %1205 : vector<16x16xf32>
    %1209 = arith.addf %1192, %1208 : vector<16x16xf32>
    %c121_142 = arith.constant 121 : index
    %1210 = memref.load %arg4[%c121_142] : memref<144xf32, #tpu.memory_space<smem>>
    %1211 = vector.broadcast %1210 : f32 to vector<16x16xf32>
    %1212 = arith.mulf %1211, %1205 : vector<16x16xf32>
    %1213 = arith.addf %1196, %1212 : vector<16x16xf32>
    %c122_143 = arith.constant 122 : index
    %1214 = memref.load %arg4[%c122_143] : memref<144xf32, #tpu.memory_space<smem>>
    %1215 = vector.broadcast %1214 : f32 to vector<16x16xf32>
    %1216 = arith.mulf %1215, %1205 : vector<16x16xf32>
    %1217 = arith.addf %1200, %1216 : vector<16x16xf32>
    %c123_144 = arith.constant 123 : index
    %1218 = memref.load %arg4[%c123_144] : memref<144xf32, #tpu.memory_space<smem>>
    %1219 = vector.broadcast %1218 : f32 to vector<16x16xf32>
    %1220 = arith.mulf %1219, %1205 : vector<16x16xf32>
    %1221 = arith.addf %1204, %1220 : vector<16x16xf32>
    %1222 = vector.extract_strided_slice %686 {offsets = [2, 1], sizes = [16, 16], strides = [1, 1]} : vector<18x18xf32> to vector<16x16xf32>
    %c124_145 = arith.constant 124 : index
    %1223 = memref.load %arg4[%c124_145] : memref<144xf32, #tpu.memory_space<smem>>
    %1224 = vector.broadcast %1223 : f32 to vector<16x16xf32>
    %1225 = arith.mulf %1224, %1222 : vector<16x16xf32>
    %1226 = arith.addf %1209, %1225 : vector<16x16xf32>
    %c125_146 = arith.constant 125 : index
    %1227 = memref.load %arg4[%c125_146] : memref<144xf32, #tpu.memory_space<smem>>
    %1228 = vector.broadcast %1227 : f32 to vector<16x16xf32>
    %1229 = arith.mulf %1228, %1222 : vector<16x16xf32>
    %1230 = arith.addf %1213, %1229 : vector<16x16xf32>
    %c126_147 = arith.constant 126 : index
    %1231 = memref.load %arg4[%c126_147] : memref<144xf32, #tpu.memory_space<smem>>
    %1232 = vector.broadcast %1231 : f32 to vector<16x16xf32>
    %1233 = arith.mulf %1232, %1222 : vector<16x16xf32>
    %1234 = arith.addf %1217, %1233 : vector<16x16xf32>
    %c127_148 = arith.constant 127 : index
    %1235 = memref.load %arg4[%c127_148] : memref<144xf32, #tpu.memory_space<smem>>
    %1236 = vector.broadcast %1235 : f32 to vector<16x16xf32>
    %1237 = arith.mulf %1236, %1222 : vector<16x16xf32>
    %1238 = arith.addf %1221, %1237 : vector<16x16xf32>
    %1239 = vector.extract_strided_slice %674 {offsets = [2, 2], sizes = [16, 16], strides = [1, 1]} : vector<18x18xf32> to vector<16x16xf32>
    %c128_149 = arith.constant 128 : index
    %1240 = memref.load %arg4[%c128_149] : memref<144xf32, #tpu.memory_space<smem>>
    %1241 = vector.broadcast %1240 : f32 to vector<16x16xf32>
    %1242 = arith.mulf %1241, %1239 : vector<16x16xf32>
    %1243 = arith.addf %1226, %1242 : vector<16x16xf32>
    %c129_150 = arith.constant 129 : index
    %1244 = memref.load %arg4[%c129_150] : memref<144xf32, #tpu.memory_space<smem>>
    %1245 = vector.broadcast %1244 : f32 to vector<16x16xf32>
    %1246 = arith.mulf %1245, %1239 : vector<16x16xf32>
    %1247 = arith.addf %1230, %1246 : vector<16x16xf32>
    %c130_151 = arith.constant 130 : index
    %1248 = memref.load %arg4[%c130_151] : memref<144xf32, #tpu.memory_space<smem>>
    %1249 = vector.broadcast %1248 : f32 to vector<16x16xf32>
    %1250 = arith.mulf %1249, %1239 : vector<16x16xf32>
    %1251 = arith.addf %1234, %1250 : vector<16x16xf32>
    %c131_152 = arith.constant 131 : index
    %1252 = memref.load %arg4[%c131_152] : memref<144xf32, #tpu.memory_space<smem>>
    %1253 = vector.broadcast %1252 : f32 to vector<16x16xf32>
    %1254 = arith.mulf %1253, %1239 : vector<16x16xf32>
    %1255 = arith.addf %1238, %1254 : vector<16x16xf32>
    %1256 = vector.extract_strided_slice %678 {offsets = [2, 2], sizes = [16, 16], strides = [1, 1]} : vector<18x18xf32> to vector<16x16xf32>
    %c132_153 = arith.constant 132 : index
    %1257 = memref.load %arg4[%c132_153] : memref<144xf32, #tpu.memory_space<smem>>
    %1258 = vector.broadcast %1257 : f32 to vector<16x16xf32>
    %1259 = arith.mulf %1258, %1256 : vector<16x16xf32>
    %1260 = arith.addf %1243, %1259 : vector<16x16xf32>
    %c133_154 = arith.constant 133 : index
    %1261 = memref.load %arg4[%c133_154] : memref<144xf32, #tpu.memory_space<smem>>
    %1262 = vector.broadcast %1261 : f32 to vector<16x16xf32>
    %1263 = arith.mulf %1262, %1256 : vector<16x16xf32>
    %1264 = arith.addf %1247, %1263 : vector<16x16xf32>
    %c134_155 = arith.constant 134 : index
    %1265 = memref.load %arg4[%c134_155] : memref<144xf32, #tpu.memory_space<smem>>
    %1266 = vector.broadcast %1265 : f32 to vector<16x16xf32>
    %1267 = arith.mulf %1266, %1256 : vector<16x16xf32>
    %1268 = arith.addf %1251, %1267 : vector<16x16xf32>
    %c135_156 = arith.constant 135 : index
    %1269 = memref.load %arg4[%c135_156] : memref<144xf32, #tpu.memory_space<smem>>
    %1270 = vector.broadcast %1269 : f32 to vector<16x16xf32>
    %1271 = arith.mulf %1270, %1256 : vector<16x16xf32>
    %1272 = arith.addf %1255, %1271 : vector<16x16xf32>
    %1273 = vector.extract_strided_slice %682 {offsets = [2, 2], sizes = [16, 16], strides = [1, 1]} : vector<18x18xf32> to vector<16x16xf32>
    %c136_157 = arith.constant 136 : index
    %1274 = memref.load %arg4[%c136_157] : memref<144xf32, #tpu.memory_space<smem>>
    %1275 = vector.broadcast %1274 : f32 to vector<16x16xf32>
    %1276 = arith.mulf %1275, %1273 : vector<16x16xf32>
    %1277 = arith.addf %1260, %1276 : vector<16x16xf32>
    %c137_158 = arith.constant 137 : index
    %1278 = memref.load %arg4[%c137_158] : memref<144xf32, #tpu.memory_space<smem>>
    %1279 = vector.broadcast %1278 : f32 to vector<16x16xf32>
    %1280 = arith.mulf %1279, %1273 : vector<16x16xf32>
    %1281 = arith.addf %1264, %1280 : vector<16x16xf32>
    %c138_159 = arith.constant 138 : index
    %1282 = memref.load %arg4[%c138_159] : memref<144xf32, #tpu.memory_space<smem>>
    %1283 = vector.broadcast %1282 : f32 to vector<16x16xf32>
    %1284 = arith.mulf %1283, %1273 : vector<16x16xf32>
    %1285 = arith.addf %1268, %1284 : vector<16x16xf32>
    %c139_160 = arith.constant 139 : index
    %1286 = memref.load %arg4[%c139_160] : memref<144xf32, #tpu.memory_space<smem>>
    %1287 = vector.broadcast %1286 : f32 to vector<16x16xf32>
    %1288 = arith.mulf %1287, %1273 : vector<16x16xf32>
    %1289 = arith.addf %1272, %1288 : vector<16x16xf32>
    %1290 = vector.extract_strided_slice %686 {offsets = [2, 2], sizes = [16, 16], strides = [1, 1]} : vector<18x18xf32> to vector<16x16xf32>
    %c140_161 = arith.constant 140 : index
    %1291 = memref.load %arg4[%c140_161] : memref<144xf32, #tpu.memory_space<smem>>
    %1292 = vector.broadcast %1291 : f32 to vector<16x16xf32>
    %1293 = arith.mulf %1292, %1290 : vector<16x16xf32>
    %1294 = arith.addf %1277, %1293 : vector<16x16xf32>
    %c141_162 = arith.constant 141 : index
    %1295 = memref.load %arg4[%c141_162] : memref<144xf32, #tpu.memory_space<smem>>
    %1296 = vector.broadcast %1295 : f32 to vector<16x16xf32>
    %1297 = arith.mulf %1296, %1290 : vector<16x16xf32>
    %1298 = arith.addf %1281, %1297 : vector<16x16xf32>
    %c142_163 = arith.constant 142 : index
    %1299 = memref.load %arg4[%c142_163] : memref<144xf32, #tpu.memory_space<smem>>
    %1300 = vector.broadcast %1299 : f32 to vector<16x16xf32>
    %1301 = arith.mulf %1300, %1290 : vector<16x16xf32>
    %1302 = arith.addf %1285, %1301 : vector<16x16xf32>
    %c143_164 = arith.constant 143 : index
    %1303 = memref.load %arg4[%c143_164] : memref<144xf32, #tpu.memory_space<smem>>
    %1304 = vector.broadcast %1303 : f32 to vector<16x16xf32>
    %1305 = arith.mulf %1304, %1290 : vector<16x16xf32>
    %1306 = arith.addf %1289, %1305 : vector<16x16xf32>
    %1307 = vector.extract_strided_slice %1 {offsets = [0, 2, 2], sizes = [1, 16, 16], strides = [1, 1, 1]} : vector<4x20x20xf32> to vector<1x16x16xf32>
    %1308 = vector.shape_cast %1307 : vector<1x16x16xf32> to vector<16x16xf32>
    %1309 = arith.addf %1294, %1308 : vector<16x16xf32>
    %c0_165 = arith.constant 0 : index
    %c0_166 = arith.constant 0 : index
    %c0_167 = arith.constant 0 : index
    %c0_168 = arith.constant 0 : index
    %1310 = vector.load %arg6[%c0_165, %c0_166, %c0_167, %c0_168] : memref<1x4x16x16xf32, #tpu.memory_space<vmem>>, vector<1x1x16x16xf32>
    %1311 = vector.shape_cast %1310 : vector<1x1x16x16xf32> to vector<16x16xf32>
    %1312 = vector.shape_cast %1309 : vector<16x16xf32> to vector<1x1x16x16xf32>
    tpu.vector_store %arg6[%c0_165, %c0_166, %c0_167, %c0_168], %1312 {strides = array<i32>} : memref<1x4x16x16xf32, #tpu.memory_space<vmem>>, vector<1x1x16x16xf32>,
    %1313 = vector.extract_strided_slice %1 {offsets = [1, 2, 2], sizes = [1, 16, 16], strides = [1, 1, 1]} : vector<4x20x20xf32> to vector<1x16x16xf32>
    %1314 = vector.shape_cast %1313 : vector<1x16x16xf32> to vector<16x16xf32>
    %1315 = arith.addf %1298, %1314 : vector<16x16xf32>
    %c0_169 = arith.constant 0 : index
    %c1_170 = arith.constant 1 : index
    %c0_171 = arith.constant 0 : index
    %c0_172 = arith.constant 0 : index
    %1316 = vector.load %arg6[%c0_169, %c1_170, %c0_171, %c0_172] : memref<1x4x16x16xf32, #tpu.memory_space<vmem>>, vector<1x1x16x16xf32>
    %1317 = vector.shape_cast %1316 : vector<1x1x16x16xf32> to vector<16x16xf32>
    %1318 = vector.shape_cast %1315 : vector<16x16xf32> to vector<1x1x16x16xf32>
    tpu.vector_store %arg6[%c0_169, %c1_170, %c0_171, %c0_172], %1318 {strides = array<i32>} : memref<1x4x16x16xf32, #tpu.memory_space<vmem>>, vector<1x1x16x16xf32>,
    %1319 = vector.extract_strided_slice %1 {offsets = [2, 2, 2], sizes = [1, 16, 16], strides = [1, 1, 1]} : vector<4x20x20xf32> to vector<1x16x16xf32>
    %1320 = vector.shape_cast %1319 : vector<1x16x16xf32> to vector<16x16xf32>
    %1321 = arith.addf %1302, %1320 : vector<16x16xf32>
    %c0_173 = arith.constant 0 : index
    %c2_174 = arith.constant 2 : index
    %c0_175 = arith.constant 0 : index
    %c0_176 = arith.constant 0 : index
    %1322 = vector.load %arg6[%c0_173, %c2_174, %c0_175, %c0_176] : memref<1x4x16x16xf32, #tpu.memory_space<vmem>>, vector<1x1x16x16xf32>
    %1323 = vector.shape_cast %1322 : vector<1x1x16x16xf32> to vector<16x16xf32>
    %1324 = vector.shape_cast %1321 : vector<16x16xf32> to vector<1x1x16x16xf32>
    tpu.vector_store %arg6[%c0_173, %c2_174, %c0_175, %c0_176], %1324 {strides = array<i32>} : memref<1x4x16x16xf32, #tpu.memory_space<vmem>>, vector<1x1x16x16xf32>,
    %1325 = vector.extract_strided_slice %1 {offsets = [3, 2, 2], sizes = [1, 16, 16], strides = [1, 1, 1]} : vector<4x20x20xf32> to vector<1x16x16xf32>
    %1326 = vector.shape_cast %1325 : vector<1x16x16xf32> to vector<16x16xf32>
    %1327 = arith.addf %1306, %1326 : vector<16x16xf32>
    %c0_177 = arith.constant 0 : index
    %c3_178 = arith.constant 3 : index
    %c0_179 = arith.constant 0 : index
    %c0_180 = arith.constant 0 : index
    %1328 = vector.load %arg6[%c0_177, %c3_178, %c0_179, %c0_180] : memref<1x4x16x16xf32, #tpu.memory_space<vmem>>, vector<1x1x16x16xf32>
    %1329 = vector.shape_cast %1328 : vector<1x1x16x16xf32> to vector<16x16xf32>
    %1330 = vector.shape_cast %1327 : vector<16x16xf32> to vector<1x1x16x16xf32>
    tpu.vector_store %arg6[%c0_177, %c3_178, %c0_179, %c0_180], %1330 {strides = array<i32>} : memref<1x4x16x16xf32, #tpu.memory_space<vmem>>, vector<1x1x16x16xf32>,
    return
  }
  func.func @transform_0(%arg0: i32) -> (i32, i32, i32, i32) {
    %c0_i32 = arith.constant 0 : i32
    %c0_i32_0 = arith.constant 0 : i32
    %c0_i32_1 = arith.constant 0 : i32
    %c0_i32_2 = arith.constant 0 : i32
    return %arg0, %c0_i32, %c0_i32_0, %c0_i32_1 : i32, i32, i32, i32
  }
  func.func @transform_1(%arg0: i32) -> i32 {
    %c0_i32 = arith.constant 0 : i32
    %c0_i32_0 = arith.constant 0 : i32
    return %c0_i32 : i32
  }
  func.func @transform_2(%arg0: i32) -> i32 {
    %c0_i32 = arith.constant 0 : i32
    %c0_i32_0 = arith.constant 0 : i32
    return %c0_i32 : i32
  }
  func.func @transform_3(%arg0: i32) -> i32 {
    %c0_i32 = arith.constant 0 : i32
    %c0_i32_0 = arith.constant 0 : i32
    return %c0_i32 : i32
  }
  func.func @transform_4(%arg0: i32) -> i32 {
    %c0_i32 = arith.constant 0 : i32
    %c0_i32_0 = arith.constant 0 : i32
    return %c0_i32 : i32
  }
  func.func @transform_5(%arg0: i32) -> (i32, i32, i32, i32) {
    %c0_i32 = arith.constant 0 : i32
    %c0_i32_0 = arith.constant 0 : i32
    %c0_i32_1 = arith.constant 0 : i32
    %c0_i32_2 = arith.constant 0 : i32
    return %arg0, %c0_i32, %c0_i32_0, %c0_i32_1 : i32, i32, i32, i32
  }
}

</mosaic_0001>

<llo_original>
// kernel: residual_block.1
$region0: #{residual_block.1}
  #allocation0 [shape = 'u32[]', space=smem, size = 0x4, offset = 0x4, fixed_abs, tag = 'smem constant byte address 0x4 - core index']
  #allocation1 [shape = 'u32[144,128]{1,0:T(1,128)}', space=vmem, size = 0x12000, scoped, tag = 'internal scratch']
  %s0 = inlined_call_operand.vmem [shape: f32[2,4,20,20], index: 0, kind: input, shape index: {}]
  %s1 = inlined_call_operand.vmem [shape: f32[144], index: 1, kind: input, shape index: {}]
  %s2 = inlined_call_operand.vmem [shape: f32[4], index: 2, kind: input, shape index: {}]
  %s3 = inlined_call_operand.vmem [shape: f32[144], index: 3, kind: input, shape index: {}]
  %s4 = inlined_call_operand.vmem [shape: f32[4], index: 4, kind: input, shape index: {}]
  %s5 = inlined_call_operand.hbm [shape: f32[2,4,16,16], index: 5, kind: output, shape index: {}]
  %s6 = sld [smem:[#allocation0]]
  $region69: #{residual_block.1} parent=0
    _
  %s8 = ssub.s32 1, %s6
  %s9 = scalar_select 0, %s8, %s6
  $region1: #{residual_block.1} parent=0
    #allocation2 [shape = 'u8[1024]{0}', space=smem, size = 0x400, scoped, tag = 'input window, operand 1, single buffered']
    #allocation3 [shape = 's32[2]{0}', space=sflag, size = 0x8, scoped, tag = 'scoped memory for residual_block.1']
    #allocation4 [shape = 's32[2]{0}', space=sflag, size = 0x8, scoped, tag = 'scoped memory for residual_block.1']
    #allocation5 [shape = 'u8[512]{0}', space=smem, size = 0x200, scoped, tag = 'input window, operand 2, single buffered']
    #allocation6 [shape = 's32[1]{0}', space=sflag, size = 0x4, scoped, tag = 'scoped memory for residual_block.1']
    #allocation7 [shape = 'u8[1024]{0}', space=smem, size = 0x400, scoped, tag = 'input window, operand 3, single buffered']
    #allocation8 [shape = 'u8[512]{0}', space=smem, size = 0x200, scoped, tag = 'input window, operand 4, single buffered']
    #allocation9 [shape = 's32[1]{0}', space=sflag, size = 0x4, scoped, tag = 'scoped memory for residual_block.1']
    #allocation10 [shape = 'u8[65536]{0}', space=vmem, size = 0x10000, scoped, tag = 'output window, operand 0']
    %10 = vsyncpa [#allocation4], 0
    %11 = vsyncpa [#allocation6], 0
    %12 = vsyncpa [#allocation9], 0
    %13 = vsyncpa [#allocation3], 0
    %s14 = scalar_lea.sflag [#allocation3], 1
    %15 = vsyncpa %s14, 0
    loop: start=0, step=1, limit=4
    $region2: #{residual_block.1} parent=1 // loop_pre_header
      _
    $region3: #{residual_block.1} parent=1 // loop_header
      %s17 = sphi 0, %s21
      %p18 = scmp.ge.s32.totalorder %s17, 4
      %s27 = sphi 0, %s29
      %s30 = sphi 0, %s27
      %s31 = sphi 0, %s30
      %s47 = sphi 0, %s31
      %s51 = sphi 0, %s51
      %s53 = sphi 0, %s51
      %s54 = sphi 0, %s53
      %s68 = sphi 0, %s54
      %s72 = sphi 0, %s72
      %s74 = sphi 0, %s72
      %s75 = sphi 0, %s74
      %s89 = sphi 0, %s75
      %s93 = sphi 0, %s93
      %s95 = sphi 0, %s93
      %s96 = sphi 0, %s95
      %s110 = sphi 0, %s96
      %s114 = sphi 0, %s114
      %s116 = sphi 0, %s114
      %s117 = sphi 0, %s116
      %s131 = sphi 0, %s117
      %s137 = sphi 0, %s139
      %s140 = sphi 0, %s137
      %s141 = sphi 0, %s140
      %s157 = sphi 0, %s141
    $region4: #{residual_block.1} parent=1 // loop_header_branch
      %20 = sbr.rel (%p18) target = $region8
    $region5: #{residual_block.1} parent=1 // loop_body
      %s22 = ssub.s32 %s17, 1
      %s23 = ssub.s32 %s17, 2
      %s24 = sadd.s32 %s17, 1
      %s25 = ssub.s32 %s17, %s24
      %p26 = scmp.eq.s32.totalorder %s25, 0
      %s28 = sadd.s32 %s27, 1
      %s29 = scalar_select %p26, %s27, %s28
      %p32 = pneg %p26
      %p33 = scmp.eq.s32.totalorder %s17, 1
      %p34 = por %p32, %p33
      %p35 = scmp.ne.s32.totalorder %s27, %s30
      %p36 = scmp.eq.s32.totalorder %s17, 0
      %p37 = por %p35, %p36
      %p38 = scmp.ne.s32.totalorder %s27, %s30
      %p39 = scmp.eq.s32.totalorder %s22, 1
      %p40 = por %p38, %p39
      %p41 = scmp.ne.s32.totalorder %s30, %s31
      %p42 = scmp.eq.s32.totalorder %s22, 0
      %p43 = por %p41, %p42
      %p44 = scmp.ne.s32.totalorder %s30, %s31
      %p45 = scmp.eq.s32.totalorder %s23, 1
      %p46 = por %p44, %p45
      %p48 = scmp.ne.s32.totalorder %s31, %s47
      %p49 = scmp.eq.s32.totalorder %s23, 0
      %p50 = por %p48, %p49
      %s52 = sadd.s32 %s51, 1
      %p55 = scmp.eq.s32.totalorder %s17, 1
      %p56 = scmp.ne.s32.totalorder %s51, %s53
      %p57 = scmp.eq.s32.totalorder %s17, 0
      %p58 = por %p56, %p57
      %p59 = scmp.ne.s32.totalorder %s51, %s53
      %p60 = scmp.eq.s32.totalorder %s22, 1
      %p61 = por %p59, %p60
      %p62 = scmp.ne.s32.totalorder %s53, %s54
      %p63 = scmp.eq.s32.totalorder %s22, 0
      %p64 = por %p62, %p63
      %p65 = scmp.ne.s32.totalorder %s53, %s54
      %p66 = scmp.eq.s32.totalorder %s23, 1
      %p67 = por %p65, %p66
      %p69 = scmp.ne.s32.totalorder %s54, %s68
      %p70 = scmp.eq.s32.totalorder %s23, 0
      %p71 = por %p69, %p70
      %s73 = sadd.s32 %s72, 1
      %p76 = scmp.eq.s32.totalorder %s17, 1
      %p77 = scmp.ne.s32.totalorder %s72, %s74
      %p78 = scmp.eq.s32.totalorder %s17, 0
      %p79 = por %p77, %p78
      %p80 = scmp.ne.s32.totalorder %s72, %s74
      %p81 = scmp.eq.s32.totalorder %s22, 1
      %p82 = por %p80, %p81
      %p83 = scmp.ne.s32.totalorder %s74, %s75
      %p84 = scmp.eq.s32.totalorder %s22, 0
      %p85 = por %p83, %p84
      %p86 = scmp.ne.s32.totalorder %s74, %s75
      %p87 = scmp.eq.s32.totalorder %s23, 1
      %p88 = por %p86, %p87
      %p90 = scmp.ne.s32.totalorder %s75, %s89
      %p91 = scmp.eq.s32.totalorder %s23, 0
      %p92 = por %p90, %p91
      %s94 = sadd.s32 %s93, 1
      %p97 = scmp.eq.s32.totalorder %s17, 1
      %p98 = scmp.ne.s32.totalorder %s93, %s95
      %p99 = scmp.eq.s32.totalorder %s17, 0
      %p100 = por %p98, %p99
      %p101 = scmp.ne.s32.totalorder %s93, %s95
      %p102 = scmp.eq.s32.totalorder %s22, 1
      %p103 = por %p101, %p102
      %p104 = scmp.ne.s32.totalorder %s95, %s96
      %p105 = scmp.eq.s32.totalorder %s22, 0
      %p106 = por %p104, %p105
      %p107 = scmp.ne.s32.totalorder %s95, %s96
      %p108 = scmp.eq.s32.totalorder %s23, 1
      %p109 = por %p107, %p108
      %p111 = scmp.ne.s32.totalorder %s96, %s110
      %p112 = scmp.eq.s32.totalorder %s23, 0
      %p113 = por %p111, %p112
      %s115 = sadd.s32 %s114, 1
      %p118 = scmp.eq.s32.totalorder %s17, 1
      %p119 = scmp.ne.s32.totalorder %s114, %s116
      %p120 = scmp.eq.s32.totalorder %s17, 0
      %p121 = por %p119, %p120
      %p122 = scmp.ne.s32.totalorder %s114, %s116
      %p123 = scmp.eq.s32.totalorder %s22, 1
      %p124 = por %p122, %p123
      %p125 = scmp.ne.s32.totalorder %s116, %s117
      %p126 = scmp.eq.s32.totalorder %s22, 0
      %p127 = por %p125, %p126
      %p128 = scmp.ne.s32.totalorder %s116, %s117
      %p129 = scmp.eq.s32.totalorder %s23, 1
      %p130 = por %p128, %p129
      %p132 = scmp.ne.s32.totalorder %s117, %s131
      %p133 = scmp.eq.s32.totalorder %s23, 0
      %p134 = por %p132, %p133
      %s135 = ssub.s32 %s17, %s24
      %p136 = scmp.eq.s32.totalorder %s135, 0
      %s138 = sadd.s32 %s137, 1
      %s139 = scalar_select %p136, %s137, %s138
      %p142 = pneg %p136
      %p143 = scmp.eq.s32.totalorder %s17, 1
      %p144 = por %p142, %p143
      %p145 = scmp.ne.s32.totalorder %s137, %s140
      %p146 = scmp.eq.s32.totalorder %s17, 0
      %p147 = por %p145, %p146
      %p148 = scmp.ne.s32.totalorder %s137, %s140
      %p149 = scmp.eq.s32.totalorder %s22, 1
      %p150 = por %p148, %p149
      %p151 = scmp.ne.s32.totalorder %s140, %s141
      %p152 = scmp.eq.s32.totalorder %s22, 0
      %p153 = por %p151, %p152
      %p154 = scmp.ne.s32.totalorder %s140, %s141
      %p155 = scmp.eq.s32.totalorder %s23, 1
      %p156 = por %p154, %p155
      %p158 = scmp.ne.s32.totalorder %s141, %s157
      %p159 = scmp.eq.s32.totalorder %s23, 0
      %p160 = por %p158, %p159
      %p161 = scmp.le.s32.totalorder 1, %s17
      %p162 = scmp.lt.s32.totalorder %s17, 3
      %p163 = pnand %p161, %p162
      %p164 = pneg %p163
      // Predicated region
      $region9: #{residual_block.1} parent=5 // pred_check
        _
      $region10: #{residual_block.1} parent=5 // pred_check_branch
        %166 = sbr.rel (%p163) target = $region12
      $region11: #{residual_block.1} parent=5 // pred_region
        %s167 = ssub.s32 %s17, 1
        // Predicated region
        $region13: #{residual_block.1} parent=11 // pred_check
          %p168 = pneg %p64
        $region14: #{residual_block.1} parent=11 // pred_check_branch
          %170 = sbr.rel (%p168) target = $region16
        $region15: #{residual_block.1} parent=11 // pred_region
          %s172 = ssub.s32 32, 32
          %173 = vsyncadd [#allocation4], %s172
          %s175 = sshll.u32 %s1, 4
          %s176 = int_to_ptr.vmem [resolvable:$true] %s175
          %178 = dma.vmem_to_smem %s176, 32, [#allocation2], [#allocation4]
        $region16: #{residual_block.1} parent=11 // pred_fallthru
          _
        // Predicated region
        $region17: #{residual_block.1} parent=11 // pred_check
          %p179 = pneg %p85
        $region18: #{residual_block.1} parent=11 // pred_check_branch
          %181 = sbr.rel (%p179) target = $region20
        $region19: #{residual_block.1} parent=11 // pred_region
          %s183 = ssub.s32 16, 16
          %184 = vsyncadd [#allocation6], %s183
          %s186 = sshll.u32 %s2, 4
          %s187 = int_to_ptr.vmem [resolvable:$true] %s186
          %189 = dma.vmem_to_smem %s187, 16, [#allocation5], [#allocation6]
        $region20: #{residual_block.1} parent=11 // pred_fallthru
          _
        // Predicated region
        $region21: #{residual_block.1} parent=11 // pred_check
          %p190 = pneg %p106
        $region22: #{residual_block.1} parent=11 // pred_check_branch
          %192 = sbr.rel (%p190) target = $region24
        $region23: #{residual_block.1} parent=11 // pred_region
          %s194 = ssub.s32 32, 32
          %195 = vsyncadd [#allocation6], %s194
          %s197 = sshll.u32 %s3, 4
          %s198 = int_to_ptr.vmem [resolvable:$true] %s197
          %200 = dma.vmem_to_smem %s198, 32, [#allocation7], [#allocation6]
        $region24: #{residual_block.1} parent=11 // pred_fallthru
          _
        // Predicated region
        $region25: #{residual_block.1} parent=11 // pred_check
          %p201 = pneg %p127
        $region26: #{residual_block.1} parent=11 // pred_check_branch
          %203 = sbr.rel (%p201) target = $region28
        $region27: #{residual_block.1} parent=11 // pred_region
          %s205 = ssub.s32 16, 16
          %206 = vsyncadd [#allocation9], %s205
          %s208 = sshll.u32 %s4, 4
          %s209 = int_to_ptr.vmem [resolvable:$true] %s208
          %211 = dma.vmem_to_smem %s209, 16, [#allocation8], [#allocation9]
        $region28: #{residual_block.1} parent=11 // pred_fallthru
          _
      $region12: #{residual_block.1} parent=5 // pred_fallthru
        _
      %p212 = scmp.lt.s32.totalorder %s17, 2
      // Predicated region
      $region29: #{residual_block.1} parent=5 // pred_check
        %p213 = pneg %p212
      $region30: #{residual_block.1} parent=5 // pred_check_branch
        %215 = sbr.rel (%p213) target = $region32
      $region31: #{residual_block.1} parent=5 // pred_region
        // Predicated region
        $region33: #{residual_block.1} parent=31 // pred_check
          %p216 = pneg %p37
        $region34: #{residual_block.1} parent=31 // pred_check_branch
          %218 = sbr.rel (%p216) target = $region36
        $region35: #{residual_block.1} parent=31 // pred_region
          %p219 = scmp.lt.s32.totalorder %s17, 1
          %s220 = scalar_select %p219, %s17, 1
          %s221 = smul.addr %s220, 12
          %s222 = smul.addr %s221, 8
          %s223 = scalar_lea.vmem %s0, %s222
        $region36: #{residual_block.1} parent=31 // pred_fallthru
          _
      $region32: #{residual_block.1} parent=5 // pred_fallthru
        _
      %p224 = scmp.le.s32.totalorder 1, %s17
      %p225 = scmp.lt.s32.totalorder %s17, 3
      %p226 = pnand %p224, %p225
      %p227 = pneg %p226
      // Predicated region
      $region37: #{residual_block.1} parent=5 // pred_check
        _
      $region38: #{residual_block.1} parent=5 // pred_check_branch
        %229 = sbr.rel (%p226) target = $region40
      $region39: #{residual_block.1} parent=5 // pred_region
        %s230 = ssub.s32 %s17, 1
        // Predicated region
        $region41: #{residual_block.1} parent=39 // pred_check
          %p231 = pneg %p64
        $region42: #{residual_block.1} parent=39 // pred_check_branch
          %233 = sbr.rel (%p231) target = $region44
        $region43: #{residual_block.1} parent=39 // pred_region
          %234 = dma.done [#allocation4], 32
        $region44: #{residual_block.1} parent=39 // pred_fallthru
          _
        // Predicated region
        $region45: #{residual_block.1} parent=39 // pred_check
          %p235 = pneg %p85
        $region46: #{residual_block.1} parent=39 // pred_check_branch
          %237 = sbr.rel (%p235) target = $region48
        $region47: #{residual_block.1} parent=39 // pred_region
          %238 = dma.done [#allocation6], 16
        $region48: #{residual_block.1} parent=39 // pred_fallthru
          _
        // Predicated region
        $region49: #{residual_block.1} parent=39 // pred_check
          %p239 = pneg %p106
        $region50: #{residual_block.1} parent=39 // pred_check_branch
          %241 = sbr.rel (%p239) target = $region52
        $region51: #{residual_block.1} parent=39 // pred_region
          %242 = dma.done [#allocation6], 32
        $region52: #{residual_block.1} parent=39 // pred_fallthru
          _
        // Predicated region
        $region53: #{residual_block.1} parent=39 // pred_check
          %p243 = pneg %p127
        $region54: #{residual_block.1} parent=39 // pred_check_branch
          %245 = sbr.rel (%p243) target = $region56
        $region55: #{residual_block.1} parent=39 // pred_region
          %246 = dma.done [#allocation9], 16
        $region56: #{residual_block.1} parent=39 // pred_fallthru
          _
        %247 = sfence
        %p248 = scmp.lt.s32.totalorder %s22, 1
        %s249 = scalar_select %p248, %s22, 1
        %s250 = smul.addr %s249, 12
        %s251 = smul.addr %s250, 8
        %s252 = scalar_lea.vmem %s0, %s251
        %p253 = pneg %p43
        %p254 = pneg %p40
        %p255 = pneg %p64
        %p256 = pneg %p61
        %p257 = pneg %p85
        %p258 = pneg %p82
        %p259 = pneg %p106
        %p260 = pneg %p103
        %p261 = pneg %p127
        %p262 = pneg %p124
        %p263 = pneg %p153
        %p264 = pneg %p150
        %s265 = sand.u32 %s140, 1
        %s266 = scalar_lea.sflag [#allocation3], %s265
        %s267 = sand.u32 %s140, 1
        %s268 = smul.addr %s267, 64
        %s269 = scalar_lea.vmem [#allocation10], %s268
        %p270 = scmp.lt.s32.totalorder %s22, 1
        %s271 = scalar_select %p270, %s22, 1
        %s272 = smul.addr %s271, 12
        %s273 = smul.addr %s272, 8
        %s274 = scalar_lea.vmem %s0, %s273
        %v275 = vld [vmem:[%s274] sm:$0xff]
        %v276 = vld [vmem:[%s274 + $0x8] sm:$0xff]
        %v277 = vld [vmem:[%s274 + $0x10] sm:$0xf]
        %v278 = vld [vmem:[%s274 + $0x18] sm:$0xff]
        %v279 = vld [vmem:[%s274 + $0x20] sm:$0xff]
        %v280 = vld [vmem:[%s274 + $0x28] sm:$0xf]
        %v281 = vld [vmem:[%s274 + $0x30] sm:$0xff]
        %v282 = vld [vmem:[%s274 + $0x38] sm:$0xff]
        %v283 = vld [vmem:[%s274 + $0x40] sm:$0xf]
        %v284 = vld [vmem:[%s274 + $0x48] sm:$0xff]
        %v285 = vld [vmem:[%s274 + $0x50] sm:$0xff]
        %v286 = vld [vmem:[%s274 + $0x58] sm:$0xf]
        %v287 = vlaneseq
        %v288 = vshrl.u32 %v287, 7
        %v289 = vadd.s32 %v288, 8
        %v290 = vadd.s32 %v288, 16
        %v291 = vlaneseq
        %v292 = vand.u32 %v291, 127
        %vm293 = vcmp.ge.s32.totalorder %v288, 1
        %vm294 = vcmp.ge.s32.totalorder %v289, 1
        %vm295 = vcmp.ge.s32.totalorder %v290, 1
        %vm296 = vcmp.lt.s32.totalorder %v288, 17
        %vm297 = vcmp.lt.s32.totalorder %v289, 17
        %vm298 = vcmp.lt.s32.totalorder %v290, 17
        %vm299 = vmand %vm293, %vm296
        %vm300 = vmand %vm294, %vm297
        %vm301 = vmand %vm295, %vm298
        %vm302 = vcmp.ge.s32.totalorder %v292, 1
        %vm303 = vmand %vm299, %vm302
        %vm304 = vmand %vm300, %vm302
        %vm305 = vmand %vm301, %vm302
        %vm306 = vcmp.lt.s32.totalorder %v292, 17
        %vm307 = vmand %vm303, %vm306
        %vm308 = vmand %vm304, %vm306
        %vm309 = vmand %vm305, %vm306
        %s310 = sld [smem:[#allocation5]]
        %v311 = vstv %s310
        %s312 = sld [smem:[#allocation5 + $0x1]]
        %v313 = vstv %s312
        %s314 = sld [smem:[#allocation5 + $0x2]]
        %v315 = vstv %s314
        %s316 = sld [smem:[#allocation5 + $0x3]]
        %v317 = vstv %s316
        %s318 = sld [smem:[#allocation2]]
        %v319 = vstv %s318
        %v320 = vmul.f32 %v319, %v275
        %v321 = vmul.f32 %v319, %v276
        %v322 = vmul.f32 %v319, %v277
        %v323 = vadd.f32 %v311, %v320
        %v324 = vadd.f32 %v311, %v321
        %v325 = vadd.f32 %v311, %v322
        %s326 = sld [smem:[#allocation2 + $0x1]]
        %v327 = vstv %s326
        %v328 = vmul.f32 %v327, %v275
        %v329 = vmul.f32 %v327, %v276
        %v330 = vmul.f32 %v327, %v277
        %v331 = vadd.f32 %v313, %v328
        %v332 = vadd.f32 %v313, %v329
        %v333 = vadd.f32 %v313, %v330
        %s334 = sld [smem:[#allocation2 + $0x2]]
        %v335 = vstv %s334
        %v336 = vmul.f32 %v335, %v275
        %v337 = vmul.f32 %v335, %v276
        %v338 = vmul.f32 %v335, %v277
        %v339 = vadd.f32 %v315, %v336
        %v340 = vadd.f32 %v315, %v337
        %v341 = vadd.f32 %v315, %v338
        %s342 = sld [smem:[#allocation2 + $0x3]]
        %v343 = vstv %s342
        %v344 = vmul.f32 %v343, %v275
        %v345 = vmul.f32 %v343, %v276
        %v346 = vmul.f32 %v343, %v277
        %v347 = vadd.f32 %v317, %v344
        %v348 = vadd.f32 %v317, %v345
        %v349 = vadd.f32 %v317, %v346
        %s350 = sld [smem:[#allocation2 + $0x4]]
        %v351 = vstv %s350
        %v352 = vmul.f32 %v351, %v278
        %v353 = vmul.f32 %v351, %v279
        %v354 = vmul.f32 %v351, %v280
        %v355 = vadd.f32 %v323, %v352
        %v356 = vadd.f32 %v324, %v353
        %v357 = vadd.f32 %v325, %v354
        %s358 = sld [smem:[#allocation2 + $0x5]]
        %v359 = vstv %s358
        %v360 = vmul.f32 %v359, %v278
        %v361 = vmul.f32 %v359, %v279
        %v362 = vmul.f32 %v359, %v280
        %v363 = vadd.f32 %v331, %v360
        %v364 = vadd.f32 %v332, %v361
        %v365 = vadd.f32 %v333, %v362
        %s366 = sld [smem:[#allocation2 + $0x6]]
        %v367 = vstv %s366
        %v368 = vmul.f32 %v367, %v278
        %v369 = vmul.f32 %v367, %v279
        %v370 = vmul.f32 %v367, %v280
        %v371 = vadd.f32 %v339, %v368
        %v372 = vadd.f32 %v340, %v369
        %v373 = vadd.f32 %v341, %v370
        %s374 = sld [smem:[#allocation2 + $0x7]]
        %v375 = vstv %s374
        %v376 = vmul.f32 %v375, %v278
        %v377 = vmul.f32 %v375, %v279
        %v378 = vmul.f32 %v375, %v280
        %v379 = vadd.f32 %v347, %v376
        %v380 = vadd.f32 %v348, %v377
        %v381 = vadd.f32 %v349, %v378
        %s382 = sld [smem:[#allocation2 + $0x8]]
        %v383 = vstv %s382
        %v384 = vmul.f32 %v383, %v281
        %v385 = vmul.f32 %v383, %v282
        %v386 = vmul.f32 %v383, %v283
        %v387 = vadd.f32 %v355, %v384
        %v388 = vadd.f32 %v356, %v385
        %v389 = vadd.f32 %v357, %v386
        %s390 = sld [smem:[#allocation2 + $0x9]]
        %v391 = vstv %s390
        %v392 = vmul.f32 %v391, %v281
        %v393 = vmul.f32 %v391, %v282
        %v394 = vmul.f32 %v391, %v283
        %v395 = vadd.f32 %v363, %v392
        %v396 = vadd.f32 %v364, %v393
        %v397 = vadd.f32 %v365, %v394
        %s398 = sld [smem:[#allocation2 + $0xa]]
        %v399 = vstv %s398
        %v400 = vmul.f32 %v399, %v281
        %v401 = vmul.f32 %v399, %v282
        %v402 = vmul.f32 %v399, %v283
        %v403 = vadd.f32 %v371, %v400
        %v404 = vadd.f32 %v372, %v401
        %v405 = vadd.f32 %v373, %v402
        %s406 = sld [smem:[#allocation2 + $0xb]]
        %v407 = vstv %s406
        %v408 = vmul.f32 %v407, %v281
        %v409 = vmul.f32 %v407, %v282
        %v410 = vmul.f32 %v407, %v283
        %v411 = vadd.f32 %v379, %v408
        %v412 = vadd.f32 %v380, %v409
        %v413 = vadd.f32 %v381, %v410
        %s414 = sld [smem:[#allocation2 + $0xc]]
        %v415 = vstv %s414
        %v416 = vmul.f32 %v415, %v284
        %v417 = vmul.f32 %v415, %v285
        %v418 = vmul.f32 %v415, %v286
        %v419 = vadd.f32 %v387, %v416
        %v420 = vadd.f32 %v388, %v417
        %v421 = vadd.f32 %v389, %v418
        %s422 = sld [smem:[#allocation2 + $0xd]]
        %v423 = vstv %s422
        %v424 = vmul.f32 %v423, %v284
        %v425 = vmul.f32 %v423, %v285
        %v426 = vmul.f32 %v423, %v286
        %v427 = vadd.f32 %v395, %v424
        %v428 = vadd.f32 %v396, %v425
        %v429 = vadd.f32 %v397, %v426
        %s430 = sld [smem:[#allocation2 + $0xe]]
        %v431 = vstv %s430
        %v432 = vmul.f32 %v431, %v284
        %v433 = vmul.f32 %v431, %v285
        %v434 = vmul.f32 %v431, %v286
        %v435 = vadd.f32 %v403, %v432
        %v436 = vadd.f32 %v404, %v433
        %v437 = vadd.f32 %v405, %v434
        %s438 = sld [smem:[#allocation2 + $0xf]]
        %v439 = vstv %s438
        %v440 = vmul.f32 %v439, %v284
        %v441 = vmul.f32 %v439, %v285
        %v442 = vmul.f32 %v439, %v286
        %v443 = vadd.f32 %v411, %v440
        %v444 = vadd.f32 %v412, %v441
        %v445 = vadd.f32 %v413, %v442
        %s446 = sld [smem:[#allocation2 + $0x10]]
        %v447 = vstv %s446
        %v448 = vmul.f32 %v447, %v275
        %v449 = vmul.f32 %v447, %v276
        %v450 = vmul.f32 %v447, %v277
        %454 = vrot.lane.b32.xlu0 %v448, 127
        %v455 = vpop.permute.xlu0 %454
        %456 = vrot.lane.b32.xlu0 %v449, 127
        %v457 = vpop.permute.xlu0 %456
        %458 = vrot.lane.b32.xlu0 %v450, 127
        %v459 = vpop.permute.xlu0 %458
        %v463 = vadd.f32 %v419, %v455
        %v464 = vadd.f32 %v420, %v457
        %v465 = vadd.f32 %v421, %v459
        %s466 = sld [smem:[#allocation2 + $0x11]]
        %v467 = vstv %s466
        %v468 = vmul.f32 %v467, %v275
        %v469 = vmul.f32 %v467, %v276
        %v470 = vmul.f32 %v467, %v277
        %474 = vrot.lane.b32.xlu0 %v468, 127
        %v475 = vpop.permute.xlu0 %474
        %476 = vrot.lane.b32.xlu0 %v469, 127
        %v477 = vpop.permute.xlu0 %476
        %478 = vrot.lane.b32.xlu0 %v470, 127
        %v479 = vpop.permute.xlu0 %478
        %v483 = vadd.f32 %v427, %v475
        %v484 = vadd.f32 %v428, %v477
        %v485 = vadd.f32 %v429, %v479
        %s486 = sld [smem:[#allocation2 + $0x12]]
        %v487 = vstv %s486
        %v488 = vmul.f32 %v487, %v275
        %v489 = vmul.f32 %v487, %v276
        %v490 = vmul.f32 %v487, %v277
        %494 = vrot.lane.b32.xlu0 %v488, 127
        %v495 = vpop.permute.xlu0 %494
        %496 = vrot.lane.b32.xlu0 %v489, 127
        %v497 = vpop.permute.xlu0 %496
        %498 = vrot.lane.b32.xlu0 %v490, 127
        %v499 = vpop.permute.xlu0 %498
        %v503 = vadd.f32 %v435, %v495
        %v504 = vadd.f32 %v436, %v497
        %v505 = vadd.f32 %v437, %v499
        %s506 = sld [smem:[#allocation2 + $0x13]]
        %v507 = vstv %s506
        %v508 = vmul.f32 %v507, %v275
        %v509 = vmul.f32 %v507, %v276
        %v510 = vmul.f32 %v507, %v277
        %514 = vrot.lane.b32.xlu0 %v508, 127
        %v515 = vpop.permute.xlu0 %514
        %516 = vrot.lane.b32.xlu0 %v509, 127
        %v517 = vpop.permute.xlu0 %516
        %518 = vrot.lane.b32.xlu0 %v510, 127
        %v519 = vpop.permute.xlu0 %518
        %v523 = vadd.f32 %v443, %v515
        %v524 = vadd.f32 %v444, %v517
        %v525 = vadd.f32 %v445, %v519
        %s526 = sld [smem:[#allocation2 + $0x14]]
        %v527 = vstv %s526
        %v528 = vmul.f32 %v527, %v278
        %v529 = vmul.f32 %v527, %v279
        %v530 = vmul.f32 %v527, %v280
        %534 = vrot.lane.b32.xlu0 %v528, 127
        %v535 = vpop.permute.xlu0 %534
        %536 = vrot.lane.b32.xlu0 %v529, 127
        %v537 = vpop.permute.xlu0 %536
        %538 = vrot.lane.b32.xlu0 %v530, 127
        %v539 = vpop.permute.xlu0 %538
        %v543 = vadd.f32 %v463, %v535
        %v544 = vadd.f32 %v464, %v537
        %v545 = vadd.f32 %v465, %v539
        %s546 = sld [smem:[#allocation2 + $0x15]]
        %v547 = vstv %s546
        %v548 = vmul.f32 %v547, %v278
        %v549 = vmul.f32 %v547, %v279
        %v550 = vmul.f32 %v547, %v280
        %554 = vrot.lane.b32.xlu0 %v548, 127
        %v555 = vpop.permute.xlu0 %554
        %556 = vrot.lane.b32.xlu0 %v549, 127
        %v557 = vpop.permute.xlu0 %556
        %558 = vrot.lane.b32.xlu0 %v550, 127
        %v559 = vpop.permute.xlu0 %558
        %v563 = vadd.f32 %v483, %v555
        %v564 = vadd.f32 %v484, %v557
        %v565 = vadd.f32 %v485, %v559
        %s566 = sld [smem:[#allocation2 + $0x16]]
        %v567 = vstv %s566
        %v568 = vmul.f32 %v567, %v278
        %v569 = vmul.f32 %v567, %v279
        %v570 = vmul.f32 %v567, %v280
        %574 = vrot.lane.b32.xlu0 %v568, 127
        %v575 = vpop.permute.xlu0 %574
        %576 = vrot.lane.b32.xlu0 %v569, 127
        %v577 = vpop.permute.xlu0 %576
        %578 = vrot.lane.b32.xlu0 %v570, 127
        %v579 = vpop.permute.xlu0 %578
        %v583 = vadd.f32 %v503, %v575
        %v584 = vadd.f32 %v504, %v577
        %v585 = vadd.f32 %v505, %v579
        %s586 = sld [smem:[#allocation2 + $0x17]]
        %v587 = vstv %s586
        %v588 = vmul.f32 %v587, %v278
        %v589 = vmul.f32 %v587, %v279
        %v590 = vmul.f32 %v587, %v280
        %594 = vrot.lane.b32.xlu0 %v588, 127
        %v595 = vpop.permute.xlu0 %594
        %596 = vrot.lane.b32.xlu0 %v589, 127
        %v597 = vpop.permute.xlu0 %596
        %598 = vrot.lane.b32.xlu0 %v590, 127
        %v599 = vpop.permute.xlu0 %598
        %v603 = vadd.f32 %v523, %v595
        %v604 = vadd.f32 %v524, %v597
        %v605 = vadd.f32 %v525, %v599
        %s606 = sld [smem:[#allocation2 + $0x18]]
        %v607 = vstv %s606
        %v608 = vmul.f32 %v607, %v281
        %v609 = vmul.f32 %v607, %v282
        %v610 = vmul.f32 %v607, %v283
        %614 = vrot.lane.b32.xlu0 %v608, 127
        %v615 = vpop.permute.xlu0 %614
        %616 = vrot.lane.b32.xlu0 %v609, 127
        %v617 = vpop.permute.xlu0 %616
        %618 = vrot.lane.b32.xlu0 %v610, 127
        %v619 = vpop.permute.xlu0 %618
        %v623 = vadd.f32 %v543, %v615
        %v624 = vadd.f32 %v544, %v617
        %v625 = vadd.f32 %v545, %v619
        %s626 = sld [smem:[#allocation2 + $0x19]]
        %v627 = vstv %s626
        %v628 = vmul.f32 %v627, %v281
        %v629 = vmul.f32 %v627, %v282
        %v630 = vmul.f32 %v627, %v283
        %634 = vrot.lane.b32.xlu0 %v628, 127
        %v635 = vpop.permute.xlu0 %634
        %636 = vrot.lane.b32.xlu0 %v629, 127
        %v637 = vpop.permute.xlu0 %636
        %638 = vrot.lane.b32.xlu0 %v630, 127
        %v639 = vpop.permute.xlu0 %638
        %v643 = vadd.f32 %v563, %v635
        %v644 = vadd.f32 %v564, %v637
        %v645 = vadd.f32 %v565, %v639
        %s646 = sld [smem:[#allocation2 + $0x1a]]
        %v647 = vstv %s646
        %v648 = vmul.f32 %v647, %v281
        %v649 = vmul.f32 %v647, %v282
        %v650 = vmul.f32 %v647, %v283
        %654 = vrot.lane.b32.xlu0 %v648, 127
        %v655 = vpop.permute.xlu0 %654
        %656 = vrot.lane.b32.xlu0 %v649, 127
        %v657 = vpop.permute.xlu0 %656
        %658 = vrot.lane.b32.xlu0 %v650, 127
        %v659 = vpop.permute.xlu0 %658
        %v663 = vadd.f32 %v583, %v655
        %v664 = vadd.f32 %v584, %v657
        %v665 = vadd.f32 %v585, %v659
        %s666 = sld [smem:[#allocation2 + $0x1b]]
        %v667 = vstv %s666
        %v668 = vmul.f32 %v667, %v281
        %v669 = vmul.f32 %v667, %v282
        %v670 = vmul.f32 %v667, %v283
        %674 = vrot.lane.b32.xlu0 %v668, 127
        %v675 = vpop.permute.xlu0 %674
        %676 = vrot.lane.b32.xlu0 %v669, 127
        %v677 = vpop.permute.xlu0 %676
        %678 = vrot.lane.b32.xlu0 %v670, 127
        %v679 = vpop.permute.xlu0 %678
        %v683 = vadd.f32 %v603, %v675
        %v684 = vadd.f32 %v604, %v677
        %v685 = vadd.f32 %v605, %v679
        %s686 = sld [smem:[#allocation2 + $0x1c]]
        %v687 = vstv %s686
        %v688 = vmul.f32 %v687, %v284
        %v689 = vmul.f32 %v687, %v285
        %v690 = vmul.f32 %v687, %v286
        %694 = vrot.lane.b32.xlu0 %v688, 127
        %v695 = vpop.permute.xlu0 %694
        %696 = vrot.lane.b32.xlu0 %v689, 127
        %v697 = vpop.permute.xlu0 %696
        %698 = vrot.lane.b32.xlu0 %v690, 127
        %v699 = vpop.permute.xlu0 %698
        %v703 = vadd.f32 %v623, %v695
        %v704 = vadd.f32 %v624, %v697
        %v705 = vadd.f32 %v625, %v699
        %s706 = sld [smem:[#allocation2 + $0x1d]]
        %v707 = vstv %s706
        %v708 = vmul.f32 %v707, %v284
        %v709 = vmul.f32 %v707, %v285
        %v710 = vmul.f32 %v707, %v286
        %714 = vrot.lane.b32.xlu0 %v708, 127
        %v715 = vpop.permute.xlu0 %714
        %716 = vrot.lane.b32.xlu0 %v709, 127
        %v717 = vpop.permute.xlu0 %716
        %718 = vrot.lane.b32.xlu0 %v710, 127
        %v719 = vpop.permute.xlu0 %718
        %v723 = vadd.f32 %v643, %v715
        %v724 = vadd.f32 %v644, %v717
        %v725 = vadd.f32 %v645, %v719
        %s726 = sld [smem:[#allocation2 + $0x1e]]
        %v727 = vstv %s726
        %v728 = vmul.f32 %v727, %v284
        %v729 = vmul.f32 %v727, %v285
        %v730 = vmul.f32 %v727, %v286
        %734 = vrot.lane.b32.xlu0 %v728, 127
        %v735 = vpop.permute.xlu0 %734
        %736 = vrot.lane.b32.xlu0 %v729, 127
        %v737 = vpop.permute.xlu0 %736
        %738 = vrot.lane.b32.xlu0 %v730, 127
        %v739 = vpop.permute.xlu0 %738
        %v743 = vadd.f32 %v663, %v735
        %v744 = vadd.f32 %v664, %v737
        %v745 = vadd.f32 %v665, %v739
        %s746 = sld [smem:[#allocation2 + $0x1f]]
        %v747 = vstv %s746
        %v748 = vmul.f32 %v747, %v284
        %v749 = vmul.f32 %v747, %v285
        %v750 = vmul.f32 %v747, %v286
        %754 = vrot.lane.b32.xlu0 %v748, 127
        %v755 = vpop.permute.xlu0 %754
        %756 = vrot.lane.b32.xlu0 %v749, 127
        %v757 = vpop.permute.xlu0 %756
        %758 = vrot.lane.b32.xlu0 %v750, 127
        %v759 = vpop.permute.xlu0 %758
        %v763 = vadd.f32 %v683, %v755
        %v764 = vadd.f32 %v684, %v757
        %v765 = vadd.f32 %v685, %v759
        %s766 = sld [smem:[#allocation2 + $0x20]]
        %v767 = vstv %s766
        %v768 = vmul.f32 %v767, %v275
        %v769 = vmul.f32 %v767, %v276
        %v770 = vmul.f32 %v767, %v277
        %774 = vrot.lane.b32.xlu0 %v768, 126
        %v775 = vpop.permute.xlu0 %774
        %776 = vrot.lane.b32.xlu0 %v769, 126
        %v777 = vpop.permute.xlu0 %776
        %778 = vrot.lane.b32.xlu0 %v770, 126
        %v779 = vpop.permute.xlu0 %778
        %v783 = vadd.f32 %v703, %v775
        %v784 = vadd.f32 %v704, %v777
        %v785 = vadd.f32 %v705, %v779
        %s786 = sld [smem:[#allocation2 + $0x21]]
        %v787 = vstv %s786
        %v788 = vmul.f32 %v787, %v275
        %v789 = vmul.f32 %v787, %v276
        %v790 = vmul.f32 %v787, %v277
        %794 = vrot.lane.b32.xlu0 %v788, 126
        %v795 = vpop.permute.xlu0 %794
        %796 = vrot.lane.b32.xlu0 %v789, 126
        %v797 = vpop.permute.xlu0 %796
        %798 = vrot.lane.b32.xlu0 %v790, 126
        %v799 = vpop.permute.xlu0 %798
        %v803 = vadd.f32 %v723, %v795
        %v804 = vadd.f32 %v724, %v797
        %v805 = vadd.f32 %v725, %v799
        %s806 = sld [smem:[#allocation2 + $0x22]]
        %v807 = vstv %s806
        %v808 = vmul.f32 %v807, %v275
        %v809 = vmul.f32 %v807, %v276
        %v810 = vmul.f32 %v807, %v277
        %814 = vrot.lane.b32.xlu0 %v808, 126
        %v815 = vpop.permute.xlu0 %814
        %816 = vrot.lane.b32.xlu0 %v809, 126
        %v817 = vpop.permute.xlu0 %816
        %818 = vrot.lane.b32.xlu0 %v810, 126
        %v819 = vpop.permute.xlu0 %818
        %v823 = vadd.f32 %v743, %v815
        %v824 = vadd.f32 %v744, %v817
        %v825 = vadd.f32 %v745, %v819
        %s826 = sld [smem:[#allocation2 + $0x23]]
        %v827 = vstv %s826
        %v828 = vmul.f32 %v827, %v275
        %v829 = vmul.f32 %v827, %v276
        %v830 = vmul.f32 %v827, %v277
        %834 = vrot.lane.b32.xlu0 %v828, 126
        %v835 = vpop.permute.xlu0 %834
        %836 = vrot.lane.b32.xlu0 %v829, 126
        %v837 = vpop.permute.xlu0 %836
        %838 = vrot.lane.b32.xlu0 %v830, 126
        %v839 = vpop.permute.xlu0 %838
        %v843 = vadd.f32 %v763, %v835
        %v844 = vadd.f32 %v764, %v837
        %v845 = vadd.f32 %v765, %v839
        %s846 = sld [smem:[#allocation2 + $0x24]]
        %v847 = vstv %s846
        %v848 = vmul.f32 %v847, %v278
        %v849 = vmul.f32 %v847, %v279
        %v850 = vmul.f32 %v847, %v280
        %854 = vrot.lane.b32.xlu0 %v848, 126
        %v855 = vpop.permute.xlu0 %854
        %856 = vrot.lane.b32.xlu0 %v849, 126
        %v857 = vpop.permute.xlu0 %856
        %858 = vrot.lane.b32.xlu0 %v850, 126
        %v859 = vpop.permute.xlu0 %858
        %v863 = vadd.f32 %v783, %v855
        %v864 = vadd.f32 %v784, %v857
        %v865 = vadd.f32 %v785, %v859
        %s866 = sld [smem:[#allocation2 + $0x25]]
        %v867 = vstv %s866
        %v868 = vmul.f32 %v867, %v278
        %v869 = vmul.f32 %v867, %v279
        %v870 = vmul.f32 %v867, %v280
        %874 = vrot.lane.b32.xlu0 %v868, 126
        %v875 = vpop.permute.xlu0 %874
        %876 = vrot.lane.b32.xlu0 %v869, 126
        %v877 = vpop.permute.xlu0 %876
        %878 = vrot.lane.b32.xlu0 %v870, 126
        %v879 = vpop.permute.xlu0 %878
        %v883 = vadd.f32 %v803, %v875
        %v884 = vadd.f32 %v804, %v877
        %v885 = vadd.f32 %v805, %v879
        %s886 = sld [smem:[#allocation2 + $0x26]]
        %v887 = vstv %s886
        %v888 = vmul.f32 %v887, %v278
        %v889 = vmul.f32 %v887, %v279
        %v890 = vmul.f32 %v887, %v280
        %894 = vrot.lane.b32.xlu0 %v888, 126
        %v895 = vpop.permute.xlu0 %894
        %896 = vrot.lane.b32.xlu0 %v889, 126
        %v897 = vpop.permute.xlu0 %896
        %898 = vrot.lane.b32.xlu0 %v890, 126
        %v899 = vpop.permute.xlu0 %898
        %v903 = vadd.f32 %v823, %v895
        %v904 = vadd.f32 %v824, %v897
        %v905 = vadd.f32 %v825, %v899
        %s906 = sld [smem:[#allocation2 + $0x27]]
        %v907 = vstv %s906
        %v908 = vmul.f32 %v907, %v278
        %v909 = vmul.f32 %v907, %v279
        %v910 = vmul.f32 %v907, %v280
        %914 = vrot.lane.b32.xlu0 %v908, 126
        %v915 = vpop.permute.xlu0 %914
        %916 = vrot.lane.b32.xlu0 %v909, 126
        %v917 = vpop.permute.xlu0 %916
        %918 = vrot.lane.b32.xlu0 %v910, 126
        %v919 = vpop.permute.xlu0 %918
        %v923 = vadd.f32 %v843, %v915
        %v924 = vadd.f32 %v844, %v917
        %v925 = vadd.f32 %v845, %v919
        %s926 = sld [smem:[#allocation2 + $0x28]]
        %v927 = vstv %s926
        %v928 = vmul.f32 %v927, %v281
        %v929 = vmul.f32 %v927, %v282
        %v930 = vmul.f32 %v927, %v283
        %934 = vrot.lane.b32.xlu0 %v928, 126
        %v935 = vpop.permute.xlu0 %934
        %936 = vrot.lane.b32.xlu0 %v929, 126
        %v937 = vpop.permute.xlu0 %936
        %938 = vrot.lane.b32.xlu0 %v930, 126
        %v939 = vpop.permute.xlu0 %938
        %v943 = vadd.f32 %v863, %v935
        %v944 = vadd.f32 %v864, %v937
        %v945 = vadd.f32 %v865, %v939
        %s946 = sld [smem:[#allocation2 + $0x29]]
        %v947 = vstv %s946
        %v948 = vmul.f32 %v947, %v281
        %v949 = vmul.f32 %v947, %v282
        %v950 = vmul.f32 %v947, %v283
        %954 = vrot.lane.b32.xlu0 %v948, 126
        %v955 = vpop.permute.xlu0 %954
        %956 = vrot.lane.b32.xlu0 %v949, 126
        %v957 = vpop.permute.xlu0 %956
        %958 = vrot.lane.b32.xlu0 %v950, 126
        %v959 = vpop.permute.xlu0 %958
        %v963 = vadd.f32 %v883, %v955
        %v964 = vadd.f32 %v884, %v957
        %v965 = vadd.f32 %v885, %v959
        %s966 = sld [smem:[#allocation2 + $0x2a]]
        %v967 = vstv %s966
        %v968 = vmul.f32 %v967, %v281
        %v969 = vmul.f32 %v967, %v282
        %v970 = vmul.f32 %v967, %v283
        %974 = vrot.lane.b32.xlu0 %v968, 126
        %v975 = vpop.permute.xlu0 %974
        %976 = vrot.lane.b32.xlu0 %v969, 126
        %v977 = vpop.permute.xlu0 %976
        %978 = vrot.lane.b32.xlu0 %v970, 126
        %v979 = vpop.permute.xlu0 %978
        %v983 = vadd.f32 %v903, %v975
        %v984 = vadd.f32 %v904, %v977
        %v985 = vadd.f32 %v905, %v979
        %s986 = sld [smem:[#allocation2 + $0x2b]]
        %v987 = vstv %s986
        %v988 = vmul.f32 %v987, %v281
        %v989 = vmul.f32 %v987, %v282
        %v990 = vmul.f32 %v987, %v283
        %994 = vrot.lane.b32.xlu0 %v988, 126
        %v995 = vpop.permute.xlu0 %994
        %996 = vrot.lane.b32.xlu0 %v989, 126
        %v997 = vpop.permute.xlu0 %996
        %998 = vrot.lane.b32.xlu0 %v990, 126
        %v999 = vpop.permute.xlu0 %998
        %v1003 = vadd.f32 %v923, %v995
        %v1004 = vadd.f32 %v924, %v997
        %v1005 = vadd.f32 %v925, %v999
        %s1006 = sld [smem:[#allocation2 + $0x2c]]
        %v1007 = vstv %s1006
        %v1008 = vmul.f32 %v1007, %v284
        %v1009 = vmul.f32 %v1007, %v285
        %v1010 = vmul.f32 %v1007, %v286
        %1014 = vrot.lane.b32.xlu0 %v1008, 126
        %v1015 = vpop.permute.xlu0 %1014
        %1016 = vrot.lane.b32.xlu0 %v1009, 126
        %v1017 = vpop.permute.xlu0 %1016
        %1018 = vrot.lane.b32.xlu0 %v1010, 126
        %v1019 = vpop.permute.xlu0 %1018
        %v1023 = vadd.f32 %v943, %v1015
        %v1024 = vadd.f32 %v944, %v1017
        %v1025 = vadd.f32 %v945, %v1019
        %s1026 = sld [smem:[#allocation2 + $0x2d]]
        %v1027 = vstv %s1026
        %v1028 = vmul.f32 %v1027, %v284
        %v1029 = vmul.f32 %v1027, %v285
        %v1030 = vmul.f32 %v1027, %v286
        %1034 = vrot.lane.b32.xlu0 %v1028, 126
        %v1035 = vpop.permute.xlu0 %1034
        %1036 = vrot.lane.b32.xlu0 %v1029, 126
        %v1037 = vpop.permute.xlu0 %1036
        %1038 = vrot.lane.b32.xlu0 %v1030, 126
        %v1039 = vpop.permute.xlu0 %1038
        %v1043 = vadd.f32 %v963, %v1035
        %v1044 = vadd.f32 %v964, %v1037
        %v1045 = vadd.f32 %v965, %v1039
        %s1046 = sld [smem:[#allocation2 + $0x2e]]
        %v1047 = vstv %s1046
        %v1048 = vmul.f32 %v1047, %v284
        %v1049 = vmul.f32 %v1047, %v285
        %v1050 = vmul.f32 %v1047, %v286
        %1054 = vrot.lane.b32.xlu0 %v1048, 126
        %v1055 = vpop.permute.xlu0 %1054
        %1056 = vrot.lane.b32.xlu0 %v1049, 126
        %v1057 = vpop.permute.xlu0 %1056
        %1058 = vrot.lane.b32.xlu0 %v1050, 126
        %v1059 = vpop.permute.xlu0 %1058
        %v1063 = vadd.f32 %v983, %v1055
        %v1064 = vadd.f32 %v984, %v1057
        %v1065 = vadd.f32 %v985, %v1059
        %s1066 = sld [smem:[#allocation2 + $0x2f]]
        %v1067 = vstv %s1066
        %v1068 = vmul.f32 %v1067, %v284
        %v1069 = vmul.f32 %v1067, %v285
        %v1070 = vmul.f32 %v1067, %v286
        %1074 = vrot.lane.b32.xlu0 %v1068, 126
        %v1075 = vpop.permute.xlu0 %1074
        %1076 = vrot.lane.b32.xlu0 %v1069, 126
        %v1077 = vpop.permute.xlu0 %1076
        %1078 = vrot.lane.b32.xlu0 %v1070, 126
        %v1079 = vpop.permute.xlu0 %1078
        %v1083 = vadd.f32 %v1003, %v1075
        %v1084 = vadd.f32 %v1004, %v1077
        %v1085 = vadd.f32 %v1005, %v1079
        %s1086 = sld [smem:[#allocation2 + $0x30]]
        %v1087 = vstv %s1086
        %v1088 = vmul.f32 %v1087, %v275
        %v1089 = vmul.f32 %v1087, %v276
        %v1090 = vmul.f32 %v1087, %v277
        %vm1094 = vcmask 1046528
        %v1095 = vrot.slane %v1088, 1
        %v1096 = vrot.slane %v1089, 1
        %v1097 = vsel %vm1094, %v1095, %v1096
        %v1098 = vrot.slane %v1090, 1
        %v1099 = vsel %vm1094, %v1096, %v1098
        %v1103 = vadd.f32 %v1023, %v1097
        %v1104 = vadd.f32 %v1024, %v1099
        %v1105 = vadd.f32 %v1025, %v1098
        %s1106 = sld [smem:[#allocation2 + $0x31]]
        %v1107 = vstv %s1106
        %v1108 = vmul.f32 %v1107, %v275
        %v1109 = vmul.f32 %v1107, %v276
        %v1110 = vmul.f32 %v1107, %v277
        %v1114 = vrot.slane %v1108, 1
        %v1115 = vrot.slane %v1109, 1
        %v1116 = vsel %vm1094, %v1114, %v1115
        %v1117 = vrot.slane %v1110, 1
        %v1118 = vsel %vm1094, %v1115, %v1117
        %v1122 = vadd.f32 %v1043, %v1116
        %v1123 = vadd.f32 %v1044, %v1118
        %v1124 = vadd.f32 %v1045, %v1117
        %s1125 = sld [smem:[#allocation2 + $0x32]]
        %v1126 = vstv %s1125
        %v1127 = vmul.f32 %v1126, %v275
        %v1128 = vmul.f32 %v1126, %v276
        %v1129 = vmul.f32 %v1126, %v277
        %v1133 = vrot.slane %v1127, 1
        %v1134 = vrot.slane %v1128, 1
        %v1135 = vsel %vm1094, %v1133, %v1134
        %v1136 = vrot.slane %v1129, 1
        %v1137 = vsel %vm1094, %v1134, %v1136
        %v1141 = vadd.f32 %v1063, %v1135
        %v1142 = vadd.f32 %v1064, %v1137
        %v1143 = vadd.f32 %v1065, %v1136
        %s1144 = sld [smem:[#allocation2 + $0x33]]
        %v1145 = vstv %s1144
        %v1146 = vmul.f32 %v1145, %v275
        %v1147 = vmul.f32 %v1145, %v276
        %v1148 = vmul.f32 %v1145, %v277
        %v1152 = vrot.slane %v1146, 1
        %v1153 = vrot.slane %v1147, 1
        %v1154 = vsel %vm1094, %v1152, %v1153
        %v1155 = vrot.slane %v1148, 1
        %v1156 = vsel %vm1094, %v1153, %v1155
        %v1160 = vadd.f32 %v1083, %v1154
        %v1161 = vadd.f32 %v1084, %v1156
        %v1162 = vadd.f32 %v1085, %v1155
        %s1163 = sld [smem:[#allocation2 + $0x34]]
        %v1164 = vstv %s1163
        %v1165 = vmul.f32 %v1164, %v278
        %v1166 = vmul.f32 %v1164, %v279
        %v1167 = vmul.f32 %v1164, %v280
        %v1171 = vrot.slane %v1165, 1
        %v1172 = vrot.slane %v1166, 1
        %v1173 = vsel %vm1094, %v1171, %v1172
        %v1174 = vrot.slane %v1167, 1
        %v1175 = vsel %vm1094, %v1172, %v1174
        %v1179 = vadd.f32 %v1103, %v1173
        %v1180 = vadd.f32 %v1104, %v1175
        %v1181 = vadd.f32 %v1105, %v1174
        %s1182 = sld [smem:[#allocation2 + $0x35]]
        %v1183 = vstv %s1182
        %v1184 = vmul.f32 %v1183, %v278
        %v1185 = vmul.f32 %v1183, %v279
        %v1186 = vmul.f32 %v1183, %v280
        %v1190 = vrot.slane %v1184, 1
        %v1191 = vrot.slane %v1185, 1
        %v1192 = vsel %vm1094, %v1190, %v1191
        %v1193 = vrot.slane %v1186, 1
        %v1194 = vsel %vm1094, %v1191, %v1193
        %v1198 = vadd.f32 %v1122, %v1192
        %v1199 = vadd.f32 %v1123, %v1194
        %v1200 = vadd.f32 %v1124, %v1193
        %s1201 = sld [smem:[#allocation2 + $0x36]]
        %v1202 = vstv %s1201
        %v1203 = vmul.f32 %v1202, %v278
        %v1204 = vmul.f32 %v1202, %v279
        %v1205 = vmul.f32 %v1202, %v280
        %v1209 = vrot.slane %v1203, 1
        %v1210 = vrot.slane %v1204, 1
        %v1211 = vsel %vm1094, %v1209, %v1210
        %v1212 = vrot.slane %v1205, 1
        %v1213 = vsel %vm1094, %v1210, %v1212
        %v1217 = vadd.f32 %v1141, %v1211
        %v1218 = vadd.f32 %v1142, %v1213
        %v1219 = vadd.f32 %v1143, %v1212
        %s1220 = sld [smem:[#allocation2 + $0x37]]
        %v1221 = vstv %s1220
        %v1222 = vmul.f32 %v1221, %v278
        %v1223 = vmul.f32 %v1221, %v279
        %v1224 = vmul.f32 %v1221, %v280
        %v1228 = vrot.slane %v1222, 1
        %v1229 = vrot.slane %v1223, 1
        %v1230 = vsel %vm1094, %v1228, %v1229
        %v1231 = vrot.slane %v1224, 1
        %v1232 = vsel %vm1094, %v1229, %v1231
        %v1236 = vadd.f32 %v1160, %v1230
        %v1237 = vadd.f32 %v1161, %v1232
        %v1238 = vadd.f32 %v1162, %v1231
        %s1239 = sld [smem:[#allocation2 + $0x38]]
        %v1240 = vstv %s1239
        %v1241 = vmul.f32 %v1240, %v281
        %v1242 = vmul.f32 %v1240, %v282
        %v1243 = vmul.f32 %v1240, %v283
        %v1247 = vrot.slane %v1241, 1
        %v1248 = vrot.slane %v1242, 1
        %v1249 = vsel %vm1094, %v1247, %v1248
        %v1250 = vrot.slane %v1243, 1
        %v1251 = vsel %vm1094, %v1248, %v1250
        %v1255 = vadd.f32 %v1179, %v1249
        %v1256 = vadd.f32 %v1180, %v1251
        %v1257 = vadd.f32 %v1181, %v1250
        %s1258 = sld [smem:[#allocation2 + $0x39]]
        %v1259 = vstv %s1258
        %v1260 = vmul.f32 %v1259, %v281
        %v1261 = vmul.f32 %v1259, %v282
        %v1262 = vmul.f32 %v1259, %v283
        %v1266 = vrot.slane %v1260, 1
        %v1267 = vrot.slane %v1261, 1
        %v1268 = vsel %vm1094, %v1266, %v1267
        %v1269 = vrot.slane %v1262, 1
        %v1270 = vsel %vm1094, %v1267, %v1269
        %v1274 = vadd.f32 %v1198, %v1268
        %v1275 = vadd.f32 %v1199, %v1270
        %v1276 = vadd.f32 %v1200, %v1269
        %s1277 = sld [smem:[#allocation2 + $0x3a]]
        %v1278 = vstv %s1277
        %v1279 = vmul.f32 %v1278, %v281
        %v1280 = vmul.f32 %v1278, %v282
        %v1281 = vmul.f32 %v1278, %v283
        %v1285 = vrot.slane %v1279, 1
        %v1286 = vrot.slane %v1280, 1
        %v1287 = vsel %vm1094, %v1285, %v1286
        %v1288 = vrot.slane %v1281, 1
        %v1289 = vsel %vm1094, %v1286, %v1288
        %v1293 = vadd.f32 %v1217, %v1287
        %v1294 = vadd.f32 %v1218, %v1289
        %v1295 = vadd.f32 %v1219, %v1288
        %s1296 = sld [smem:[#allocation2 + $0x3b]]
        %v1297 = vstv %s1296
        %v1298 = vmul.f32 %v1297, %v281
        %v1299 = vmul.f32 %v1297, %v282
        %v1300 = vmul.f32 %v1297, %v283
        %v1304 = vrot.slane %v1298, 1
        %v1305 = vrot.slane %v1299, 1
        %v1306 = vsel %vm1094, %v1304, %v1305
        %v1307 = vrot.slane %v1300, 1
        %v1308 = vsel %vm1094, %v1305, %v1307
        %v1312 = vadd.f32 %v1236, %v1306
        %v1313 = vadd.f32 %v1237, %v1308
        %v1314 = vadd.f32 %v1238, %v1307
        %s1315 = sld [smem:[#allocation2 + $0x3c]]
        %v1316 = vstv %s1315
        %v1317 = vmul.f32 %v1316, %v284
        %v1318 = vmul.f32 %v1316, %v285
        %v1319 = vmul.f32 %v1316, %v286
        %v1323 = vrot.slane %v1317, 1
        %v1324 = vrot.slane %v1318, 1
        %v1325 = vsel %vm1094, %v1323, %v1324
        %v1326 = vrot.slane %v1319, 1
        %v1327 = vsel %vm1094, %v1324, %v1326
        %v1331 = vadd.f32 %v1255, %v1325
        %v1332 = vadd.f32 %v1256, %v1327
        %v1333 = vadd.f32 %v1257, %v1326
        %s1334 = sld [smem:[#allocation2 + $0x3d]]
        %v1335 = vstv %s1334
        %v1336 = vmul.f32 %v1335, %v284
        %v1337 = vmul.f32 %v1335, %v285
        %v1338 = vmul.f32 %v1335, %v286
        %v1342 = vrot.slane %v1336, 1
        %v1343 = vrot.slane %v1337, 1
        %v1344 = vsel %vm1094, %v1342, %v1343
        %v1345 = vrot.slane %v1338, 1
        %v1346 = vsel %vm1094, %v1343, %v1345
        %v1350 = vadd.f32 %v1274, %v1344
        %v1351 = vadd.f32 %v1275, %v1346
        %v1352 = vadd.f32 %v1276, %v1345
        %s1353 = sld [smem:[#allocation2 + $0x3e]]
        %v1354 = vstv %s1353
        %v1355 = vmul.f32 %v1354, %v284
        %v1356 = vmul.f32 %v1354, %v285
        %v1357 = vmul.f32 %v1354, %v286
        %v1361 = vrot.slane %v1355, 1
        %v1362 = vrot.slane %v1356, 1
        %v1363 = vsel %vm1094, %v1361, %v1362
        %v1364 = vrot.slane %v1357, 1
        %v1365 = vsel %vm1094, %v1362, %v1364
        %v1369 = vadd.f32 %v1293, %v1363
        %v1370 = vadd.f32 %v1294, %v1365
        %v1371 = vadd.f32 %v1295, %v1364
        %s1372 = sld [smem:[#allocation2 + $0x3f]]
        %v1373 = vstv %s1372
        %v1374 = vmul.f32 %v1373, %v284
        %v1375 = vmul.f32 %v1373, %v285
        %v1376 = vmul.f32 %v1373, %v286
        %v1380 = vrot.slane %v1374, 1
        %v1381 = vrot.slane %v1375, 1
        %v1382 = vsel %vm1094, %v1380, %v1381
        %v1383 = vrot.slane %v1376, 1
        %v1384 = vsel %vm1094, %v1381, %v1383
        %v1388 = vadd.f32 %v1312, %v1382
        %v1389 = vadd.f32 %v1313, %v1384
        %v1390 = vadd.f32 %v1314, %v1383
        %s1391 = sld [smem:[#allocation2 + $0x40]]
        %v1392 = vstv %s1391
        %v1393 = vmul.f32 %v1392, %v275
        %v1394 = vmul.f32 %v1392, %v276
        %v1395 = vmul.f32 %v1392, %v277
        %v1399 = vrot.slane %v1393, 1
        %v1400 = vrot.slane %v1394, 1
        %v1401 = vsel %vm1094, %v1399, %v1400
        %v1402 = vrot.slane %v1395, 1
        %v1403 = vsel %vm1094, %v1400, %v1402
        %1404 = vrot.lane.b32.xlu0 %v1401, 127
        %v1405 = vpop.permute.xlu0 %1404
        %1406 = vrot.lane.b32.xlu0 %v1403, 127
        %v1407 = vpop.permute.xlu0 %1406
        %1408 = vrot.lane.b32.xlu0 %v1402, 127
        %v1409 = vpop.permute.xlu0 %1408
        %v1413 = vadd.f32 %v1331, %v1405
        %v1414 = vadd.f32 %v1332, %v1407
        %v1415 = vadd.f32 %v1333, %v1409
        %s1416 = sld [smem:[#allocation2 + $0x41]]
        %v1417 = vstv %s1416
        %v1418 = vmul.f32 %v1417, %v275
        %v1419 = vmul.f32 %v1417, %v276
        %v1420 = vmul.f32 %v1417, %v277
        %v1424 = vrot.slane %v1418, 1
        %v1425 = vrot.slane %v1419, 1
        %v1426 = vsel %vm1094, %v1424, %v1425
        %v1427 = vrot.slane %v1420, 1
        %v1428 = vsel %vm1094, %v1425, %v1427
        %1429 = vrot.lane.b32.xlu0 %v1426, 127
        %v1430 = vpop.permute.xlu0 %1429
        %1431 = vrot.lane.b32.xlu0 %v1428, 127
        %v1432 = vpop.permute.xlu0 %1431
        %1433 = vrot.lane.b32.xlu0 %v1427, 127
        %v1434 = vpop.permute.xlu0 %1433
        %v1438 = vadd.f32 %v1350, %v1430
        %v1439 = vadd.f32 %v1351, %v1432
        %v1440 = vadd.f32 %v1352, %v1434
        %s1441 = sld [smem:[#allocation2 + $0x42]]
        %v1442 = vstv %s1441
        %v1443 = vmul.f32 %v1442, %v275
        %v1444 = vmul.f32 %v1442, %v276
        %v1445 = vmul.f32 %v1442, %v277
        %v1449 = vrot.slane %v1443, 1
        %v1450 = vrot.slane %v1444, 1
        %v1451 = vsel %vm1094, %v1449, %v1450
        %v1452 = vrot.slane %v1445, 1
        %v1453 = vsel %vm1094, %v1450, %v1452
        %1454 = vrot.lane.b32.xlu0 %v1451, 127
        %v1455 = vpop.permute.xlu0 %1454
        %1456 = vrot.lane.b32.xlu0 %v1453, 127
        %v1457 = vpop.permute.xlu0 %1456
        %1458 = vrot.lane.b32.xlu0 %v1452, 127
        %v1459 = vpop.permute.xlu0 %1458
        %v1463 = vadd.f32 %v1369, %v1455
        %v1464 = vadd.f32 %v1370, %v1457
        %v1465 = vadd.f32 %v1371, %v1459
        %s1466 = sld [smem:[#allocation2 + $0x43]]
        %v1467 = vstv %s1466
        %v1468 = vmul.f32 %v1467, %v275
        %v1469 = vmul.f32 %v1467, %v276
        %v1470 = vmul.f32 %v1467, %v277
        %v1474 = vrot.slane %v1468, 1
        %v1475 = vrot.slane %v1469, 1
        %v1476 = vsel %vm1094, %v1474, %v1475
        %v1477 = vrot.slane %v1470, 1
        %v1478 = vsel %vm1094, %v1475, %v1477
        %1479 = vrot.lane.b32.xlu0 %v1476, 127
        %v1480 = vpop.permute.xlu0 %1479
        %1481 = vrot.lane.b32.xlu0 %v1478, 127
        %v1482 = vpop.permute.xlu0 %1481
        %1483 = vrot.lane.b32.xlu0 %v1477, 127
        %v1484 = vpop.permute.xlu0 %1483
        %v1488 = vadd.f32 %v1388, %v1480
        %v1489 = vadd.f32 %v1389, %v1482
        %v1490 = vadd.f32 %v1390, %v1484
        %s1491 = sld [smem:[#allocation2 + $0x44]]
        %v1492 = vstv %s1491
        %v1493 = vmul.f32 %v1492, %v278
        %v1494 = vmul.f32 %v1492, %v279
        %v1495 = vmul.f32 %v1492, %v280
        %v1499 = vrot.slane %v1493, 1
        %v1500 = vrot.slane %v1494, 1
        %v1501 = vsel %vm1094, %v1499, %v1500
        %v1502 = vrot.slane %v1495, 1
        %v1503 = vsel %vm1094, %v1500, %v1502
        %1504 = vrot.lane.b32.xlu0 %v1501, 127
        %v1505 = vpop.permute.xlu0 %1504
        %1506 = vrot.lane.b32.xlu0 %v1503, 127
        %v1507 = vpop.permute.xlu0 %1506
        %1508 = vrot.lane.b32.xlu0 %v1502, 127
        %v1509 = vpop.permute.xlu0 %1508
        %v1513 = vadd.f32 %v1413, %v1505
        %v1514 = vadd.f32 %v1414, %v1507
        %v1515 = vadd.f32 %v1415, %v1509
        %s1516 = sld [smem:[#allocation2 + $0x45]]
        %v1517 = vstv %s1516
        %v1518 = vmul.f32 %v1517, %v278
        %v1519 = vmul.f32 %v1517, %v279
        %v1520 = vmul.f32 %v1517, %v280
        %v1524 = vrot.slane %v1518, 1
        %v1525 = vrot.slane %v1519, 1
        %v1526 = vsel %vm1094, %v1524, %v1525
        %v1527 = vrot.slane %v1520, 1
        %v1528 = vsel %vm1094, %v1525, %v1527
        %1529 = vrot.lane.b32.xlu0 %v1526, 127
        %v1530 = vpop.permute.xlu0 %1529
        %1531 = vrot.lane.b32.xlu0 %v1528, 127
        %v1532 = vpop.permute.xlu0 %1531
        %1533 = vrot.lane.b32.xlu0 %v1527, 127
        %v1534 = vpop.permute.xlu0 %1533
        %v1538 = vadd.f32 %v1438, %v1530
        %v1539 = vadd.f32 %v1439, %v1532
        %v1540 = vadd.f32 %v1440, %v1534
        %s1541 = sld [smem:[#allocation2 + $0x46]]
        %v1542 = vstv %s1541
        %v1543 = vmul.f32 %v1542, %v278
        %v1544 = vmul.f32 %v1542, %v279
        %v1545 = vmul.f32 %v1542, %v280
        %v1549 = vrot.slane %v1543, 1
        %v1550 = vrot.slane %v1544, 1
        %v1551 = vsel %vm1094, %v1549, %v1550
        %v1552 = vrot.slane %v1545, 1
        %v1553 = vsel %vm1094, %v1550, %v1552
        %1554 = vrot.lane.b32.xlu0 %v1551, 127
        %v1555 = vpop.permute.xlu0 %1554
        %1556 = vrot.lane.b32.xlu0 %v1553, 127
        %v1557 = vpop.permute.xlu0 %1556
        %1558 = vrot.lane.b32.xlu0 %v1552, 127
        %v1559 = vpop.permute.xlu0 %1558
        %v1563 = vadd.f32 %v1463, %v1555
        %v1564 = vadd.f32 %v1464, %v1557
        %v1565 = vadd.f32 %v1465, %v1559
        %s1566 = sld [smem:[#allocation2 + $0x47]]
        %v1567 = vstv %s1566
        %v1568 = vmul.f32 %v1567, %v278
        %v1569 = vmul.f32 %v1567, %v279
        %v1570 = vmul.f32 %v1567, %v280
        %v1574 = vrot.slane %v1568, 1
        %v1575 = vrot.slane %v1569, 1
        %v1576 = vsel %vm1094, %v1574, %v1575
        %v1577 = vrot.slane %v1570, 1
        %v1578 = vsel %vm1094, %v1575, %v1577
        %1579 = vrot.lane.b32.xlu0 %v1576, 127
        %v1580 = vpop.permute.xlu0 %1579
        %1581 = vrot.lane.b32.xlu0 %v1578, 127
        %v1582 = vpop.permute.xlu0 %1581
        %1583 = vrot.lane.b32.xlu0 %v1577, 127
        %v1584 = vpop.permute.xlu0 %1583
        %v1588 = vadd.f32 %v1488, %v1580
        %v1589 = vadd.f32 %v1489, %v1582
        %v1590 = vadd.f32 %v1490, %v1584
        %s1591 = sld [smem:[#allocation2 + $0x48]]
        %v1592 = vstv %s1591
        %v1593 = vmul.f32 %v1592, %v281
        %v1594 = vmul.f32 %v1592, %v282
        %v1595 = vmul.f32 %v1592, %v283
        %v1599 = vrot.slane %v1593, 1
        %v1600 = vrot.slane %v1594, 1
        %v1601 = vsel %vm1094, %v1599, %v1600
        %v1602 = vrot.slane %v1595, 1
        %v1603 = vsel %vm1094, %v1600, %v1602
        %1604 = vrot.lane.b32.xlu0 %v1601, 127
        %v1605 = vpop.permute.xlu0 %1604
        %1606 = vrot.lane.b32.xlu0 %v1603, 127
        %v1607 = vpop.permute.xlu0 %1606
        %1608 = vrot.lane.b32.xlu0 %v1602, 127
        %v1609 = vpop.permute.xlu0 %1608
        %v1613 = vadd.f32 %v1513, %v1605
        %v1614 = vadd.f32 %v1514, %v1607
        %v1615 = vadd.f32 %v1515, %v1609
        %s1616 = sld [smem:[#allocation2 + $0x49]]
        %v1617 = vstv %s1616
        %v1618 = vmul.f32 %v1617, %v281
        %v1619 = vmul.f32 %v1617, %v282
        %v1620 = vmul.f32 %v1617, %v283
        %v1624 = vrot.slane %v1618, 1
        %v1625 = vrot.slane %v1619, 1
        %v1626 = vsel %vm1094, %v1624, %v1625
        %v1627 = vrot.slane %v1620, 1
        %v1628 = vsel %vm1094, %v1625, %v1627
        %1629 = vrot.lane.b32.xlu0 %v1626, 127
        %v1630 = vpop.permute.xlu0 %1629
        %1631 = vrot.lane.b32.xlu0 %v1628, 127
        %v1632 = vpop.permute.xlu0 %1631
        %1633 = vrot.lane.b32.xlu0 %v1627, 127
        %v1634 = vpop.permute.xlu0 %1633
        %v1638 = vadd.f32 %v1538, %v1630
        %v1639 = vadd.f32 %v1539, %v1632
        %v1640 = vadd.f32 %v1540, %v1634
        %s1641 = sld [smem:[#allocation2 + $0x4a]]
        %v1642 = vstv %s1641
        %v1643 = vmul.f32 %v1642, %v281
        %v1644 = vmul.f32 %v1642, %v282
        %v1645 = vmul.f32 %v1642, %v283
        %v1649 = vrot.slane %v1643, 1
        %v1650 = vrot.slane %v1644, 1
        %v1651 = vsel %vm1094, %v1649, %v1650
        %v1652 = vrot.slane %v1645, 1
        %v1653 = vsel %vm1094, %v1650, %v1652
        %1654 = vrot.lane.b32.xlu0 %v1651, 127
        %v1655 = vpop.permute.xlu0 %1654
        %1656 = vrot.lane.b32.xlu0 %v1653, 127
        %v1657 = vpop.permute.xlu0 %1656
        %1658 = vrot.lane.b32.xlu0 %v1652, 127
        %v1659 = vpop.permute.xlu0 %1658
        %v1663 = vadd.f32 %v1563, %v1655
        %v1664 = vadd.f32 %v1564, %v1657
        %v1665 = vadd.f32 %v1565, %v1659
        %s1666 = sld [smem:[#allocation2 + $0x4b]]
        %v1667 = vstv %s1666
        %v1668 = vmul.f32 %v1667, %v281
        %v1669 = vmul.f32 %v1667, %v282
        %v1670 = vmul.f32 %v1667, %v283
        %v1674 = vrot.slane %v1668, 1
        %v1675 = vrot.slane %v1669, 1
        %v1676 = vsel %vm1094, %v1674, %v1675
        %v1677 = vrot.slane %v1670, 1
        %v1678 = vsel %vm1094, %v1675, %v1677
        %1679 = vrot.lane.b32.xlu0 %v1676, 127
        %v1680 = vpop.permute.xlu0 %1679
        %1681 = vrot.lane.b32.xlu0 %v1678, 127
        %v1682 = vpop.permute.xlu0 %1681
        %1683 = vrot.lane.b32.xlu0 %v1677, 127
        %v1684 = vpop.permute.xlu0 %1683
        %v1688 = vadd.f32 %v1588, %v1680
        %v1689 = vadd.f32 %v1589, %v1682
        %v1690 = vadd.f32 %v1590, %v1684
        %s1691 = sld [smem:[#allocation2 + $0x4c]]
        %v1692 = vstv %s1691
        %v1693 = vmul.f32 %v1692, %v284
        %v1694 = vmul.f32 %v1692, %v285
        %v1695 = vmul.f32 %v1692, %v286
        %v1699 = vrot.slane %v1693, 1
        %v1700 = vrot.slane %v1694, 1
        %v1701 = vsel %vm1094, %v1699, %v1700
        %v1702 = vrot.slane %v1695, 1
        %v1703 = vsel %vm1094, %v1700, %v1702
        %1704 = vrot.lane.b32.xlu0 %v1701, 127
        %v1705 = vpop.permute.xlu0 %1704
        %1706 = vrot.lane.b32.xlu0 %v1703, 127
        %v1707 = vpop.permute.xlu0 %1706
        %1708 = vrot.lane.b32.xlu0 %v1702, 127
        %v1709 = vpop.permute.xlu0 %1708
        %v1713 = vadd.f32 %v1613, %v1705
        %v1714 = vadd.f32 %v1614, %v1707
        %v1715 = vadd.f32 %v1615, %v1709
        %s1716 = sld [smem:[#allocation2 + $0x4d]]
        %v1717 = vstv %s1716
        %v1718 = vmul.f32 %v1717, %v284
        %v1719 = vmul.f32 %v1717, %v285
        %v1720 = vmul.f32 %v1717, %v286
        %v1724 = vrot.slane %v1718, 1
        %v1725 = vrot.slane %v1719, 1
        %v1726 = vsel %vm1094, %v1724, %v1725
        %v1727 = vrot.slane %v1720, 1
        %v1728 = vsel %vm1094, %v1725, %v1727
        %1729 = vrot.lane.b32.xlu0 %v1726, 127
        %v1730 = vpop.permute.xlu0 %1729
        %1731 = vrot.lane.b32.xlu0 %v1728, 127
        %v1732 = vpop.permute.xlu0 %1731
        %1733 = vrot.lane.b32.xlu0 %v1727, 127
        %v1734 = vpop.permute.xlu0 %1733
        %v1738 = vadd.f32 %v1638, %v1730
        %v1739 = vadd.f32 %v1639, %v1732
        %v1740 = vadd.f32 %v1640, %v1734
        %s1741 = sld [smem:[#allocation2 + $0x4e]]
        %v1742 = vstv %s1741
        %v1743 = vmul.f32 %v1742, %v284
        %v1744 = vmul.f32 %v1742, %v285
        %v1745 = vmul.f32 %v1742, %v286
        %v1749 = vrot.slane %v1743, 1
        %v1750 = vrot.slane %v1744, 1
        %v1751 = vsel %vm1094, %v1749, %v1750
        %v1752 = vrot.slane %v1745, 1
        %v1753 = vsel %vm1094, %v1750, %v1752
        %1754 = vrot.lane.b32.xlu0 %v1751, 127
        %v1755 = vpop.permute.xlu0 %1754
        %1756 = vrot.lane.b32.xlu0 %v1753, 127
        %v1757 = vpop.permute.xlu0 %1756
        %1758 = vrot.lane.b32.xlu0 %v1752, 127
        %v1759 = vpop.permute.xlu0 %1758
        %v1763 = vadd.f32 %v1663, %v1755
        %v1764 = vadd.f32 %v1664, %v1757
        %v1765 = vadd.f32 %v1665, %v1759
        %s1766 = sld [smem:[#allocation2 + $0x4f]]
        %v1767 = vstv %s1766
        %v1768 = vmul.f32 %v1767, %v284
        %v1769 = vmul.f32 %v1767, %v285
        %v1770 = vmul.f32 %v1767, %v286
        %v1774 = vrot.slane %v1768, 1
        %v1775 = vrot.slane %v1769, 1
        %v1776 = vsel %vm1094, %v1774, %v1775
        %v1777 = vrot.slane %v1770, 1
        %v1778 = vsel %vm1094, %v1775, %v1777
        %1779 = vrot.lane.b32.xlu0 %v1776, 127
        %v1780 = vpop.permute.xlu0 %1779
        %1781 = vrot.lane.b32.xlu0 %v1778, 127
        %v1782 = vpop.permute.xlu0 %1781
        %1783 = vrot.lane.b32.xlu0 %v1777, 127
        %v1784 = vpop.permute.xlu0 %1783
        %v1788 = vadd.f32 %v1688, %v1780
        %v1789 = vadd.f32 %v1689, %v1782
        %v1790 = vadd.f32 %v1690, %v1784
        %s1791 = sld [smem:[#allocation2 + $0x50]]
        %v1792 = vstv %s1791
        %v1793 = vmul.f32 %v1792, %v275
        %v1794 = vmul.f32 %v1792, %v276
        %v1795 = vmul.f32 %v1792, %v277
        %v1799 = vrot.slane %v1793, 1
        %v1800 = vrot.slane %v1794, 1
        %v1801 = vsel %vm1094, %v1799, %v1800
        %v1802 = vrot.slane %v1795, 1
        %v1803 = vsel %vm1094, %v1800, %v1802
        %1804 = vrot.lane.b32.xlu0 %v1801, 126
        %v1805 = vpop.permute.xlu0 %1804
        %1806 = vrot.lane.b32.xlu0 %v1803, 126
        %v1807 = vpop.permute.xlu0 %1806
        %1808 = vrot.lane.b32.xlu0 %v1802, 126
        %v1809 = vpop.permute.xlu0 %1808
        %v1813 = vadd.f32 %v1713, %v1805
        %v1814 = vadd.f32 %v1714, %v1807
        %v1815 = vadd.f32 %v1715, %v1809
        %s1816 = sld [smem:[#allocation2 + $0x51]]
        %v1817 = vstv %s1816
        %v1818 = vmul.f32 %v1817, %v275
        %v1819 = vmul.f32 %v1817, %v276
        %v1820 = vmul.f32 %v1817, %v277
        %v1824 = vrot.slane %v1818, 1
        %v1825 = vrot.slane %v1819, 1
        %v1826 = vsel %vm1094, %v1824, %v1825
        %v1827 = vrot.slane %v1820, 1
        %v1828 = vsel %vm1094, %v1825, %v1827
        %1829 = vrot.lane.b32.xlu0 %v1826, 126
        %v1830 = vpop.permute.xlu0 %1829
        %1831 = vrot.lane.b32.xlu0 %v1828, 126
        %v1832 = vpop.permute.xlu0 %1831
        %1833 = vrot.lane.b32.xlu0 %v1827, 126
        %v1834 = vpop.permute.xlu0 %1833
        %v1838 = vadd.f32 %v1738, %v1830
        %v1839 = vadd.f32 %v1739, %v1832
        %v1840 = vadd.f32 %v1740, %v1834
        %s1841 = sld [smem:[#allocation2 + $0x52]]
        %v1842 = vstv %s1841
        %v1843 = vmul.f32 %v1842, %v275
        %v1844 = vmul.f32 %v1842, %v276
        %v1845 = vmul.f32 %v1842, %v277
        %v1849 = vrot.slane %v1843, 1
        %v1850 = vrot.slane %v1844, 1
        %v1851 = vsel %vm1094, %v1849, %v1850
        %v1852 = vrot.slane %v1845, 1
        %v1853 = vsel %vm1094, %v1850, %v1852
        %1854 = vrot.lane.b32.xlu0 %v1851, 126
        %v1855 = vpop.permute.xlu0 %1854
        %1856 = vrot.lane.b32.xlu0 %v1853, 126
        %v1857 = vpop.permute.xlu0 %1856
        %1858 = vrot.lane.b32.xlu0 %v1852, 126
        %v1859 = vpop.permute.xlu0 %1858
        %v1863 = vadd.f32 %v1763, %v1855
        %v1864 = vadd.f32 %v1764, %v1857
        %v1865 = vadd.f32 %v1765, %v1859
        %s1866 = sld [smem:[#allocation2 + $0x53]]
        %v1867 = vstv %s1866
        %v1868 = vmul.f32 %v1867, %v275
        %v1869 = vmul.f32 %v1867, %v276
        %v1870 = vmul.f32 %v1867, %v277
        %v1874 = vrot.slane %v1868, 1
        %v1875 = vrot.slane %v1869, 1
        %v1876 = vsel %vm1094, %v1874, %v1875
        %v1877 = vrot.slane %v1870, 1
        %v1878 = vsel %vm1094, %v1875, %v1877
        %1879 = vrot.lane.b32.xlu0 %v1876, 126
        %v1880 = vpop.permute.xlu0 %1879
        %1881 = vrot.lane.b32.xlu0 %v1878, 126
        %v1882 = vpop.permute.xlu0 %1881
        %1883 = vrot.lane.b32.xlu0 %v1877, 126
        %v1884 = vpop.permute.xlu0 %1883
        %v1888 = vadd.f32 %v1788, %v1880
        %v1889 = vadd.f32 %v1789, %v1882
        %v1890 = vadd.f32 %v1790, %v1884
        %s1891 = sld [smem:[#allocation2 + $0x54]]
        %v1892 = vstv %s1891
        %v1893 = vmul.f32 %v1892, %v278
        %v1894 = vmul.f32 %v1892, %v279
        %v1895 = vmul.f32 %v1892, %v280
        %v1899 = vrot.slane %v1893, 1
        %v1900 = vrot.slane %v1894, 1
        %v1901 = vsel %vm1094, %v1899, %v1900
        %v1902 = vrot.slane %v1895, 1
        %v1903 = vsel %vm1094, %v1900, %v1902
        %1904 = vrot.lane.b32.xlu0 %v1901, 126
        %v1905 = vpop.permute.xlu0 %1904
        %1906 = vrot.lane.b32.xlu0 %v1903, 126
        %v1907 = vpop.permute.xlu0 %1906
        %1908 = vrot.lane.b32.xlu0 %v1902, 126
        %v1909 = vpop.permute.xlu0 %1908
        %v1913 = vadd.f32 %v1813, %v1905
        %v1914 = vadd.f32 %v1814, %v1907
        %v1915 = vadd.f32 %v1815, %v1909
        %s1916 = sld [smem:[#allocation2 + $0x55]]
        %v1917 = vstv %s1916
        %v1918 = vmul.f32 %v1917, %v278
        %v1919 = vmul.f32 %v1917, %v279
        %v1920 = vmul.f32 %v1917, %v280
        %v1924 = vrot.slane %v1918, 1
        %v1925 = vrot.slane %v1919, 1
        %v1926 = vsel %vm1094, %v1924, %v1925
        %v1927 = vrot.slane %v1920, 1
        %v1928 = vsel %vm1094, %v1925, %v1927
        %1929 = vrot.lane.b32.xlu0 %v1926, 126
        %v1930 = vpop.permute.xlu0 %1929
        %1931 = vrot.lane.b32.xlu0 %v1928, 126
        %v1932 = vpop.permute.xlu0 %1931
        %1933 = vrot.lane.b32.xlu0 %v1927, 126
        %v1934 = vpop.permute.xlu0 %1933
        %v1938 = vadd.f32 %v1838, %v1930
        %v1939 = vadd.f32 %v1839, %v1932
        %v1940 = vadd.f32 %v1840, %v1934
        %s1941 = sld [smem:[#allocation2 + $0x56]]
        %v1942 = vstv %s1941
        %v1943 = vmul.f32 %v1942, %v278
        %v1944 = vmul.f32 %v1942, %v279
        %v1945 = vmul.f32 %v1942, %v280
        %v1949 = vrot.slane %v1943, 1
        %v1950 = vrot.slane %v1944, 1
        %v1951 = vsel %vm1094, %v1949, %v1950
        %v1952 = vrot.slane %v1945, 1
        %v1953 = vsel %vm1094, %v1950, %v1952
        %1954 = vrot.lane.b32.xlu0 %v1951, 126
        %v1955 = vpop.permute.xlu0 %1954
        %1956 = vrot.lane.b32.xlu0 %v1953, 126
        %v1957 = vpop.permute.xlu0 %1956
        %1958 = vrot.lane.b32.xlu0 %v1952, 126
        %v1959 = vpop.permute.xlu0 %1958
        %v1963 = vadd.f32 %v1863, %v1955
        %v1964 = vadd.f32 %v1864, %v1957
        %v1965 = vadd.f32 %v1865, %v1959
        %s1966 = sld [smem:[#allocation2 + $0x57]]
        %v1967 = vstv %s1966
        %v1968 = vmul.f32 %v1967, %v278
        %v1969 = vmul.f32 %v1967, %v279
        %v1970 = vmul.f32 %v1967, %v280
        %v1974 = vrot.slane %v1968, 1
        %v1975 = vrot.slane %v1969, 1
        %v1976 = vsel %vm1094, %v1974, %v1975
        %v1977 = vrot.slane %v1970, 1
        %v1978 = vsel %vm1094, %v1975, %v1977
        %1979 = vrot.lane.b32.xlu0 %v1976, 126
        %v1980 = vpop.permute.xlu0 %1979
        %1981 = vrot.lane.b32.xlu0 %v1978, 126
        %v1982 = vpop.permute.xlu0 %1981
        %1983 = vrot.lane.b32.xlu0 %v1977, 126
        %v1984 = vpop.permute.xlu0 %1983
        %v1988 = vadd.f32 %v1888, %v1980
        %v1989 = vadd.f32 %v1889, %v1982
        %v1990 = vadd.f32 %v1890, %v1984
        %s1991 = sld [smem:[#allocation2 + $0x58]]
        %v1992 = vstv %s1991
        %v1993 = vmul.f32 %v1992, %v281
        %v1994 = vmul.f32 %v1992, %v282
        %v1995 = vmul.f32 %v1992, %v283
        %v1999 = vrot.slane %v1993, 1
        %v2000 = vrot.slane %v1994, 1
        %v2001 = vsel %vm1094, %v1999, %v2000
        %v2002 = vrot.slane %v1995, 1
        %v2003 = vsel %vm1094, %v2000, %v2002
        %2004 = vrot.lane.b32.xlu0 %v2001, 126
        %v2005 = vpop.permute.xlu0 %2004
        %2006 = vrot.lane.b32.xlu0 %v2003, 126
        %v2007 = vpop.permute.xlu0 %2006
        %2008 = vrot.lane.b32.xlu0 %v2002, 126
        %v2009 = vpop.permute.xlu0 %2008
        %v2013 = vadd.f32 %v1913, %v2005
        %v2014 = vadd.f32 %v1914, %v2007
        %v2015 = vadd.f32 %v1915, %v2009
        %s2016 = sld [smem:[#allocation2 + $0x59]]
        %v2017 = vstv %s2016
        %v2018 = vmul.f32 %v2017, %v281
        %v2019 = vmul.f32 %v2017, %v282
        %v2020 = vmul.f32 %v2017, %v283
        %v2024 = vrot.slane %v2018, 1
        %v2025 = vrot.slane %v2019, 1
        %v2026 = vsel %vm1094, %v2024, %v2025
        %v2027 = vrot.slane %v2020, 1
        %v2028 = vsel %vm1094, %v2025, %v2027
        %2029 = vrot.lane.b32.xlu0 %v2026, 126
        %v2030 = vpop.permute.xlu0 %2029
        %2031 = vrot.lane.b32.xlu0 %v2028, 126
        %v2032 = vpop.permute.xlu0 %2031
        %2033 = vrot.lane.b32.xlu0 %v2027, 126
        %v2034 = vpop.permute.xlu0 %2033
        %v2038 = vadd.f32 %v1938, %v2030
        %v2039 = vadd.f32 %v1939, %v2032
        %v2040 = vadd.f32 %v1940, %v2034
        %s2041 = sld [smem:[#allocation2 + $0x5a]]
        %v2042 = vstv %s2041
        %v2043 = vmul.f32 %v2042, %v281
        %v2044 = vmul.f32 %v2042, %v282
        %v2045 = vmul.f32 %v2042, %v283
        %v2049 = vrot.slane %v2043, 1
        %v2050 = vrot.slane %v2044, 1
        %v2051 = vsel %vm1094, %v2049, %v2050
        %v2052 = vrot.slane %v2045, 1
        %v2053 = vsel %vm1094, %v2050, %v2052
        %2054 = vrot.lane.b32.xlu0 %v2051, 126
        %v2055 = vpop.permute.xlu0 %2054
        %2056 = vrot.lane.b32.xlu0 %v2053, 126
        %v2057 = vpop.permute.xlu0 %2056
        %2058 = vrot.lane.b32.xlu0 %v2052, 126
        %v2059 = vpop.permute.xlu0 %2058
        %v2063 = vadd.f32 %v1963, %v2055
        %v2064 = vadd.f32 %v1964, %v2057
        %v2065 = vadd.f32 %v1965, %v2059
        %s2066 = sld [smem:[#allocation2 + $0x5b]]
        %v2067 = vstv %s2066
        %v2068 = vmul.f32 %v2067, %v281
        %v2069 = vmul.f32 %v2067, %v282
        %v2070 = vmul.f32 %v2067, %v283
        %v2074 = vrot.slane %v2068, 1
        %v2075 = vrot.slane %v2069, 1
        %v2076 = vsel %vm1094, %v2074, %v2075
        %v2077 = vrot.slane %v2070, 1
        %v2078 = vsel %vm1094, %v2075, %v2077
        %2079 = vrot.lane.b32.xlu0 %v2076, 126
        %v2080 = vpop.permute.xlu0 %2079
        %2081 = vrot.lane.b32.xlu0 %v2078, 126
        %v2082 = vpop.permute.xlu0 %2081
        %2083 = vrot.lane.b32.xlu0 %v2077, 126
        %v2084 = vpop.permute.xlu0 %2083
        %v2088 = vadd.f32 %v1988, %v2080
        %v2089 = vadd.f32 %v1989, %v2082
        %v2090 = vadd.f32 %v1990, %v2084
        %s2091 = sld [smem:[#allocation2 + $0x5c]]
        %v2092 = vstv %s2091
        %v2093 = vmul.f32 %v2092, %v284
        %v2094 = vmul.f32 %v2092, %v285
        %v2095 = vmul.f32 %v2092, %v286
        %v2099 = vrot.slane %v2093, 1
        %v2100 = vrot.slane %v2094, 1
        %v2101 = vsel %vm1094, %v2099, %v2100
        %v2102 = vrot.slane %v2095, 1
        %v2103 = vsel %vm1094, %v2100, %v2102
        %2104 = vrot.lane.b32.xlu0 %v2101, 126
        %v2105 = vpop.permute.xlu0 %2104
        %2106 = vrot.lane.b32.xlu0 %v2103, 126
        %v2107 = vpop.permute.xlu0 %2106
        %2108 = vrot.lane.b32.xlu0 %v2102, 126
        %v2109 = vpop.permute.xlu0 %2108
        %v2113 = vadd.f32 %v2013, %v2105
        %v2114 = vadd.f32 %v2014, %v2107
        %v2115 = vadd.f32 %v2015, %v2109
        %s2116 = sld [smem:[#allocation2 + $0x5d]]
        %v2117 = vstv %s2116
        %v2118 = vmul.f32 %v2117, %v284
        %v2119 = vmul.f32 %v2117, %v285
        %v2120 = vmul.f32 %v2117, %v286
        %v2124 = vrot.slane %v2118, 1
        %v2125 = vrot.slane %v2119, 1
        %v2126 = vsel %vm1094, %v2124, %v2125
        %v2127 = vrot.slane %v2120, 1
        %v2128 = vsel %vm1094, %v2125, %v2127
        %2129 = vrot.lane.b32.xlu0 %v2126, 126
        %v2130 = vpop.permute.xlu0 %2129
        %2131 = vrot.lane.b32.xlu0 %v2128, 126
        %v2132 = vpop.permute.xlu0 %2131
        %2133 = vrot.lane.b32.xlu0 %v2127, 126
        %v2134 = vpop.permute.xlu0 %2133
        %v2138 = vadd.f32 %v2038, %v2130
        %v2139 = vadd.f32 %v2039, %v2132
        %v2140 = vadd.f32 %v2040, %v2134
        %s2141 = sld [smem:[#allocation2 + $0x5e]]
        %v2142 = vstv %s2141
        %v2143 = vmul.f32 %v2142, %v284
        %v2144 = vmul.f32 %v2142, %v285
        %v2145 = vmul.f32 %v2142, %v286
        %v2149 = vrot.slane %v2143, 1
        %v2150 = vrot.slane %v2144, 1
        %v2151 = vsel %vm1094, %v2149, %v2150
        %v2152 = vrot.slane %v2145, 1
        %v2153 = vsel %vm1094, %v2150, %v2152
        %2154 = vrot.lane.b32.xlu0 %v2151, 126
        %v2155 = vpop.permute.xlu0 %2154
        %2156 = vrot.lane.b32.xlu0 %v2153, 126
        %v2157 = vpop.permute.xlu0 %2156
        %2158 = vrot.lane.b32.xlu0 %v2152, 126
        %v2159 = vpop.permute.xlu0 %2158
        %v2163 = vadd.f32 %v2063, %v2155
        %v2164 = vadd.f32 %v2064, %v2157
        %v2165 = vadd.f32 %v2065, %v2159
        %s2166 = sld [smem:[#allocation2 + $0x5f]]
        %v2167 = vstv %s2166
        %v2168 = vmul.f32 %v2167, %v284
        %v2169 = vmul.f32 %v2167, %v285
        %v2170 = vmul.f32 %v2167, %v286
        %v2174 = vrot.slane %v2168, 1
        %v2175 = vrot.slane %v2169, 1
        %v2176 = vsel %vm1094, %v2174, %v2175
        %v2177 = vrot.slane %v2170, 1
        %v2178 = vsel %vm1094, %v2175, %v2177
        %2179 = vrot.lane.b32.xlu0 %v2176, 126
        %v2180 = vpop.permute.xlu0 %2179
        %2181 = vrot.lane.b32.xlu0 %v2178, 126
        %v2182 = vpop.permute.xlu0 %2181
        %2183 = vrot.lane.b32.xlu0 %v2177, 126
        %v2184 = vpop.permute.xlu0 %2183
        %v2188 = vadd.f32 %v2088, %v2180
        %v2189 = vadd.f32 %v2089, %v2182
        %v2190 = vadd.f32 %v2090, %v2184
        %s2191 = sld [smem:[#allocation2 + $0x60]]
        %v2192 = vstv %s2191
        %v2193 = vmul.f32 %v2192, %v275
        %v2194 = vmul.f32 %v2192, %v276
        %v2195 = vmul.f32 %v2192, %v277
        %vm2199 = vcmask 1045504
        %v2200 = vrot.slane %v2193, 2
        %v2201 = vrot.slane %v2194, 2
        %v2202 = vsel %vm2199, %v2200, %v2201
        %v2203 = vrot.slane %v2195, 2
        %v2204 = vsel %vm2199, %v2201, %v2203
        %v2208 = vadd.f32 %v2113, %v2202
        %v2209 = vadd.f32 %v2114, %v2204
        %v2210 = vadd.f32 %v2115, %v2203
        %s2211 = sld [smem:[#allocation2 + $0x61]]
        %v2212 = vstv %s2211
        %v2213 = vmul.f32 %v2212, %v275
        %v2214 = vmul.f32 %v2212, %v276
        %v2215 = vmul.f32 %v2212, %v277
        %v2219 = vrot.slane %v2213, 2
        %v2220 = vrot.slane %v2214, 2
        %v2221 = vsel %vm2199, %v2219, %v2220
        %v2222 = vrot.slane %v2215, 2
        %v2223 = vsel %vm2199, %v2220, %v2222
        %v2227 = vadd.f32 %v2138, %v2221
        %v2228 = vadd.f32 %v2139, %v2223
        %v2229 = vadd.f32 %v2140, %v2222
        %s2230 = sld [smem:[#allocation2 + $0x62]]
        %v2231 = vstv %s2230
        %v2232 = vmul.f32 %v2231, %v275
        %v2233 = vmul.f32 %v2231, %v276
        %v2234 = vmul.f32 %v2231, %v277
        %v2238 = vrot.slane %v2232, 2
        %v2239 = vrot.slane %v2233, 2
        %v2240 = vsel %vm2199, %v2238, %v2239
        %v2241 = vrot.slane %v2234, 2
        %v2242 = vsel %vm2199, %v2239, %v2241
        %v2246 = vadd.f32 %v2163, %v2240
        %v2247 = vadd.f32 %v2164, %v2242
        %v2248 = vadd.f32 %v2165, %v2241
        %s2249 = sld [smem:[#allocation2 + $0x63]]
        %v2250 = vstv %s2249
        %v2251 = vmul.f32 %v2250, %v275
        %v2252 = vmul.f32 %v2250, %v276
        %v2253 = vmul.f32 %v2250, %v277
        %v2257 = vrot.slane %v2251, 2
        %v2258 = vrot.slane %v2252, 2
        %v2259 = vsel %vm2199, %v2257, %v2258
        %v2260 = vrot.slane %v2253, 2
        %v2261 = vsel %vm2199, %v2258, %v2260
        %v2265 = vadd.f32 %v2188, %v2259
        %v2266 = vadd.f32 %v2189, %v2261
        %v2267 = vadd.f32 %v2190, %v2260
        %s2268 = sld [smem:[#allocation2 + $0x64]]
        %v2269 = vstv %s2268
        %v2270 = vmul.f32 %v2269, %v278
        %v2271 = vmul.f32 %v2269, %v279
        %v2272 = vmul.f32 %v2269, %v280
        %v2276 = vrot.slane %v2270, 2
        %v2277 = vrot.slane %v2271, 2
        %v2278 = vsel %vm2199, %v2276, %v2277
        %v2279 = vrot.slane %v2272, 2
        %v2280 = vsel %vm2199, %v2277, %v2279
        %v2284 = vadd.f32 %v2208, %v2278
        %v2285 = vadd.f32 %v2209, %v2280
        %v2286 = vadd.f32 %v2210, %v2279
        %s2287 = sld [smem:[#allocation2 + $0x65]]
        %v2288 = vstv %s2287
        %v2289 = vmul.f32 %v2288, %v278
        %v2290 = vmul.f32 %v2288, %v279
        %v2291 = vmul.f32 %v2288, %v280
        %v2295 = vrot.slane %v2289, 2
        %v2296 = vrot.slane %v2290, 2
        %v2297 = vsel %vm2199, %v2295, %v2296
        %v2298 = vrot.slane %v2291, 2
        %v2299 = vsel %vm2199, %v2296, %v2298
        %v2303 = vadd.f32 %v2227, %v2297
        %v2304 = vadd.f32 %v2228, %v2299
        %v2305 = vadd.f32 %v2229, %v2298
        %s2306 = sld [smem:[#allocation2 + $0x66]]
        %v2307 = vstv %s2306
        %v2308 = vmul.f32 %v2307, %v278
        %v2309 = vmul.f32 %v2307, %v279
        %v2310 = vmul.f32 %v2307, %v280
        %v2314 = vrot.slane %v2308, 2
        %v2315 = vrot.slane %v2309, 2
        %v2316 = vsel %vm2199, %v2314, %v2315
        %v2317 = vrot.slane %v2310, 2
        %v2318 = vsel %vm2199, %v2315, %v2317
        %v2322 = vadd.f32 %v2246, %v2316
        %v2323 = vadd.f32 %v2247, %v2318
        %v2324 = vadd.f32 %v2248, %v2317
        %s2325 = sld [smem:[#allocation2 + $0x67]]
        %v2326 = vstv %s2325
        %v2327 = vmul.f32 %v2326, %v278
        %v2328 = vmul.f32 %v2326, %v279
        %v2329 = vmul.f32 %v2326, %v280
        %v2333 = vrot.slane %v2327, 2
        %v2334 = vrot.slane %v2328, 2
        %v2335 = vsel %vm2199, %v2333, %v2334
        %v2336 = vrot.slane %v2329, 2
        %v2337 = vsel %vm2199, %v2334, %v2336
        %v2341 = vadd.f32 %v2265, %v2335
        %v2342 = vadd.f32 %v2266, %v2337
        %v2343 = vadd.f32 %v2267, %v2336
        %s2344 = sld [smem:[#allocation2 + $0x68]]
        %v2345 = vstv %s2344
        %v2346 = vmul.f32 %v2345, %v281
        %v2347 = vmul.f32 %v2345, %v282
        %v2348 = vmul.f32 %v2345, %v283
        %v2352 = vrot.slane %v2346, 2
        %v2353 = vrot.slane %v2347, 2
        %v2354 = vsel %vm2199, %v2352, %v2353
        %v2355 = vrot.slane %v2348, 2
        %v2356 = vsel %vm2199, %v2353, %v2355
        %v2360 = vadd.f32 %v2284, %v2354
        %v2361 = vadd.f32 %v2285, %v2356
        %v2362 = vadd.f32 %v2286, %v2355
        %s2363 = sld [smem:[#allocation2 + $0x69]]
        %v2364 = vstv %s2363
        %v2365 = vmul.f32 %v2364, %v281
        %v2366 = vmul.f32 %v2364, %v282
        %v2367 = vmul.f32 %v2364, %v283
        %v2371 = vrot.slane %v2365, 2
        %v2372 = vrot.slane %v2366, 2
        %v2373 = vsel %vm2199, %v2371, %v2372
        %v2374 = vrot.slane %v2367, 2
        %v2375 = vsel %vm2199, %v2372, %v2374
        %v2379 = vadd.f32 %v2303, %v2373
        %v2380 = vadd.f32 %v2304, %v2375
        %v2381 = vadd.f32 %v2305, %v2374
        %s2382 = sld [smem:[#allocation2 + $0x6a]]
        %v2383 = vstv %s2382
        %v2384 = vmul.f32 %v2383, %v281
        %v2385 = vmul.f32 %v2383, %v282
        %v2386 = vmul.f32 %v2383, %v283
        %v2390 = vrot.slane %v2384, 2
        %v2391 = vrot.slane %v2385, 2
        %v2392 = vsel %vm2199, %v2390, %v2391
        %v2393 = vrot.slane %v2386, 2
        %v2394 = vsel %vm2199, %v2391, %v2393
        %v2398 = vadd.f32 %v2322, %v2392
        %v2399 = vadd.f32 %v2323, %v2394
        %v2400 = vadd.f32 %v2324, %v2393
        %s2401 = sld [smem:[#allocation2 + $0x6b]]
        %v2402 = vstv %s2401
        %v2403 = vmul.f32 %v2402, %v281
        %v2404 = vmul.f32 %v2402, %v282
        %v2405 = vmul.f32 %v2402, %v283
        %v2409 = vrot.slane %v2403, 2
        %v2410 = vrot.slane %v2404, 2
        %v2411 = vsel %vm2199, %v2409, %v2410
        %v2412 = vrot.slane %v2405, 2
        %v2413 = vsel %vm2199, %v2410, %v2412
        %v2417 = vadd.f32 %v2341, %v2411
        %v2418 = vadd.f32 %v2342, %v2413
        %v2419 = vadd.f32 %v2343, %v2412
        %s2420 = sld [smem:[#allocation2 + $0x6c]]
        %v2421 = vstv %s2420
        %v2422 = vmul.f32 %v2421, %v284
        %v2423 = vmul.f32 %v2421, %v285
        %v2424 = vmul.f32 %v2421, %v286
        %v2428 = vrot.slane %v2422, 2
        %v2429 = vrot.slane %v2423, 2
        %v2430 = vsel %vm2199, %v2428, %v2429
        %v2431 = vrot.slane %v2424, 2
        %v2432 = vsel %vm2199, %v2429, %v2431
        %v2436 = vadd.f32 %v2360, %v2430
        %v2437 = vadd.f32 %v2361, %v2432
        %v2438 = vadd.f32 %v2362, %v2431
        %s2439 = sld [smem:[#allocation2 + $0x6d]]
        %v2440 = vstv %s2439
        %v2441 = vmul.f32 %v2440, %v284
        %v2442 = vmul.f32 %v2440, %v285
        %v2443 = vmul.f32 %v2440, %v286
        %v2447 = vrot.slane %v2441, 2
        %v2448 = vrot.slane %v2442, 2
        %v2449 = vsel %vm2199, %v2447, %v2448
        %v2450 = vrot.slane %v2443, 2
        %v2451 = vsel %vm2199, %v2448, %v2450
        %v2455 = vadd.f32 %v2379, %v2449
        %v2456 = vadd.f32 %v2380, %v2451
        %v2457 = vadd.f32 %v2381, %v2450
        %s2458 = sld [smem:[#allocation2 + $0x6e]]
        %v2459 = vstv %s2458
        %v2460 = vmul.f32 %v2459, %v284
        %v2461 = vmul.f32 %v2459, %v285
        %v2462 = vmul.f32 %v2459, %v286
        %v2466 = vrot.slane %v2460, 2
        %v2467 = vrot.slane %v2461, 2
        %v2468 = vsel %vm2199, %v2466, %v2467
        %v2469 = vrot.slane %v2462, 2
        %v2470 = vsel %vm2199, %v2467, %v2469
        %v2474 = vadd.f32 %v2398, %v2468
        %v2475 = vadd.f32 %v2399, %v2470
        %v2476 = vadd.f32 %v2400, %v2469
        %s2477 = sld [smem:[#allocation2 + $0x6f]]
        %v2478 = vstv %s2477
        %v2479 = vmul.f32 %v2478, %v284
        %v2480 = vmul.f32 %v2478, %v285
        %v2481 = vmul.f32 %v2478, %v286
        %v2485 = vrot.slane %v2479, 2
        %v2486 = vrot.slane %v2480, 2
        %v2487 = vsel %vm2199, %v2485, %v2486
        %v2488 = vrot.slane %v2481, 2
        %v2489 = vsel %vm2199, %v2486, %v2488
        %v2493 = vadd.f32 %v2417, %v2487
        %v2494 = vadd.f32 %v2418, %v2489
        %v2495 = vadd.f32 %v2419, %v2488
        %s2496 = sld [smem:[#allocation2 + $0x70]]
        %v2497 = vstv %s2496
        %v2498 = vmul.f32 %v2497, %v275
        %v2499 = vmul.f32 %v2497, %v276
        %v2500 = vmul.f32 %v2497, %v277
        %v2504 = vrot.slane %v2498, 2
        %v2505 = vrot.slane %v2499, 2
        %v2506 = vsel %vm2199, %v2504, %v2505
        %v2507 = vrot.slane %v2500, 2
        %v2508 = vsel %vm2199, %v2505, %v2507
        %2509 = vrot.lane.b32.xlu0 %v2506, 127
        %v2510 = vpop.permute.xlu0 %2509
        %2511 = vrot.lane.b32.xlu0 %v2508, 127
        %v2512 = vpop.permute.xlu0 %2511
        %2513 = vrot.lane.b32.xlu0 %v2507, 127
        %v2514 = vpop.permute.xlu0 %2513
        %v2518 = vadd.f32 %v2436, %v2510
        %v2519 = vadd.f32 %v2437, %v2512
        %v2520 = vadd.f32 %v2438, %v2514
        %s2521 = sld [smem:[#allocation2 + $0x71]]
        %v2522 = vstv %s2521
        %v2523 = vmul.f32 %v2522, %v275
        %v2524 = vmul.f32 %v2522, %v276
        %v2525 = vmul.f32 %v2522, %v277
        %v2529 = vrot.slane %v2523, 2
        %v2530 = vrot.slane %v2524, 2
        %v2531 = vsel %vm2199, %v2529, %v2530
        %v2532 = vrot.slane %v2525, 2
        %v2533 = vsel %vm2199, %v2530, %v2532
        %2534 = vrot.lane.b32.xlu0 %v2531, 127
        %v2535 = vpop.permute.xlu0 %2534
        %2536 = vrot.lane.b32.xlu0 %v2533, 127
        %v2537 = vpop.permute.xlu0 %2536
        %2538 = vrot.lane.b32.xlu0 %v2532, 127
        %v2539 = vpop.permute.xlu0 %2538
        %v2543 = vadd.f32 %v2455, %v2535
        %v2544 = vadd.f32 %v2456, %v2537
        %v2545 = vadd.f32 %v2457, %v2539
        %s2546 = sld [smem:[#allocation2 + $0x72]]
        %v2547 = vstv %s2546
        %v2548 = vmul.f32 %v2547, %v275
        %v2549 = vmul.f32 %v2547, %v276
        %v2550 = vmul.f32 %v2547, %v277
        %v2554 = vrot.slane %v2548, 2
        %v2555 = vrot.slane %v2549, 2
        %v2556 = vsel %vm2199, %v2554, %v2555
        %v2557 = vrot.slane %v2550, 2
        %v2558 = vsel %vm2199, %v2555, %v2557
        %2559 = vrot.lane.b32.xlu0 %v2556, 127
        %v2560 = vpop.permute.xlu0 %2559
        %2561 = vrot.lane.b32.xlu0 %v2558, 127
        %v2562 = vpop.permute.xlu0 %2561
        %2563 = vrot.lane.b32.xlu0 %v2557, 127
        %v2564 = vpop.permute.xlu0 %2563
        %v2568 = vadd.f32 %v2474, %v2560
        %v2569 = vadd.f32 %v2475, %v2562
        %v2570 = vadd.f32 %v2476, %v2564
        %s2571 = sld [smem:[#allocation2 + $0x73]]
        %v2572 = vstv %s2571
        %v2573 = vmul.f32 %v2572, %v275
        %v2574 = vmul.f32 %v2572, %v276
        %v2575 = vmul.f32 %v2572, %v277
        %v2579 = vrot.slane %v2573, 2
        %v2580 = vrot.slane %v2574, 2
        %v2581 = vsel %vm2199, %v2579, %v2580
        %v2582 = vrot.slane %v2575, 2
        %v2583 = vsel %vm2199, %v2580, %v2582
        %2584 = vrot.lane.b32.xlu0 %v2581, 127
        %v2585 = vpop.permute.xlu0 %2584
        %2586 = vrot.lane.b32.xlu0 %v2583, 127
        %v2587 = vpop.permute.xlu0 %2586
        %2588 = vrot.lane.b32.xlu0 %v2582, 127
        %v2589 = vpop.permute.xlu0 %2588
        %v2593 = vadd.f32 %v2493, %v2585
        %v2594 = vadd.f32 %v2494, %v2587
        %v2595 = vadd.f32 %v2495, %v2589
        %s2596 = sld [smem:[#allocation2 + $0x74]]
        %v2597 = vstv %s2596
        %v2598 = vmul.f32 %v2597, %v278
        %v2599 = vmul.f32 %v2597, %v279
        %v2600 = vmul.f32 %v2597, %v280
        %v2604 = vrot.slane %v2598, 2
        %v2605 = vrot.slane %v2599, 2
        %v2606 = vsel %vm2199, %v2604, %v2605
        %v2607 = vrot.slane %v2600, 2
        %v2608 = vsel %vm2199, %v2605, %v2607
        %2609 = vrot.lane.b32.xlu0 %v2606, 127
        %v2610 = vpop.permute.xlu0 %2609
        %2611 = vrot.lane.b32.xlu0 %v2608, 127
        %v2612 = vpop.permute.xlu0 %2611
        %2613 = vrot.lane.b32.xlu0 %v2607, 127
        %v2614 = vpop.permute.xlu0 %2613
        %v2618 = vadd.f32 %v2518, %v2610
        %v2619 = vadd.f32 %v2519, %v2612
        %v2620 = vadd.f32 %v2520, %v2614
        %s2621 = sld [smem:[#allocation2 + $0x75]]
        %v2622 = vstv %s2621
        %v2623 = vmul.f32 %v2622, %v278
        %v2624 = vmul.f32 %v2622, %v279
        %v2625 = vmul.f32 %v2622, %v280
        %v2629 = vrot.slane %v2623, 2
        %v2630 = vrot.slane %v2624, 2
        %v2631 = vsel %vm2199, %v2629, %v2630
        %v2632 = vrot.slane %v2625, 2
        %v2633 = vsel %vm2199, %v2630, %v2632
        %2634 = vrot.lane.b32.xlu0 %v2631, 127
        %v2635 = vpop.permute.xlu0 %2634
        %2636 = vrot.lane.b32.xlu0 %v2633, 127
        %v2637 = vpop.permute.xlu0 %2636
        %2638 = vrot.lane.b32.xlu0 %v2632, 127
        %v2639 = vpop.permute.xlu0 %2638
        %v2643 = vadd.f32 %v2543, %v2635
        %v2644 = vadd.f32 %v2544, %v2637
        %v2645 = vadd.f32 %v2545, %v2639
        %s2646 = sld [smem:[#allocation2 + $0x76]]
        %v2647 = vstv %s2646
        %v2648 = vmul.f32 %v2647, %v278
        %v2649 = vmul.f32 %v2647, %v279
        %v2650 = vmul.f32 %v2647, %v280
        %v2654 = vrot.slane %v2648, 2
        %v2655 = vrot.slane %v2649, 2
        %v2656 = vsel %vm2199, %v2654, %v2655
        %v2657 = vrot.slane %v2650, 2
        %v2658 = vsel %vm2199, %v2655, %v2657
        %2659 = vrot.lane.b32.xlu0 %v2656, 127
        %v2660 = vpop.permute.xlu0 %2659
        %2661 = vrot.lane.b32.xlu0 %v2658, 127
        %v2662 = vpop.permute.xlu0 %2661
        %2663 = vrot.lane.b32.xlu0 %v2657, 127
        %v2664 = vpop.permute.xlu0 %2663
        %v2668 = vadd.f32 %v2568, %v2660
        %v2669 = vadd.f32 %v2569, %v2662
        %v2670 = vadd.f32 %v2570, %v2664
        %s2671 = sld [smem:[#allocation2 + $0x77]]
        %v2672 = vstv %s2671
        %v2673 = vmul.f32 %v2672, %v278
        %v2674 = vmul.f32 %v2672, %v279
        %v2675 = vmul.f32 %v2672, %v280
        %v2679 = vrot.slane %v2673, 2
        %v2680 = vrot.slane %v2674, 2
        %v2681 = vsel %vm2199, %v2679, %v2680
        %v2682 = vrot.slane %v2675, 2
        %v2683 = vsel %vm2199, %v2680, %v2682
        %2684 = vrot.lane.b32.xlu0 %v2681, 127
        %v2685 = vpop.permute.xlu0 %2684
        %2686 = vrot.lane.b32.xlu0 %v2683, 127
        %v2687 = vpop.permute.xlu0 %2686
        %2688 = vrot.lane.b32.xlu0 %v2682, 127
        %v2689 = vpop.permute.xlu0 %2688
        %v2693 = vadd.f32 %v2593, %v2685
        %v2694 = vadd.f32 %v2594, %v2687
        %v2695 = vadd.f32 %v2595, %v2689
        %s2696 = sld [smem:[#allocation2 + $0x78]]
        %v2697 = vstv %s2696
        %v2698 = vmul.f32 %v2697, %v281
        %v2699 = vmul.f32 %v2697, %v282
        %v2700 = vmul.f32 %v2697, %v283
        %v2704 = vrot.slane %v2698, 2
        %v2705 = vrot.slane %v2699, 2
        %v2706 = vsel %vm2199, %v2704, %v2705
        %v2707 = vrot.slane %v2700, 2
        %v2708 = vsel %vm2199, %v2705, %v2707
        %2709 = vrot.lane.b32.xlu0 %v2706, 127
        %v2710 = vpop.permute.xlu0 %2709
        %2711 = vrot.lane.b32.xlu0 %v2708, 127
        %v2712 = vpop.permute.xlu0 %2711
        %2713 = vrot.lane.b32.xlu0 %v2707, 127
        %v2714 = vpop.permute.xlu0 %2713
        %v2718 = vadd.f32 %v2618, %v2710
        %v2719 = vadd.f32 %v2619, %v2712
        %v2720 = vadd.f32 %v2620, %v2714
        %s2721 = sld [smem:[#allocation2 + $0x79]]
        %v2722 = vstv %s2721
        %v2723 = vmul.f32 %v2722, %v281
        %v2724 = vmul.f32 %v2722, %v282
        %v2725 = vmul.f32 %v2722, %v283
        %v2729 = vrot.slane %v2723, 2
        %v2730 = vrot.slane %v2724, 2
        %v2731 = vsel %vm2199, %v2729, %v2730
        %v2732 = vrot.slane %v2725, 2
        %v2733 = vsel %vm2199, %v2730, %v2732
        %2734 = vrot.lane.b32.xlu0 %v2731, 127
        %v2735 = vpop.permute.xlu0 %2734
        %2736 = vrot.lane.b32.xlu0 %v2733, 127
        %v2737 = vpop.permute.xlu0 %2736
        %2738 = vrot.lane.b32.xlu0 %v2732, 127
        %v2739 = vpop.permute.xlu0 %2738
        %v2743 = vadd.f32 %v2643, %v2735
        %v2744 = vadd.f32 %v2644, %v2737
        %v2745 = vadd.f32 %v2645, %v2739
        %s2746 = sld [smem:[#allocation2 + $0x7a]]
        %v2747 = vstv %s2746
        %v2748 = vmul.f32 %v2747, %v281
        %v2749 = vmul.f32 %v2747, %v282
        %v2750 = vmul.f32 %v2747, %v283
        %v2754 = vrot.slane %v2748, 2
        %v2755 = vrot.slane %v2749, 2
        %v2756 = vsel %vm2199, %v2754, %v2755
        %v2757 = vrot.slane %v2750, 2
        %v2758 = vsel %vm2199, %v2755, %v2757
        %2759 = vrot.lane.b32.xlu0 %v2756, 127
        %v2760 = vpop.permute.xlu0 %2759
        %2761 = vrot.lane.b32.xlu0 %v2758, 127
        %v2762 = vpop.permute.xlu0 %2761
        %2763 = vrot.lane.b32.xlu0 %v2757, 127
        %v2764 = vpop.permute.xlu0 %2763
        %v2768 = vadd.f32 %v2668, %v2760
        %v2769 = vadd.f32 %v2669, %v2762
        %v2770 = vadd.f32 %v2670, %v2764
        %s2771 = sld [smem:[#allocation2 + $0x7b]]
        %v2772 = vstv %s2771
        %v2773 = vmul.f32 %v2772, %v281
        %v2774 = vmul.f32 %v2772, %v282
        %v2775 = vmul.f32 %v2772, %v283
        %v2779 = vrot.slane %v2773, 2
        %v2780 = vrot.slane %v2774, 2
        %v2781 = vsel %vm2199, %v2779, %v2780
        %v2782 = vrot.slane %v2775, 2
        %v2783 = vsel %vm2199, %v2780, %v2782
        %2784 = vrot.lane.b32.xlu0 %v2781, 127
        %v2785 = vpop.permute.xlu0 %2784
        %2786 = vrot.lane.b32.xlu0 %v2783, 127
        %v2787 = vpop.permute.xlu0 %2786
        %2788 = vrot.lane.b32.xlu0 %v2782, 127
        %v2789 = vpop.permute.xlu0 %2788
        %v2793 = vadd.f32 %v2693, %v2785
        %v2794 = vadd.f32 %v2694, %v2787
        %v2795 = vadd.f32 %v2695, %v2789
        %s2796 = sld [smem:[#allocation2 + $0x7c]]
        %v2797 = vstv %s2796
        %v2798 = vmul.f32 %v2797, %v284
        %v2799 = vmul.f32 %v2797, %v285
        %v2800 = vmul.f32 %v2797, %v286
        %v2804 = vrot.slane %v2798, 2
        %v2805 = vrot.slane %v2799, 2
        %v2806 = vsel %vm2199, %v2804, %v2805
        %v2807 = vrot.slane %v2800, 2
        %v2808 = vsel %vm2199, %v2805, %v2807
        %2809 = vrot.lane.b32.xlu0 %v2806, 127
        %v2810 = vpop.permute.xlu0 %2809
        %2811 = vrot.lane.b32.xlu0 %v2808, 127
        %v2812 = vpop.permute.xlu0 %2811
        %2813 = vrot.lane.b32.xlu0 %v2807, 127
        %v2814 = vpop.permute.xlu0 %2813
        %v2818 = vadd.f32 %v2718, %v2810
        %v2819 = vadd.f32 %v2719, %v2812
        %v2820 = vadd.f32 %v2720, %v2814
        %s2821 = sld [smem:[#allocation2 + $0x7d]]
        %v2822 = vstv %s2821
        %v2823 = vmul.f32 %v2822, %v284
        %v2824 = vmul.f32 %v2822, %v285
        %v2825 = vmul.f32 %v2822, %v286
        %v2829 = vrot.slane %v2823, 2
        %v2830 = vrot.slane %v2824, 2
        %v2831 = vsel %vm2199, %v2829, %v2830
        %v2832 = vrot.slane %v2825, 2
        %v2833 = vsel %vm2199, %v2830, %v2832
        %2834 = vrot.lane.b32.xlu0 %v2831, 127
        %v2835 = vpop.permute.xlu0 %2834
        %2836 = vrot.lane.b32.xlu0 %v2833, 127
        %v2837 = vpop.permute.xlu0 %2836
        %2838 = vrot.lane.b32.xlu0 %v2832, 127
        %v2839 = vpop.permute.xlu0 %2838
        %v2843 = vadd.f32 %v2743, %v2835
        %v2844 = vadd.f32 %v2744, %v2837
        %v2845 = vadd.f32 %v2745, %v2839
        %s2846 = sld [smem:[#allocation2 + $0x7e]]
        %v2847 = vstv %s2846
        %v2848 = vmul.f32 %v2847, %v284
        %v2849 = vmul.f32 %v2847, %v285
        %v2850 = vmul.f32 %v2847, %v286
        %v2854 = vrot.slane %v2848, 2
        %v2855 = vrot.slane %v2849, 2
        %v2856 = vsel %vm2199, %v2854, %v2855
        %v2857 = vrot.slane %v2850, 2
        %v2858 = vsel %vm2199, %v2855, %v2857
        %2859 = vrot.lane.b32.xlu0 %v2856, 127
        %v2860 = vpop.permute.xlu0 %2859
        %2861 = vrot.lane.b32.xlu0 %v2858, 127
        %v2862 = vpop.permute.xlu0 %2861
        %2863 = vrot.lane.b32.xlu0 %v2857, 127
        %v2864 = vpop.permute.xlu0 %2863
        %v2868 = vadd.f32 %v2768, %v2860
        %v2869 = vadd.f32 %v2769, %v2862
        %v2870 = vadd.f32 %v2770, %v2864
        %s2871 = sld [smem:[#allocation2 + $0x7f]]
        %v2872 = vstv %s2871
        %v2873 = vmul.f32 %v2872, %v284
        %v2874 = vmul.f32 %v2872, %v285
        %v2875 = vmul.f32 %v2872, %v286
        %v2879 = vrot.slane %v2873, 2
        %v2880 = vrot.slane %v2874, 2
        %v2881 = vsel %vm2199, %v2879, %v2880
        %v2882 = vrot.slane %v2875, 2
        %v2883 = vsel %vm2199, %v2880, %v2882
        %2884 = vrot.lane.b32.xlu0 %v2881, 127
        %v2885 = vpop.permute.xlu0 %2884
        %2886 = vrot.lane.b32.xlu0 %v2883, 127
        %v2887 = vpop.permute.xlu0 %2886
        %2888 = vrot.lane.b32.xlu0 %v2882, 127
        %v2889 = vpop.permute.xlu0 %2888
        %v2893 = vadd.f32 %v2793, %v2885
        %v2894 = vadd.f32 %v2794, %v2887
        %v2895 = vadd.f32 %v2795, %v2889
        %s2896 = sld [smem:[#allocation2 + $0x80]]
        %v2897 = vstv %s2896
        %v2898 = vmul.f32 %v2897, %v275
        %v2899 = vmul.f32 %v2897, %v276
        %v2900 = vmul.f32 %v2897, %v277
        %v2904 = vrot.slane %v2898, 2
        %v2905 = vrot.slane %v2899, 2
        %v2906 = vsel %vm2199, %v2904, %v2905
        %v2907 = vrot.slane %v2900, 2
        %v2908 = vsel %vm2199, %v2905, %v2907
        %2909 = vrot.lane.b32.xlu0 %v2906, 126
        %v2910 = vpop.permute.xlu0 %2909
        %2911 = vrot.lane.b32.xlu0 %v2908, 126
        %v2912 = vpop.permute.xlu0 %2911
        %2913 = vrot.lane.b32.xlu0 %v2907, 126
        %v2914 = vpop.permute.xlu0 %2913
        %v2918 = vadd.f32 %v2818, %v2910
        %v2919 = vadd.f32 %v2819, %v2912
        %v2920 = vadd.f32 %v2820, %v2914
        %s2921 = sld [smem:[#allocation2 + $0x81]]
        %v2922 = vstv %s2921
        %v2923 = vmul.f32 %v2922, %v275
        %v2924 = vmul.f32 %v2922, %v276
        %v2925 = vmul.f32 %v2922, %v277
        %v2929 = vrot.slane %v2923, 2
        %v2930 = vrot.slane %v2924, 2
        %v2931 = vsel %vm2199, %v2929, %v2930
        %v2932 = vrot.slane %v2925, 2
        %v2933 = vsel %vm2199, %v2930, %v2932
        %2934 = vrot.lane.b32.xlu0 %v2931, 126
        %v2935 = vpop.permute.xlu0 %2934
        %2936 = vrot.lane.b32.xlu0 %v2933, 126
        %v2937 = vpop.permute.xlu0 %2936
        %2938 = vrot.lane.b32.xlu0 %v2932, 126
        %v2939 = vpop.permute.xlu0 %2938
        %v2943 = vadd.f32 %v2843, %v2935
        %v2944 = vadd.f32 %v2844, %v2937
        %v2945 = vadd.f32 %v2845, %v2939
        %s2946 = sld [smem:[#allocation2 + $0x82]]
        %v2947 = vstv %s2946
        %v2948 = vmul.f32 %v2947, %v275
        %v2949 = vmul.f32 %v2947, %v276
        %v2950 = vmul.f32 %v2947, %v277
        %v2954 = vrot.slane %v2948, 2
        %v2955 = vrot.slane %v2949, 2
        %v2956 = vsel %vm2199, %v2954, %v2955
        %v2957 = vrot.slane %v2950, 2
        %v2958 = vsel %vm2199, %v2955, %v2957
        %2959 = vrot.lane.b32.xlu0 %v2956, 126
        %v2960 = vpop.permute.xlu0 %2959
        %2961 = vrot.lane.b32.xlu0 %v2958, 126
        %v2962 = vpop.permute.xlu0 %2961
        %2963 = vrot.lane.b32.xlu0 %v2957, 126
        %v2964 = vpop.permute.xlu0 %2963
        %v2968 = vadd.f32 %v2868, %v2960
        %v2969 = vadd.f32 %v2869, %v2962
        %v2970 = vadd.f32 %v2870, %v2964
        %s2971 = sld [smem:[#allocation2 + $0x83]]
        %v2972 = vstv %s2971
        %v2973 = vmul.f32 %v2972, %v275
        %v2974 = vmul.f32 %v2972, %v276
        %v2975 = vmul.f32 %v2972, %v277
        %v2979 = vrot.slane %v2973, 2
        %v2980 = vrot.slane %v2974, 2
        %v2981 = vsel %vm2199, %v2979, %v2980
        %v2982 = vrot.slane %v2975, 2
        %v2983 = vsel %vm2199, %v2980, %v2982
        %2984 = vrot.lane.b32.xlu0 %v2981, 126
        %v2985 = vpop.permute.xlu0 %2984
        %2986 = vrot.lane.b32.xlu0 %v2983, 126
        %v2987 = vpop.permute.xlu0 %2986
        %2988 = vrot.lane.b32.xlu0 %v2982, 126
        %v2989 = vpop.permute.xlu0 %2988
        %v2993 = vadd.f32 %v2893, %v2985
        %v2994 = vadd.f32 %v2894, %v2987
        %v2995 = vadd.f32 %v2895, %v2989
        %s2996 = sld [smem:[#allocation2 + $0x84]]
        %v2997 = vstv %s2996
        %v2998 = vmul.f32 %v2997, %v278
        %v2999 = vmul.f32 %v2997, %v279
        %v3000 = vmul.f32 %v2997, %v280
        %v3004 = vrot.slane %v2998, 2
        %v3005 = vrot.slane %v2999, 2
        %v3006 = vsel %vm2199, %v3004, %v3005
        %v3007 = vrot.slane %v3000, 2
        %v3008 = vsel %vm2199, %v3005, %v3007
        %3009 = vrot.lane.b32.xlu0 %v3006, 126
        %v3010 = vpop.permute.xlu0 %3009
        %3011 = vrot.lane.b32.xlu0 %v3008, 126
        %v3012 = vpop.permute.xlu0 %3011
        %3013 = vrot.lane.b32.xlu0 %v3007, 126
        %v3014 = vpop.permute.xlu0 %3013
        %v3018 = vadd.f32 %v2918, %v3010
        %v3019 = vadd.f32 %v2919, %v3012
        %v3020 = vadd.f32 %v2920, %v3014
        %s3021 = sld [smem:[#allocation2 + $0x85]]
        %v3022 = vstv %s3021
        %v3023 = vmul.f32 %v3022, %v278
        %v3024 = vmul.f32 %v3022, %v279
        %v3025 = vmul.f32 %v3022, %v280
        %v3029 = vrot.slane %v3023, 2
        %v3030 = vrot.slane %v3024, 2
        %v3031 = vsel %vm2199, %v3029, %v3030
        %v3032 = vrot.slane %v3025, 2
        %v3033 = vsel %vm2199, %v3030, %v3032
        %3034 = vrot.lane.b32.xlu0 %v3031, 126
        %v3035 = vpop.permute.xlu0 %3034
        %3036 = vrot.lane.b32.xlu0 %v3033, 126
        %v3037 = vpop.permute.xlu0 %3036
        %3038 = vrot.lane.b32.xlu0 %v3032, 126
        %v3039 = vpop.permute.xlu0 %3038
        %v3043 = vadd.f32 %v2943, %v3035
        %v3044 = vadd.f32 %v2944, %v3037
        %v3045 = vadd.f32 %v2945, %v3039
        %s3046 = sld [smem:[#allocation2 + $0x86]]
        %v3047 = vstv %s3046
        %v3048 = vmul.f32 %v3047, %v278
        %v3049 = vmul.f32 %v3047, %v279
        %v3050 = vmul.f32 %v3047, %v280
        %v3054 = vrot.slane %v3048, 2
        %v3055 = vrot.slane %v3049, 2
        %v3056 = vsel %vm2199, %v3054, %v3055
        %v3057 = vrot.slane %v3050, 2
        %v3058 = vsel %vm2199, %v3055, %v3057
        %3059 = vrot.lane.b32.xlu0 %v3056, 126
        %v3060 = vpop.permute.xlu0 %3059
        %3061 = vrot.lane.b32.xlu0 %v3058, 126
        %v3062 = vpop.permute.xlu0 %3061
        %3063 = vrot.lane.b32.xlu0 %v3057, 126
        %v3064 = vpop.permute.xlu0 %3063
        %v3068 = vadd.f32 %v2968, %v3060
        %v3069 = vadd.f32 %v2969, %v3062
        %v3070 = vadd.f32 %v2970, %v3064
        %s3071 = sld [smem:[#allocation2 + $0x87]]
        %v3072 = vstv %s3071
        %v3073 = vmul.f32 %v3072, %v278
        %v3074 = vmul.f32 %v3072, %v279
        %v3075 = vmul.f32 %v3072, %v280
        %v3079 = vrot.slane %v3073, 2
        %v3080 = vrot.slane %v3074, 2
        %v3081 = vsel %vm2199, %v3079, %v3080
        %v3082 = vrot.slane %v3075, 2
        %v3083 = vsel %vm2199, %v3080, %v3082
        %3084 = vrot.lane.b32.xlu0 %v3081, 126
        %v3085 = vpop.permute.xlu0 %3084
        %3086 = vrot.lane.b32.xlu0 %v3083, 126
        %v3087 = vpop.permute.xlu0 %3086
        %3088 = vrot.lane.b32.xlu0 %v3082, 126
        %v3089 = vpop.permute.xlu0 %3088
        %v3093 = vadd.f32 %v2993, %v3085
        %v3094 = vadd.f32 %v2994, %v3087
        %v3095 = vadd.f32 %v2995, %v3089
        %s3096 = sld [smem:[#allocation2 + $0x88]]
        %v3097 = vstv %s3096
        %v3098 = vmul.f32 %v3097, %v281
        %v3099 = vmul.f32 %v3097, %v282
        %v3100 = vmul.f32 %v3097, %v283
        %v3104 = vrot.slane %v3098, 2
        %v3105 = vrot.slane %v3099, 2
        %v3106 = vsel %vm2199, %v3104, %v3105
        %v3107 = vrot.slane %v3100, 2
        %v3108 = vsel %vm2199, %v3105, %v3107
        %3109 = vrot.lane.b32.xlu0 %v3106, 126
        %v3110 = vpop.permute.xlu0 %3109
        %3111 = vrot.lane.b32.xlu0 %v3108, 126
        %v3112 = vpop.permute.xlu0 %3111
        %3113 = vrot.lane.b32.xlu0 %v3107, 126
        %v3114 = vpop.permute.xlu0 %3113
        %v3118 = vadd.f32 %v3018, %v3110
        %v3119 = vadd.f32 %v3019, %v3112
        %v3120 = vadd.f32 %v3020, %v3114
        %s3121 = sld [smem:[#allocation2 + $0x89]]
        %v3122 = vstv %s3121
        %v3123 = vmul.f32 %v3122, %v281
        %v3124 = vmul.f32 %v3122, %v282
        %v3125 = vmul.f32 %v3122, %v283
        %v3129 = vrot.slane %v3123, 2
        %v3130 = vrot.slane %v3124, 2
        %v3131 = vsel %vm2199, %v3129, %v3130
        %v3132 = vrot.slane %v3125, 2
        %v3133 = vsel %vm2199, %v3130, %v3132
        %3134 = vrot.lane.b32.xlu0 %v3131, 126
        %v3135 = vpop.permute.xlu0 %3134
        %3136 = vrot.lane.b32.xlu0 %v3133, 126
        %v3137 = vpop.permute.xlu0 %3136
        %3138 = vrot.lane.b32.xlu0 %v3132, 126
        %v3139 = vpop.permute.xlu0 %3138
        %v3143 = vadd.f32 %v3043, %v3135
        %v3144 = vadd.f32 %v3044, %v3137
        %v3145 = vadd.f32 %v3045, %v3139
        %s3146 = sld [smem:[#allocation2 + $0x8a]]
        %v3147 = vstv %s3146
        %v3148 = vmul.f32 %v3147, %v281
        %v3149 = vmul.f32 %v3147, %v282
        %v3150 = vmul.f32 %v3147, %v283
        %v3154 = vrot.slane %v3148, 2
        %v3155 = vrot.slane %v3149, 2
        %v3156 = vsel %vm2199, %v3154, %v3155
        %v3157 = vrot.slane %v3150, 2
        %v3158 = vsel %vm2199, %v3155, %v3157
        %3159 = vrot.lane.b32.xlu0 %v3156, 126
        %v3160 = vpop.permute.xlu0 %3159
        %3161 = vrot.lane.b32.xlu0 %v3158, 126
        %v3162 = vpop.permute.xlu0 %3161
        %3163 = vrot.lane.b32.xlu0 %v3157, 126
        %v3164 = vpop.permute.xlu0 %3163
        %v3168 = vadd.f32 %v3068, %v3160
        %v3169 = vadd.f32 %v3069, %v3162
        %v3170 = vadd.f32 %v3070, %v3164
        %s3171 = sld [smem:[#allocation2 + $0x8b]]
        %v3172 = vstv %s3171
        %v3173 = vmul.f32 %v3172, %v281
        %v3174 = vmul.f32 %v3172, %v282
        %v3175 = vmul.f32 %v3172, %v283
        %v3179 = vrot.slane %v3173, 2
        %v3180 = vrot.slane %v3174, 2
        %v3181 = vsel %vm2199, %v3179, %v3180
        %v3182 = vrot.slane %v3175, 2
        %v3183 = vsel %vm2199, %v3180, %v3182
        %3184 = vrot.lane.b32.xlu0 %v3181, 126
        %v3185 = vpop.permute.xlu0 %3184
        %3186 = vrot.lane.b32.xlu0 %v3183, 126
        %v3187 = vpop.permute.xlu0 %3186
        %3188 = vrot.lane.b32.xlu0 %v3182, 126
        %v3189 = vpop.permute.xlu0 %3188
        %v3193 = vadd.f32 %v3093, %v3185
        %v3194 = vadd.f32 %v3094, %v3187
        %v3195 = vadd.f32 %v3095, %v3189
        %s3196 = sld [smem:[#allocation2 + $0x8c]]
        %v3197 = vstv %s3196
        %v3198 = vmul.f32 %v3197, %v284
        %v3199 = vmul.f32 %v3197, %v285
        %v3200 = vmul.f32 %v3197, %v286
        %v3204 = vrot.slane %v3198, 2
        %v3205 = vrot.slane %v3199, 2
        %v3206 = vsel %vm2199, %v3204, %v3205
        %v3207 = vrot.slane %v3200, 2
        %v3208 = vsel %vm2199, %v3205, %v3207
        %3209 = vrot.lane.b32.xlu0 %v3206, 126
        %v3210 = vpop.permute.xlu0 %3209
        %3211 = vrot.lane.b32.xlu0 %v3208, 126
        %v3212 = vpop.permute.xlu0 %3211
        %3213 = vrot.lane.b32.xlu0 %v3207, 126
        %v3214 = vpop.permute.xlu0 %3213
        %v3218 = vadd.f32 %v3118, %v3210
        %v3219 = vadd.f32 %v3119, %v3212
        %v3220 = vadd.f32 %v3120, %v3214
        %s3221 = sld [smem:[#allocation2 + $0x8d]]
        %v3222 = vstv %s3221
        %v3223 = vmul.f32 %v3222, %v284
        %v3224 = vmul.f32 %v3222, %v285
        %v3225 = vmul.f32 %v3222, %v286
        %v3229 = vrot.slane %v3223, 2
        %v3230 = vrot.slane %v3224, 2
        %v3231 = vsel %vm2199, %v3229, %v3230
        %v3232 = vrot.slane %v3225, 2
        %v3233 = vsel %vm2199, %v3230, %v3232
        %3234 = vrot.lane.b32.xlu0 %v3231, 126
        %v3235 = vpop.permute.xlu0 %3234
        %3236 = vrot.lane.b32.xlu0 %v3233, 126
        %v3237 = vpop.permute.xlu0 %3236
        %3238 = vrot.lane.b32.xlu0 %v3232, 126
        %v3239 = vpop.permute.xlu0 %3238
        %v3243 = vadd.f32 %v3143, %v3235
        %v3244 = vadd.f32 %v3144, %v3237
        %v3245 = vadd.f32 %v3145, %v3239
        %s3246 = sld [smem:[#allocation2 + $0x8e]]
        %v3247 = vstv %s3246
        %v3248 = vmul.f32 %v3247, %v284
        %v3249 = vmul.f32 %v3247, %v285
        %v3250 = vmul.f32 %v3247, %v286
        %v3254 = vrot.slane %v3248, 2
        %v3255 = vrot.slane %v3249, 2
        %v3256 = vsel %vm2199, %v3254, %v3255
        %v3257 = vrot.slane %v3250, 2
        %v3258 = vsel %vm2199, %v3255, %v3257
        %3259 = vrot.lane.b32.xlu0 %v3256, 126
        %v3260 = vpop.permute.xlu0 %3259
        %3261 = vrot.lane.b32.xlu0 %v3258, 126
        %v3262 = vpop.permute.xlu0 %3261
        %3263 = vrot.lane.b32.xlu0 %v3257, 126
        %v3264 = vpop.permute.xlu0 %3263
        %v3268 = vadd.f32 %v3168, %v3260
        %v3269 = vadd.f32 %v3169, %v3262
        %v3270 = vadd.f32 %v3170, %v3264
        %s3271 = sld [smem:[#allocation2 + $0x8f]]
        %v3272 = vstv %s3271
        %v3273 = vmul.f32 %v3272, %v284
        %v3274 = vmul.f32 %v3272, %v285
        %v3275 = vmul.f32 %v3272, %v286
        %v3279 = vrot.slane %v3273, 2
        %v3280 = vrot.slane %v3274, 2
        %v3281 = vsel %vm2199, %v3279, %v3280
        %v3282 = vrot.slane %v3275, 2
        %v3283 = vsel %vm2199, %v3280, %v3282
        %3284 = vrot.lane.b32.xlu0 %v3281, 126
        %v3285 = vpop.permute.xlu0 %3284
        %3286 = vrot.lane.b32.xlu0 %v3283, 126
        %v3287 = vpop.permute.xlu0 %3286
        %3288 = vrot.lane.b32.xlu0 %v3282, 126
        %v3289 = vpop.permute.xlu0 %3288
        %v3293 = vadd.f32 %v3193, %v3285
        %v3294 = vadd.f32 %v3194, %v3287
        %v3295 = vadd.f32 %v3195, %v3289
        %v3296 = vmax.f32 %v3218, 0.0
        %v3297 = vmax.f32 %v3219, 0.0
        %v3298 = vmax.f32 %v3220, 0.0
        %v3299 = vsel %vm307, %v3296, 0.0
        %v3300 = vsel %vm308, %v3297, 0.0
        %v3301 = vsel %vm309, %v3298, 0.0
        %v3302 = vmax.f32 %v3243, 0.0
        %v3303 = vmax.f32 %v3244, 0.0
        %v3304 = vmax.f32 %v3245, 0.0
        %v3305 = vsel %vm307, %v3302, 0.0
        %v3306 = vsel %vm308, %v3303, 0.0
        %v3307 = vsel %vm309, %v3304, 0.0
        %v3308 = vmax.f32 %v3268, 0.0
        %v3309 = vmax.f32 %v3269, 0.0
        %v3310 = vmax.f32 %v3270, 0.0
        %v3311 = vsel %vm307, %v3308, 0.0
        %v3312 = vsel %vm308, %v3309, 0.0
        %v3313 = vsel %vm309, %v3310, 0.0
        %v3314 = vmax.f32 %v3293, 0.0
        %v3315 = vmax.f32 %v3294, 0.0
        %v3316 = vmax.f32 %v3295, 0.0
        %v3317 = vsel %vm307, %v3314, 0.0
        %v3318 = vsel %vm308, %v3315, 0.0
        %v3319 = vsel %vm309, %v3316, 0.0
        %s3320 = sld [smem:[#allocation8]]
        %v3321 = vstv %s3320
        %s3322 = sld [smem:[#allocation8 + $0x1]]
        %v3323 = vstv %s3322
        %s3324 = sld [smem:[#allocation8 + $0x2]]
        %v3325 = vstv %s3324
        %s3326 = sld [smem:[#allocation8 + $0x3]]
        %v3327 = vstv %s3326
        %s3328 = sld [smem:[#allocation7]]
        %v3329 = vstv %s3328
        %v3330 = vmul.f32 %v3329, %v3299
        %v3331 = vmul.f32 %v3329, %v3300
        %v3332 = vadd.f32 %v3321, %v3330
        %v3333 = vadd.f32 %v3321, %v3331
        %s3334 = sld [smem:[#allocation7 + $0x1]]
        %v3335 = vstv %s3334
        %v3336 = vmul.f32 %v3335, %v3299
        %v3337 = vmul.f32 %v3335, %v3300
        %v3338 = vadd.f32 %v3323, %v3336
        %v3339 = vadd.f32 %v3323, %v3337
        %s3340 = sld [smem:[#allocation7 + $0x2]]
        %v3341 = vstv %s3340
        %v3342 = vmul.f32 %v3341, %v3299
        %v3343 = vmul.f32 %v3341, %v3300
        %v3344 = vadd.f32 %v3325, %v3342
        %v3345 = vadd.f32 %v3325, %v3343
        %s3346 = sld [smem:[#allocation7 + $0x3]]
        %v3347 = vstv %s3346
        %v3348 = vmul.f32 %v3347, %v3299
        %v3349 = vmul.f32 %v3347, %v3300
        %v3350 = vadd.f32 %v3327, %v3348
        %v3351 = vadd.f32 %v3327, %v3349
        %s3352 = sld [smem:[#allocation7 + $0x4]]
        %v3353 = vstv %s3352
        %v3354 = vmul.f32 %v3353, %v3305
        %v3355 = vmul.f32 %v3353, %v3306
        %v3356 = vadd.f32 %v3332, %v3354
        %v3357 = vadd.f32 %v3333, %v3355
        %s3358 = sld [smem:[#allocation7 + $0x5]]
        %v3359 = vstv %s3358
        %v3360 = vmul.f32 %v3359, %v3305
        %v3361 = vmul.f32 %v3359, %v3306
        %v3362 = vadd.f32 %v3338, %v3360
        %v3363 = vadd.f32 %v3339, %v3361
        %s3364 = sld [smem:[#allocation7 + $0x6]]
        %v3365 = vstv %s3364
        %v3366 = vmul.f32 %v3365, %v3305
        %v3367 = vmul.f32 %v3365, %v3306
        %v3368 = vadd.f32 %v3344, %v3366
        %v3369 = vadd.f32 %v3345, %v3367
        %s3370 = sld [smem:[#allocation7 + $0x7]]
        %v3371 = vstv %s3370
        %v3372 = vmul.f32 %v3371, %v3305
        %v3373 = vmul.f32 %v3371, %v3306
        %v3374 = vadd.f32 %v3350, %v3372
        %v3375 = vadd.f32 %v3351, %v3373
        %s3376 = sld [smem:[#allocation7 + $0x8]]
        %v3377 = vstv %s3376
        %v3378 = vmul.f32 %v3377, %v3311
        %v3379 = vmul.f32 %v3377, %v3312
        %v3380 = vadd.f32 %v3356, %v3378
        %v3381 = vadd.f32 %v3357, %v3379
        %s3382 = sld [smem:[#allocation7 + $0x9]]
        %v3383 = vstv %s3382
        %v3384 = vmul.f32 %v3383, %v3311
        %v3385 = vmul.f32 %v3383, %v3312
        %v3386 = vadd.f32 %v3362, %v3384
        %v3387 = vadd.f32 %v3363, %v3385
        %s3388 = sld [smem:[#allocation7 + $0xa]]
        %v3389 = vstv %s3388
        %v3390 = vmul.f32 %v3389, %v3311
        %v3391 = vmul.f32 %v3389, %v3312
        %v3392 = vadd.f32 %v3368, %v3390
        %v3393 = vadd.f32 %v3369, %v3391
        %s3394 = sld [smem:[#allocation7 + $0xb]]
        %v3395 = vstv %s3394
        %v3396 = vmul.f32 %v3395, %v3311
        %v3397 = vmul.f32 %v3395, %v3312
        %v3398 = vadd.f32 %v3374, %v3396
        %v3399 = vadd.f32 %v3375, %v3397
        %s3400 = sld [smem:[#allocation7 + $0xc]]
        %v3401 = vstv %s3400
        %v3402 = vmul.f32 %v3401, %v3317
        %v3403 = vmul.f32 %v3401, %v3318
        %v3404 = vadd.f32 %v3380, %v3402
        %v3405 = vadd.f32 %v3381, %v3403
        %s3406 = sld [smem:[#allocation7 + $0xd]]
        %v3407 = vstv %s3406
        %v3408 = vmul.f32 %v3407, %v3317
        %v3409 = vmul.f32 %v3407, %v3318
        %v3410 = vadd.f32 %v3386, %v3408
        %v3411 = vadd.f32 %v3387, %v3409
        %s3412 = sld [smem:[#allocation7 + $0xe]]
        %v3413 = vstv %s3412
        %v3414 = vmul.f32 %v3413, %v3317
        %v3415 = vmul.f32 %v3413, %v3318
        %v3416 = vadd.f32 %v3392, %v3414
        %v3417 = vadd.f32 %v3393, %v3415
        %s3418 = sld [smem:[#allocation7 + $0xf]]
        %v3419 = vstv %s3418
        %v3420 = vmul.f32 %v3419, %v3317
        %v3421 = vmul.f32 %v3419, %v3318
        %v3422 = vadd.f32 %v3398, %v3420
        %v3423 = vadd.f32 %v3399, %v3421
        %s3424 = sld [smem:[#allocation7 + $0x10]]
        %v3425 = vstv %s3424
        %v3426 = vmul.f32 %v3425, %v3299
        %v3427 = vmul.f32 %v3425, %v3300
        %3430 = vrot.lane.b32.xlu0 %v3426, 127
        %v3431 = vpop.permute.xlu0 %3430
        %3432 = vrot.lane.b32.xlu0 %v3427, 127
        %v3433 = vpop.permute.xlu0 %3432
        %v3436 = vadd.f32 %v3404, %v3431
        %v3437 = vadd.f32 %v3405, %v3433
        %s3438 = sld [smem:[#allocation7 + $0x11]]
        %v3439 = vstv %s3438
        %v3440 = vmul.f32 %v3439, %v3299
        %v3441 = vmul.f32 %v3439, %v3300
        %3444 = vrot.lane.b32.xlu0 %v3440, 127
        %v3445 = vpop.permute.xlu0 %3444
        %3446 = vrot.lane.b32.xlu0 %v3441, 127
        %v3447 = vpop.permute.xlu0 %3446
        %v3450 = vadd.f32 %v3410, %v3445
        %v3451 = vadd.f32 %v3411, %v3447
        %s3452 = sld [smem:[#allocation7 + $0x12]]
        %v3453 = vstv %s3452
        %v3454 = vmul.f32 %v3453, %v3299
        %v3455 = vmul.f32 %v3453, %v3300
        %3458 = vrot.lane.b32.xlu0 %v3454, 127
        %v3459 = vpop.permute.xlu0 %3458
        %3460 = vrot.lane.b32.xlu0 %v3455, 127
        %v3461 = vpop.permute.xlu0 %3460
        %v3464 = vadd.f32 %v3416, %v3459
        %v3465 = vadd.f32 %v3417, %v3461
        %s3466 = sld [smem:[#allocation7 + $0x13]]
        %v3467 = vstv %s3466
        %v3468 = vmul.f32 %v3467, %v3299
        %v3469 = vmul.f32 %v3467, %v3300
        %3472 = vrot.lane.b32.xlu0 %v3468, 127
        %v3473 = vpop.permute.xlu0 %3472
        %3474 = vrot.lane.b32.xlu0 %v3469, 127
        %v3475 = vpop.permute.xlu0 %3474
        %v3478 = vadd.f32 %v3422, %v3473
        %v3479 = vadd.f32 %v3423, %v3475
        %s3480 = sld [smem:[#allocation7 + $0x14]]
        %v3481 = vstv %s3480
        %v3482 = vmul.f32 %v3481, %v3305
        %v3483 = vmul.f32 %v3481, %v3306
        %3486 = vrot.lane.b32.xlu0 %v3482, 127
        %v3487 = vpop.permute.xlu0 %3486
        %3488 = vrot.lane.b32.xlu0 %v3483, 127
        %v3489 = vpop.permute.xlu0 %3488
        %v3492 = vadd.f32 %v3436, %v3487
        %v3493 = vadd.f32 %v3437, %v3489
        %s3494 = sld [smem:[#allocation7 + $0x15]]
        %v3495 = vstv %s3494
        %v3496 = vmul.f32 %v3495, %v3305
        %v3497 = vmul.f32 %v3495, %v3306
        %3500 = vrot.lane.b32.xlu0 %v3496, 127
        %v3501 = vpop.permute.xlu0 %3500
        %3502 = vrot.lane.b32.xlu0 %v3497, 127
        %v3503 = vpop.permute.xlu0 %3502
        %v3506 = vadd.f32 %v3450, %v3501
        %v3507 = vadd.f32 %v3451, %v3503
        %s3508 = sld [smem:[#allocation7 + $0x16]]
        %v3509 = vstv %s3508
        %v3510 = vmul.f32 %v3509, %v3305
        %v3511 = vmul.f32 %v3509, %v3306
        %3514 = vrot.lane.b32.xlu0 %v3510, 127
        %v3515 = vpop.permute.xlu0 %3514
        %3516 = vrot.lane.b32.xlu0 %v3511, 127
        %v3517 = vpop.permute.xlu0 %3516
        %v3520 = vadd.f32 %v3464, %v3515
        %v3521 = vadd.f32 %v3465, %v3517
        %s3522 = sld [smem:[#allocation7 + $0x17]]
        %v3523 = vstv %s3522
        %v3524 = vmul.f32 %v3523, %v3305
        %v3525 = vmul.f32 %v3523, %v3306
        %3528 = vrot.lane.b32.xlu0 %v3524, 127
        %v3529 = vpop.permute.xlu0 %3528
        %3530 = vrot.lane.b32.xlu0 %v3525, 127
        %v3531 = vpop.permute.xlu0 %3530
        %v3534 = vadd.f32 %v3478, %v3529
        %v3535 = vadd.f32 %v3479, %v3531
        %s3536 = sld [smem:[#allocation7 + $0x18]]
        %v3537 = vstv %s3536
        %v3538 = vmul.f32 %v3537, %v3311
        %v3539 = vmul.f32 %v3537, %v3312
        %3542 = vrot.lane.b32.xlu0 %v3538, 127
        %v3543 = vpop.permute.xlu0 %3542
        %3544 = vrot.lane.b32.xlu0 %v3539, 127
        %v3545 = vpop.permute.xlu0 %3544
        %v3548 = vadd.f32 %v3492, %v3543
        %v3549 = vadd.f32 %v3493, %v3545
        %s3550 = sld [smem:[#allocation7 + $0x19]]
        %v3551 = vstv %s3550
        %v3552 = vmul.f32 %v3551, %v3311
        %v3553 = vmul.f32 %v3551, %v3312
        %3556 = vrot.lane.b32.xlu0 %v3552, 127
        %v3557 = vpop.permute.xlu0 %3556
        %3558 = vrot.lane.b32.xlu0 %v3553, 127
        %v3559 = vpop.permute.xlu0 %3558
        %v3562 = vadd.f32 %v3506, %v3557
        %v3563 = vadd.f32 %v3507, %v3559
        %s3564 = sld [smem:[#allocation7 + $0x1a]]
        %v3565 = vstv %s3564
        %v3566 = vmul.f32 %v3565, %v3311
        %v3567 = vmul.f32 %v3565, %v3312
        %3570 = vrot.lane.b32.xlu0 %v3566, 127
        %v3571 = vpop.permute.xlu0 %3570
        %3572 = vrot.lane.b32.xlu0 %v3567, 127
        %v3573 = vpop.permute.xlu0 %3572
        %v3576 = vadd.f32 %v3520, %v3571
        %v3577 = vadd.f32 %v3521, %v3573
        %s3578 = sld [smem:[#allocation7 + $0x1b]]
        %v3579 = vstv %s3578
        %v3580 = vmul.f32 %v3579, %v3311
        %v3581 = vmul.f32 %v3579, %v3312
        %3584 = vrot.lane.b32.xlu0 %v3580, 127
        %v3585 = vpop.permute.xlu0 %3584
        %3586 = vrot.lane.b32.xlu0 %v3581, 127
        %v3587 = vpop.permute.xlu0 %3586
        %v3590 = vadd.f32 %v3534, %v3585
        %v3591 = vadd.f32 %v3535, %v3587
        %s3592 = sld [smem:[#allocation7 + $0x1c]]
        %v3593 = vstv %s3592
        %v3594 = vmul.f32 %v3593, %v3317
        %v3595 = vmul.f32 %v3593, %v3318
        %3598 = vrot.lane.b32.xlu0 %v3594, 127
        %v3599 = vpop.permute.xlu0 %3598
        %3600 = vrot.lane.b32.xlu0 %v3595, 127
        %v3601 = vpop.permute.xlu0 %3600
        %v3604 = vadd.f32 %v3548, %v3599
        %v3605 = vadd.f32 %v3549, %v3601
        %s3606 = sld [smem:[#allocation7 + $0x1d]]
        %v3607 = vstv %s3606
        %v3608 = vmul.f32 %v3607, %v3317
        %v3609 = vmul.f32 %v3607, %v3318
        %3612 = vrot.lane.b32.xlu0 %v3608, 127
        %v3613 = vpop.permute.xlu0 %3612
        %3614 = vrot.lane.b32.xlu0 %v3609, 127
        %v3615 = vpop.permute.xlu0 %3614
        %v3618 = vadd.f32 %v3562, %v3613
        %v3619 = vadd.f32 %v3563, %v3615
        %s3620 = sld [smem:[#allocation7 + $0x1e]]
        %v3621 = vstv %s3620
        %v3622 = vmul.f32 %v3621, %v3317
        %v3623 = vmul.f32 %v3621, %v3318
        %3626 = vrot.lane.b32.xlu0 %v3622, 127
        %v3627 = vpop.permute.xlu0 %3626
        %3628 = vrot.lane.b32.xlu0 %v3623, 127
        %v3629 = vpop.permute.xlu0 %3628
        %v3632 = vadd.f32 %v3576, %v3627
        %v3633 = vadd.f32 %v3577, %v3629
        %s3634 = sld [smem:[#allocation7 + $0x1f]]
        %v3635 = vstv %s3634
        %v3636 = vmul.f32 %v3635, %v3317
        %v3637 = vmul.f32 %v3635, %v3318
        %3640 = vrot.lane.b32.xlu0 %v3636, 127
        %v3641 = vpop.permute.xlu0 %3640
        %3642 = vrot.lane.b32.xlu0 %v3637, 127
        %v3643 = vpop.permute.xlu0 %3642
        %v3646 = vadd.f32 %v3590, %v3641
        %v3647 = vadd.f32 %v3591, %v3643
        %s3648 = sld [smem:[#allocation7 + $0x20]]
        %v3649 = vstv %s3648
        %v3650 = vmul.f32 %v3649, %v3299
        %v3651 = vmul.f32 %v3649, %v3300
        %3654 = vrot.lane.b32.xlu0 %v3650, 126
        %v3655 = vpop.permute.xlu0 %3654
        %3656 = vrot.lane.b32.xlu0 %v3651, 126
        %v3657 = vpop.permute.xlu0 %3656
        %v3660 = vadd.f32 %v3604, %v3655
        %v3661 = vadd.f32 %v3605, %v3657
        %s3662 = sld [smem:[#allocation7 + $0x21]]
        %v3663 = vstv %s3662
        %v3664 = vmul.f32 %v3663, %v3299
        %v3665 = vmul.f32 %v3663, %v3300
        %3668 = vrot.lane.b32.xlu0 %v3664, 126
        %v3669 = vpop.permute.xlu0 %3668
        %3670 = vrot.lane.b32.xlu0 %v3665, 126
        %v3671 = vpop.permute.xlu0 %3670
        %v3674 = vadd.f32 %v3618, %v3669
        %v3675 = vadd.f32 %v3619, %v3671
        %s3676 = sld [smem:[#allocation7 + $0x22]]
        %v3677 = vstv %s3676
        %v3678 = vmul.f32 %v3677, %v3299
        %v3679 = vmul.f32 %v3677, %v3300
        %3682 = vrot.lane.b32.xlu0 %v3678, 126
        %v3683 = vpop.permute.xlu0 %3682
        %3684 = vrot.lane.b32.xlu0 %v3679, 126
        %v3685 = vpop.permute.xlu0 %3684
        %v3688 = vadd.f32 %v3632, %v3683
        %v3689 = vadd.f32 %v3633, %v3685
        %s3690 = sld [smem:[#allocation7 + $0x23]]
        %v3691 = vstv %s3690
        %v3692 = vmul.f32 %v3691, %v3299
        %v3693 = vmul.f32 %v3691, %v3300
        %3696 = vrot.lane.b32.xlu0 %v3692, 126
        %v3697 = vpop.permute.xlu0 %3696
        %3698 = vrot.lane.b32.xlu0 %v3693, 126
        %v3699 = vpop.permute.xlu0 %3698
        %v3702 = vadd.f32 %v3646, %v3697
        %v3703 = vadd.f32 %v3647, %v3699
        %s3704 = sld [smem:[#allocation7 + $0x24]]
        %v3705 = vstv %s3704
        %v3706 = vmul.f32 %v3705, %v3305
        %v3707 = vmul.f32 %v3705, %v3306
        %3710 = vrot.lane.b32.xlu0 %v3706, 126
        %v3711 = vpop.permute.xlu0 %3710
        %3712 = vrot.lane.b32.xlu0 %v3707, 126
        %v3713 = vpop.permute.xlu0 %3712
        %v3716 = vadd.f32 %v3660, %v3711
        %v3717 = vadd.f32 %v3661, %v3713
        %s3718 = sld [smem:[#allocation7 + $0x25]]
        %v3719 = vstv %s3718
        %v3720 = vmul.f32 %v3719, %v3305
        %v3721 = vmul.f32 %v3719, %v3306
        %3724 = vrot.lane.b32.xlu0 %v3720, 126
        %v3725 = vpop.permute.xlu0 %3724
        %3726 = vrot.lane.b32.xlu0 %v3721, 126
        %v3727 = vpop.permute.xlu0 %3726
        %v3730 = vadd.f32 %v3674, %v3725
        %v3731 = vadd.f32 %v3675, %v3727
        %s3732 = sld [smem:[#allocation7 + $0x26]]
        %v3733 = vstv %s3732
        %v3734 = vmul.f32 %v3733, %v3305
        %v3735 = vmul.f32 %v3733, %v3306
        %3738 = vrot.lane.b32.xlu0 %v3734, 126
        %v3739 = vpop.permute.xlu0 %3738
        %3740 = vrot.lane.b32.xlu0 %v3735, 126
        %v3741 = vpop.permute.xlu0 %3740
        %v3744 = vadd.f32 %v3688, %v3739
        %v3745 = vadd.f32 %v3689, %v3741
        %s3746 = sld [smem:[#allocation7 + $0x27]]
        %v3747 = vstv %s3746
        %v3748 = vmul.f32 %v3747, %v3305
        %v3749 = vmul.f32 %v3747, %v3306
        %3752 = vrot.lane.b32.xlu0 %v3748, 126
        %v3753 = vpop.permute.xlu0 %3752
        %3754 = vrot.lane.b32.xlu0 %v3749, 126
        %v3755 = vpop.permute.xlu0 %3754
        %v3758 = vadd.f32 %v3702, %v3753
        %v3759 = vadd.f32 %v3703, %v3755
        %s3760 = sld [smem:[#allocation7 + $0x28]]
        %v3761 = vstv %s3760
        %v3762 = vmul.f32 %v3761, %v3311
        %v3763 = vmul.f32 %v3761, %v3312
        %3766 = vrot.lane.b32.xlu0 %v3762, 126
        %v3767 = vpop.permute.xlu0 %3766
        %3768 = vrot.lane.b32.xlu0 %v3763, 126
        %v3769 = vpop.permute.xlu0 %3768
        %v3772 = vadd.f32 %v3716, %v3767
        %v3773 = vadd.f32 %v3717, %v3769
        %s3774 = sld [smem:[#allocation7 + $0x29]]
        %v3775 = vstv %s3774
        %v3776 = vmul.f32 %v3775, %v3311
        %v3777 = vmul.f32 %v3775, %v3312
        %3780 = vrot.lane.b32.xlu0 %v3776, 126
        %v3781 = vpop.permute.xlu0 %3780
        %3782 = vrot.lane.b32.xlu0 %v3777, 126
        %v3783 = vpop.permute.xlu0 %3782
        %v3786 = vadd.f32 %v3730, %v3781
        %v3787 = vadd.f32 %v3731, %v3783
        %s3788 = sld [smem:[#allocation7 + $0x2a]]
        %v3789 = vstv %s3788
        %v3790 = vmul.f32 %v3789, %v3311
        %v3791 = vmul.f32 %v3789, %v3312
        %3794 = vrot.lane.b32.xlu0 %v3790, 126
        %v3795 = vpop.permute.xlu0 %3794
        %3796 = vrot.lane.b32.xlu0 %v3791, 126
        %v3797 = vpop.permute.xlu0 %3796
        %v3800 = vadd.f32 %v3744, %v3795
        %v3801 = vadd.f32 %v3745, %v3797
        %s3802 = sld [smem:[#allocation7 + $0x2b]]
        %v3803 = vstv %s3802
        %v3804 = vmul.f32 %v3803, %v3311
        %v3805 = vmul.f32 %v3803, %v3312
        %3808 = vrot.lane.b32.xlu0 %v3804, 126
        %v3809 = vpop.permute.xlu0 %3808
        %3810 = vrot.lane.b32.xlu0 %v3805, 126
        %v3811 = vpop.permute.xlu0 %3810
        %v3814 = vadd.f32 %v3758, %v3809
        %v3815 = vadd.f32 %v3759, %v3811
        %s3816 = sld [smem:[#allocation7 + $0x2c]]
        %v3817 = vstv %s3816
        %v3818 = vmul.f32 %v3817, %v3317
        %v3819 = vmul.f32 %v3817, %v3318
        %3822 = vrot.lane.b32.xlu0 %v3818, 126
        %v3823 = vpop.permute.xlu0 %3822
        %3824 = vrot.lane.b32.xlu0 %v3819, 126
        %v3825 = vpop.permute.xlu0 %3824
        %v3828 = vadd.f32 %v3772, %v3823
        %v3829 = vadd.f32 %v3773, %v3825
        %s3830 = sld [smem:[#allocation7 + $0x2d]]
        %v3831 = vstv %s3830
        %v3832 = vmul.f32 %v3831, %v3317
        %v3833 = vmul.f32 %v3831, %v3318
        %3836 = vrot.lane.b32.xlu0 %v3832, 126
        %v3837 = vpop.permute.xlu0 %3836
        %3838 = vrot.lane.b32.xlu0 %v3833, 126
        %v3839 = vpop.permute.xlu0 %3838
        %v3842 = vadd.f32 %v3786, %v3837
        %v3843 = vadd.f32 %v3787, %v3839
        %s3844 = sld [smem:[#allocation7 + $0x2e]]
        %v3845 = vstv %s3844
        %v3846 = vmul.f32 %v3845, %v3317
        %v3847 = vmul.f32 %v3845, %v3318
        %3850 = vrot.lane.b32.xlu0 %v3846, 126
        %v3851 = vpop.permute.xlu0 %3850
        %3852 = vrot.lane.b32.xlu0 %v3847, 126
        %v3853 = vpop.permute.xlu0 %3852
        %v3856 = vadd.f32 %v3800, %v3851
        %v3857 = vadd.f32 %v3801, %v3853
        %s3858 = sld [smem:[#allocation7 + $0x2f]]
        %v3859 = vstv %s3858
        %v3860 = vmul.f32 %v3859, %v3317
        %v3861 = vmul.f32 %v3859, %v3318
        %3864 = vrot.lane.b32.xlu0 %v3860, 126
        %v3865 = vpop.permute.xlu0 %3864
        %3866 = vrot.lane.b32.xlu0 %v3861, 126
        %v3867 = vpop.permute.xlu0 %3866
        %v3870 = vadd.f32 %v3814, %v3865
        %v3871 = vadd.f32 %v3815, %v3867
        %s3872 = sld [smem:[#allocation7 + $0x30]]
        %v3873 = vstv %s3872
        %v3874 = vmul.f32 %v3873, %v3299
        %v3875 = vmul.f32 %v3873, %v3300
        %v3876 = vmul.f32 %v3873, %v3301
        %v3880 = vrot.slane %v3874, 1
        %v3881 = vrot.slane %v3875, 1
        %v3882 = vsel %vm1094, %v3880, %v3881
        %v3883 = vrot.slane %v3876, 1
        %v3884 = vsel %vm1094, %v3881, %v3883
        %v3887 = vadd.f32 %v3828, %v3882
        %v3888 = vadd.f32 %v3829, %v3884
        %s3889 = sld [smem:[#allocation7 + $0x31]]
        %v3890 = vstv %s3889
        %v3891 = vmul.f32 %v3890, %v3299
        %v3892 = vmul.f32 %v3890, %v3300
        %v3893 = vmul.f32 %v3890, %v3301
        %v3897 = vrot.slane %v3891, 1
        %v3898 = vrot.slane %v3892, 1
        %v3899 = vsel %vm1094, %v3897, %v3898
        %v3900 = vrot.slane %v3893, 1
        %v3901 = vsel %vm1094, %v3898, %v3900
        %v3904 = vadd.f32 %v3842, %v3899
        %v3905 = vadd.f32 %v3843, %v3901
        %s3906 = sld [smem:[#allocation7 + $0x32]]
        %v3907 = vstv %s3906
        %v3908 = vmul.f32 %v3907, %v3299
        %v3909 = vmul.f32 %v3907, %v3300
        %v3910 = vmul.f32 %v3907, %v3301
        %v3914 = vrot.slane %v3908, 1
        %v3915 = vrot.slane %v3909, 1
        %v3916 = vsel %vm1094, %v3914, %v3915
        %v3917 = vrot.slane %v3910, 1
        %v3918 = vsel %vm1094, %v3915, %v3917
        %v3921 = vadd.f32 %v3856, %v3916
        %v3922 = vadd.f32 %v3857, %v3918
        %s3923 = sld [smem:[#allocation7 + $0x33]]
        %v3924 = vstv %s3923
        %v3925 = vmul.f32 %v3924, %v3299
        %v3926 = vmul.f32 %v3924, %v3300
        %v3927 = vmul.f32 %v3924, %v3301
        %v3931 = vrot.slane %v3925, 1
        %v3932 = vrot.slane %v3926, 1
        %v3933 = vsel %vm1094, %v3931, %v3932
        %v3934 = vrot.slane %v3927, 1
        %v3935 = vsel %vm1094, %v3932, %v3934
        %v3938 = vadd.f32 %v3870, %v3933
        %v3939 = vadd.f32 %v3871, %v3935
        %s3940 = sld [smem:[#allocation7 + $0x34]]
        %v3941 = vstv %s3940
        %v3942 = vmul.f32 %v3941, %v3305
        %v3943 = vmul.f32 %v3941, %v3306
        %v3944 = vmul.f32 %v3941, %v3307
        %v3948 = vrot.slane %v3942, 1
        %v3949 = vrot.slane %v3943, 1
        %v3950 = vsel %vm1094, %v3948, %v3949
        %v3951 = vrot.slane %v3944, 1
        %v3952 = vsel %vm1094, %v3949, %v3951
        %v3955 = vadd.f32 %v3887, %v3950
        %v3956 = vadd.f32 %v3888, %v3952
        %s3957 = sld [smem:[#allocation7 + $0x35]]
        %v3958 = vstv %s3957
        %v3959 = vmul.f32 %v3958, %v3305
        %v3960 = vmul.f32 %v3958, %v3306
        %v3961 = vmul.f32 %v3958, %v3307
        %v3965 = vrot.slane %v3959, 1
        %v3966 = vrot.slane %v3960, 1
        %v3967 = vsel %vm1094, %v3965, %v3966
        %v3968 = vrot.slane %v3961, 1
        %v3969 = vsel %vm1094, %v3966, %v3968
        %v3972 = vadd.f32 %v3904, %v3967
        %v3973 = vadd.f32 %v3905, %v3969
        %s3974 = sld [smem:[#allocation7 + $0x36]]
        %v3975 = vstv %s3974
        %v3976 = vmul.f32 %v3975, %v3305
        %v3977 = vmul.f32 %v3975, %v3306
        %v3978 = vmul.f32 %v3975, %v3307
        %v3982 = vrot.slane %v3976, 1
        %v3983 = vrot.slane %v3977, 1
        %v3984 = vsel %vm1094, %v3982, %v3983
        %v3985 = vrot.slane %v3978, 1
        %v3986 = vsel %vm1094, %v3983, %v3985
        %v3989 = vadd.f32 %v3921, %v3984
        %v3990 = vadd.f32 %v3922, %v3986
        %s3991 = sld [smem:[#allocation7 + $0x37]]
        %v3992 = vstv %s3991
        %v3993 = vmul.f32 %v3992, %v3305
        %v3994 = vmul.f32 %v3992, %v3306
        %v3995 = vmul.f32 %v3992, %v3307
        %v3999 = vrot.slane %v3993, 1
        %v4000 = vrot.slane %v3994, 1
        %v4001 = vsel %vm1094, %v3999, %v4000
        %v4002 = vrot.slane %v3995, 1
        %v4003 = vsel %vm1094, %v4000, %v4002
        %v4006 = vadd.f32 %v3938, %v4001
        %v4007 = vadd.f32 %v3939, %v4003
        %s4008 = sld [smem:[#allocation7 + $0x38]]
        %v4009 = vstv %s4008
        %v4010 = vmul.f32 %v4009, %v3311
        %v4011 = vmul.f32 %v4009, %v3312
        %v4012 = vmul.f32 %v4009, %v3313
        %v4016 = vrot.slane %v4010, 1
        %v4017 = vrot.slane %v4011, 1
        %v4018 = vsel %vm1094, %v4016, %v4017
        %v4019 = vrot.slane %v4012, 1
        %v4020 = vsel %vm1094, %v4017, %v4019
        %v4023 = vadd.f32 %v3955, %v4018
        %v4024 = vadd.f32 %v3956, %v4020
        %s4025 = sld [smem:[#allocation7 + $0x39]]
        %v4026 = vstv %s4025
        %v4027 = vmul.f32 %v4026, %v3311
        %v4028 = vmul.f32 %v4026, %v3312
        %v4029 = vmul.f32 %v4026, %v3313
        %v4033 = vrot.slane %v4027, 1
        %v4034 = vrot.slane %v4028, 1
        %v4035 = vsel %vm1094, %v4033, %v4034
        %v4036 = vrot.slane %v4029, 1
        %v4037 = vsel %vm1094, %v4034, %v4036
        %v4040 = vadd.f32 %v3972, %v4035
        %v4041 = vadd.f32 %v3973, %v4037
        %s4042 = sld [smem:[#allocation7 + $0x3a]]
        %v4043 = vstv %s4042
        %v4044 = vmul.f32 %v4043, %v3311
        %v4045 = vmul.f32 %v4043, %v3312
        %v4046 = vmul.f32 %v4043, %v3313
        %v4050 = vrot.slane %v4044, 1
        %v4051 = vrot.slane %v4045, 1
        %v4052 = vsel %vm1094, %v4050, %v4051
        %v4053 = vrot.slane %v4046, 1
        %v4054 = vsel %vm1094, %v4051, %v4053
        %v4057 = vadd.f32 %v3989, %v4052
        %v4058 = vadd.f32 %v3990, %v4054
        %s4059 = sld [smem:[#allocation7 + $0x3b]]
        %v4060 = vstv %s4059
        %v4061 = vmul.f32 %v4060, %v3311
        %v4062 = vmul.f32 %v4060, %v3312
        %v4063 = vmul.f32 %v4060, %v3313
        %v4067 = vrot.slane %v4061, 1
        %v4068 = vrot.slane %v4062, 1
        %v4069 = vsel %vm1094, %v4067, %v4068
        %v4070 = vrot.slane %v4063, 1
        %v4071 = vsel %vm1094, %v4068, %v4070
        %v4074 = vadd.f32 %v4006, %v4069
        %v4075 = vadd.f32 %v4007, %v4071
        %s4076 = sld [smem:[#allocation7 + $0x3c]]
        %v4077 = vstv %s4076
        %v4078 = vmul.f32 %v4077, %v3317
        %v4079 = vmul.f32 %v4077, %v3318
        %v4080 = vmul.f32 %v4077, %v3319
        %v4084 = vrot.slane %v4078, 1
        %v4085 = vrot.slane %v4079, 1
        %v4086 = vsel %vm1094, %v4084, %v4085
        %v4087 = vrot.slane %v4080, 1
        %v4088 = vsel %vm1094, %v4085, %v4087
        %v4091 = vadd.f32 %v4023, %v4086
        %v4092 = vadd.f32 %v4024, %v4088
        %s4093 = sld [smem:[#allocation7 + $0x3d]]
        %v4094 = vstv %s4093
        %v4095 = vmul.f32 %v4094, %v3317
        %v4096 = vmul.f32 %v4094, %v3318
        %v4097 = vmul.f32 %v4094, %v3319
        %v4101 = vrot.slane %v4095, 1
        %v4102 = vrot.slane %v4096, 1
        %v4103 = vsel %vm1094, %v4101, %v4102
        %v4104 = vrot.slane %v4097, 1
        %v4105 = vsel %vm1094, %v4102, %v4104
        %v4108 = vadd.f32 %v4040, %v4103
        %v4109 = vadd.f32 %v4041, %v4105
        %s4110 = sld [smem:[#allocation7 + $0x3e]]
        %v4111 = vstv %s4110
        %v4112 = vmul.f32 %v4111, %v3317
        %v4113 = vmul.f32 %v4111, %v3318
        %v4114 = vmul.f32 %v4111, %v3319
        %v4118 = vrot.slane %v4112, 1
        %v4119 = vrot.slane %v4113, 1
        %v4120 = vsel %vm1094, %v4118, %v4119
        %v4121 = vrot.slane %v4114, 1
        %v4122 = vsel %vm1094, %v4119, %v4121
        %v4125 = vadd.f32 %v4057, %v4120
        %v4126 = vadd.f32 %v4058, %v4122
        %s4127 = sld [smem:[#allocation7 + $0x3f]]
        %v4128 = vstv %s4127
        %v4129 = vmul.f32 %v4128, %v3317
        %v4130 = vmul.f32 %v4128, %v3318
        %v4131 = vmul.f32 %v4128, %v3319
        %v4135 = vrot.slane %v4129, 1
        %v4136 = vrot.slane %v4130, 1
        %v4137 = vsel %vm1094, %v4135, %v4136
        %v4138 = vrot.slane %v4131, 1
        %v4139 = vsel %vm1094, %v4136, %v4138
        %v4142 = vadd.f32 %v4074, %v4137
        %v4143 = vadd.f32 %v4075, %v4139
        %s4144 = sld [smem:[#allocation7 + $0x40]]
        %v4145 = vstv %s4144
        %v4146 = vmul.f32 %v4145, %v3299
        %v4147 = vmul.f32 %v4145, %v3300
        %v4148 = vmul.f32 %v4145, %v3301
        %v4152 = vrot.slane %v4146, 1
        %v4153 = vrot.slane %v4147, 1
        %v4154 = vsel %vm1094, %v4152, %v4153
        %v4155 = vrot.slane %v4148, 1
        %v4156 = vsel %vm1094, %v4153, %v4155
        %4157 = vrot.lane.b32.xlu0 %v4154, 127
        %v4158 = vpop.permute.xlu0 %4157
        %4159 = vrot.lane.b32.xlu0 %v4156, 127
        %v4160 = vpop.permute.xlu0 %4159
        %v4163 = vadd.f32 %v4091, %v4158
        %v4164 = vadd.f32 %v4092, %v4160
        %s4165 = sld [smem:[#allocation7 + $0x41]]
        %v4166 = vstv %s4165
        %v4167 = vmul.f32 %v4166, %v3299
        %v4168 = vmul.f32 %v4166, %v3300
        %v4169 = vmul.f32 %v4166, %v3301
        %v4173 = vrot.slane %v4167, 1
        %v4174 = vrot.slane %v4168, 1
        %v4175 = vsel %vm1094, %v4173, %v4174
        %v4176 = vrot.slane %v4169, 1
        %v4177 = vsel %vm1094, %v4174, %v4176
        %4178 = vrot.lane.b32.xlu0 %v4175, 127
        %v4179 = vpop.permute.xlu0 %4178
        %4180 = vrot.lane.b32.xlu0 %v4177, 127
        %v4181 = vpop.permute.xlu0 %4180
        %v4184 = vadd.f32 %v4108, %v4179
        %v4185 = vadd.f32 %v4109, %v4181
        %s4186 = sld [smem:[#allocation7 + $0x42]]
        %v4187 = vstv %s4186
        %v4188 = vmul.f32 %v4187, %v3299
        %v4189 = vmul.f32 %v4187, %v3300
        %v4190 = vmul.f32 %v4187, %v3301
        %v4194 = vrot.slane %v4188, 1
        %v4195 = vrot.slane %v4189, 1
        %v4196 = vsel %vm1094, %v4194, %v4195
        %v4197 = vrot.slane %v4190, 1
        %v4198 = vsel %vm1094, %v4195, %v4197
        %4199 = vrot.lane.b32.xlu0 %v4196, 127
        %v4200 = vpop.permute.xlu0 %4199
        %4201 = vrot.lane.b32.xlu0 %v4198, 127
        %v4202 = vpop.permute.xlu0 %4201
        %v4205 = vadd.f32 %v4125, %v4200
        %v4206 = vadd.f32 %v4126, %v4202
        %s4207 = sld [smem:[#allocation7 + $0x43]]
        %v4208 = vstv %s4207
        %v4209 = vmul.f32 %v4208, %v3299
        %v4210 = vmul.f32 %v4208, %v3300
        %v4211 = vmul.f32 %v4208, %v3301
        %v4215 = vrot.slane %v4209, 1
        %v4216 = vrot.slane %v4210, 1
        %v4217 = vsel %vm1094, %v4215, %v4216
        %v4218 = vrot.slane %v4211, 1
        %v4219 = vsel %vm1094, %v4216, %v4218
        %4220 = vrot.lane.b32.xlu0 %v4217, 127
        %v4221 = vpop.permute.xlu0 %4220
        %4222 = vrot.lane.b32.xlu0 %v4219, 127
        %v4223 = vpop.permute.xlu0 %4222
        %v4226 = vadd.f32 %v4142, %v4221
        %v4227 = vadd.f32 %v4143, %v4223
        %s4228 = sld [smem:[#allocation7 + $0x44]]
        %v4229 = vstv %s4228
        %v4230 = vmul.f32 %v4229, %v3305
        %v4231 = vmul.f32 %v4229, %v3306
        %v4232 = vmul.f32 %v4229, %v3307
        %v4236 = vrot.slane %v4230, 1
        %v4237 = vrot.slane %v4231, 1
        %v4238 = vsel %vm1094, %v4236, %v4237
        %v4239 = vrot.slane %v4232, 1
        %v4240 = vsel %vm1094, %v4237, %v4239
        %4241 = vrot.lane.b32.xlu0 %v4238, 127
        %v4242 = vpop.permute.xlu0 %4241
        %4243 = vrot.lane.b32.xlu0 %v4240, 127
        %v4244 = vpop.permute.xlu0 %4243
        %v4247 = vadd.f32 %v4163, %v4242
        %v4248 = vadd.f32 %v4164, %v4244
        %s4249 = sld [smem:[#allocation7 + $0x45]]
        %v4250 = vstv %s4249
        %v4251 = vmul.f32 %v4250, %v3305
        %v4252 = vmul.f32 %v4250, %v3306
        %v4253 = vmul.f32 %v4250, %v3307
        %v4257 = vrot.slane %v4251, 1
        %v4258 = vrot.slane %v4252, 1
        %v4259 = vsel %vm1094, %v4257, %v4258
        %v4260 = vrot.slane %v4253, 1
        %v4261 = vsel %vm1094, %v4258, %v4260
        %4262 = vrot.lane.b32.xlu0 %v4259, 127
        %v4263 = vpop.permute.xlu0 %4262
        %4264 = vrot.lane.b32.xlu0 %v4261, 127
        %v4265 = vpop.permute.xlu0 %4264
        %v4268 = vadd.f32 %v4184, %v4263
        %v4269 = vadd.f32 %v4185, %v4265
        %s4270 = sld [smem:[#allocation7 + $0x46]]
        %v4271 = vstv %s4270
        %v4272 = vmul.f32 %v4271, %v3305
        %v4273 = vmul.f32 %v4271, %v3306
        %v4274 = vmul.f32 %v4271, %v3307
        %v4278 = vrot.slane %v4272, 1
        %v4279 = vrot.slane %v4273, 1
        %v4280 = vsel %vm1094, %v4278, %v4279
        %v4281 = vrot.slane %v4274, 1
        %v4282 = vsel %vm1094, %v4279, %v4281
        %4283 = vrot.lane.b32.xlu0 %v4280, 127
        %v4284 = vpop.permute.xlu0 %4283
        %4285 = vrot.lane.b32.xlu0 %v4282, 127
        %v4286 = vpop.permute.xlu0 %4285
        %v4289 = vadd.f32 %v4205, %v4284
        %v4290 = vadd.f32 %v4206, %v4286
        %s4291 = sld [smem:[#allocation7 + $0x47]]
        %v4292 = vstv %s4291
        %v4293 = vmul.f32 %v4292, %v3305
        %v4294 = vmul.f32 %v4292, %v3306
        %v4295 = vmul.f32 %v4292, %v3307
        %v4299 = vrot.slane %v4293, 1
        %v4300 = vrot.slane %v4294, 1
        %v4301 = vsel %vm1094, %v4299, %v4300
        %v4302 = vrot.slane %v4295, 1
        %v4303 = vsel %vm1094, %v4300, %v4302
        %4304 = vrot.lane.b32.xlu0 %v4301, 127
        %v4305 = vpop.permute.xlu0 %4304
        %4306 = vrot.lane.b32.xlu0 %v4303, 127
        %v4307 = vpop.permute.xlu0 %4306
        %v4310 = vadd.f32 %v4226, %v4305
        %v4311 = vadd.f32 %v4227, %v4307
        %s4312 = sld [smem:[#allocation7 + $0x48]]
        %v4313 = vstv %s4312
        %v4314 = vmul.f32 %v4313, %v3311
        %v4315 = vmul.f32 %v4313, %v3312
        %v4316 = vmul.f32 %v4313, %v3313
        %v4320 = vrot.slane %v4314, 1
        %v4321 = vrot.slane %v4315, 1
        %v4322 = vsel %vm1094, %v4320, %v4321
        %v4323 = vrot.slane %v4316, 1
        %v4324 = vsel %vm1094, %v4321, %v4323
        %4325 = vrot.lane.b32.xlu0 %v4322, 127
        %v4326 = vpop.permute.xlu0 %4325
        %4327 = vrot.lane.b32.xlu0 %v4324, 127
        %v4328 = vpop.permute.xlu0 %4327
        %v4331 = vadd.f32 %v4247, %v4326
        %v4332 = vadd.f32 %v4248, %v4328
        %s4333 = sld [smem:[#allocation7 + $0x49]]
        %v4334 = vstv %s4333
        %v4335 = vmul.f32 %v4334, %v3311
        %v4336 = vmul.f32 %v4334, %v3312
        %v4337 = vmul.f32 %v4334, %v3313
        %v4341 = vrot.slane %v4335, 1
        %v4342 = vrot.slane %v4336, 1
        %v4343 = vsel %vm1094, %v4341, %v4342
        %v4344 = vrot.slane %v4337, 1
        %v4345 = vsel %vm1094, %v4342, %v4344
        %4346 = vrot.lane.b32.xlu0 %v4343, 127
        %v4347 = vpop.permute.xlu0 %4346
        %4348 = vrot.lane.b32.xlu0 %v4345, 127
        %v4349 = vpop.permute.xlu0 %4348
        %v4352 = vadd.f32 %v4268, %v4347
        %v4353 = vadd.f32 %v4269, %v4349
        %s4354 = sld [smem:[#allocation7 + $0x4a]]
        %v4355 = vstv %s4354
        %v4356 = vmul.f32 %v4355, %v3311
        %v4357 = vmul.f32 %v4355, %v3312
        %v4358 = vmul.f32 %v4355, %v3313
        %v4362 = vrot.slane %v4356, 1
        %v4363 = vrot.slane %v4357, 1
        %v4364 = vsel %vm1094, %v4362, %v4363
        %v4365 = vrot.slane %v4358, 1
        %v4366 = vsel %vm1094, %v4363, %v4365
        %4367 = vrot.lane.b32.xlu0 %v4364, 127
        %v4368 = vpop.permute.xlu0 %4367
        %4369 = vrot.lane.b32.xlu0 %v4366, 127
        %v4370 = vpop.permute.xlu0 %4369
        %v4373 = vadd.f32 %v4289, %v4368
        %v4374 = vadd.f32 %v4290, %v4370
        %s4375 = sld [smem:[#allocation7 + $0x4b]]
        %v4376 = vstv %s4375
        %v4377 = vmul.f32 %v4376, %v3311
        %v4378 = vmul.f32 %v4376, %v3312
        %v4379 = vmul.f32 %v4376, %v3313
        %v4383 = vrot.slane %v4377, 1
        %v4384 = vrot.slane %v4378, 1
        %v4385 = vsel %vm1094, %v4383, %v4384
        %v4386 = vrot.slane %v4379, 1
        %v4387 = vsel %vm1094, %v4384, %v4386
        %4388 = vrot.lane.b32.xlu0 %v4385, 127
        %v4389 = vpop.permute.xlu0 %4388
        %4390 = vrot.lane.b32.xlu0 %v4387, 127
        %v4391 = vpop.permute.xlu0 %4390
        %v4394 = vadd.f32 %v4310, %v4389
        %v4395 = vadd.f32 %v4311, %v4391
        %s4396 = sld [smem:[#allocation7 + $0x4c]]
        %v4397 = vstv %s4396
        %v4398 = vmul.f32 %v4397, %v3317
        %v4399 = vmul.f32 %v4397, %v3318
        %v4400 = vmul.f32 %v4397, %v3319
        %v4404 = vrot.slane %v4398, 1
        %v4405 = vrot.slane %v4399, 1
        %v4406 = vsel %vm1094, %v4404, %v4405
        %v4407 = vrot.slane %v4400, 1
        %v4408 = vsel %vm1094, %v4405, %v4407
        %4409 = vrot.lane.b32.xlu0 %v4406, 127
        %v4410 = vpop.permute.xlu0 %4409
        %4411 = vrot.lane.b32.xlu0 %v4408, 127
        %v4412 = vpop.permute.xlu0 %4411
        %v4415 = vadd.f32 %v4331, %v4410
        %v4416 = vadd.f32 %v4332, %v4412
        %s4417 = sld [smem:[#allocation7 + $0x4d]]
        %v4418 = vstv %s4417
        %v4419 = vmul.f32 %v4418, %v3317
        %v4420 = vmul.f32 %v4418, %v3318
        %v4421 = vmul.f32 %v4418, %v3319
        %v4425 = vrot.slane %v4419, 1
        %v4426 = vrot.slane %v4420, 1
        %v4427 = vsel %vm1094, %v4425, %v4426
        %v4428 = vrot.slane %v4421, 1
        %v4429 = vsel %vm1094, %v4426, %v4428
        %4430 = vrot.lane.b32.xlu0 %v4427, 127
        %v4431 = vpop.permute.xlu0 %4430
        %4432 = vrot.lane.b32.xlu0 %v4429, 127
        %v4433 = vpop.permute.xlu0 %4432
        %v4436 = vadd.f32 %v4352, %v4431
        %v4437 = vadd.f32 %v4353, %v4433
        %s4438 = sld [smem:[#allocation7 + $0x4e]]
        %v4439 = vstv %s4438
        %v4440 = vmul.f32 %v4439, %v3317
        %v4441 = vmul.f32 %v4439, %v3318
        %v4442 = vmul.f32 %v4439, %v3319
        %v4446 = vrot.slane %v4440, 1
        %v4447 = vrot.slane %v4441, 1
        %v4448 = vsel %vm1094, %v4446, %v4447
        %v4449 = vrot.slane %v4442, 1
        %v4450 = vsel %vm1094, %v4447, %v4449
        %4451 = vrot.lane.b32.xlu0 %v4448, 127
        %v4452 = vpop.permute.xlu0 %4451
        %4453 = vrot.lane.b32.xlu0 %v4450, 127
        %v4454 = vpop.permute.xlu0 %4453
        %v4457 = vadd.f32 %v4373, %v4452
        %v4458 = vadd.f32 %v4374, %v4454
        %s4459 = sld [smem:[#allocation7 + $0x4f]]
        %v4460 = vstv %s4459
        %v4461 = vmul.f32 %v4460, %v3317
        %v4462 = vmul.f32 %v4460, %v3318
        %v4463 = vmul.f32 %v4460, %v3319
        %v4467 = vrot.slane %v4461, 1
        %v4468 = vrot.slane %v4462, 1
        %v4469 = vsel %vm1094, %v4467, %v4468
        %v4470 = vrot.slane %v4463, 1
        %v4471 = vsel %vm1094, %v4468, %v4470
        %4472 = vrot.lane.b32.xlu0 %v4469, 127
        %v4473 = vpop.permute.xlu0 %4472
        %4474 = vrot.lane.b32.xlu0 %v4471, 127
        %v4475 = vpop.permute.xlu0 %4474
        %v4478 = vadd.f32 %v4394, %v4473
        %v4479 = vadd.f32 %v4395, %v4475
        %s4480 = sld [smem:[#allocation7 + $0x50]]
        %v4481 = vstv %s4480
        %v4482 = vmul.f32 %v4481, %v3299
        %v4483 = vmul.f32 %v4481, %v3300
        %v4484 = vmul.f32 %v4481, %v3301
        %v4488 = vrot.slane %v4482, 1
        %v4489 = vrot.slane %v4483, 1
        %v4490 = vsel %vm1094, %v4488, %v4489
        %v4491 = vrot.slane %v4484, 1
        %v4492 = vsel %vm1094, %v4489, %v4491
        %4493 = vrot.lane.b32.xlu0 %v4490, 126
        %v4494 = vpop.permute.xlu0 %4493
        %4495 = vrot.lane.b32.xlu0 %v4492, 126
        %v4496 = vpop.permute.xlu0 %4495
        %v4499 = vadd.f32 %v4415, %v4494
        %v4500 = vadd.f32 %v4416, %v4496
        %s4501 = sld [smem:[#allocation7 + $0x51]]
        %v4502 = vstv %s4501
        %v4503 = vmul.f32 %v4502, %v3299
        %v4504 = vmul.f32 %v4502, %v3300
        %v4505 = vmul.f32 %v4502, %v3301
        %v4509 = vrot.slane %v4503, 1
        %v4510 = vrot.slane %v4504, 1
        %v4511 = vsel %vm1094, %v4509, %v4510
        %v4512 = vrot.slane %v4505, 1
        %v4513 = vsel %vm1094, %v4510, %v4512
        %4514 = vrot.lane.b32.xlu0 %v4511, 126
        %v4515 = vpop.permute.xlu0 %4514
        %4516 = vrot.lane.b32.xlu0 %v4513, 126
        %v4517 = vpop.permute.xlu0 %4516
        %v4520 = vadd.f32 %v4436, %v4515
        %v4521 = vadd.f32 %v4437, %v4517
        %s4522 = sld [smem:[#allocation7 + $0x52]]
        %v4523 = vstv %s4522
        %v4524 = vmul.f32 %v4523, %v3299
        %v4525 = vmul.f32 %v4523, %v3300
        %v4526 = vmul.f32 %v4523, %v3301
        %v4530 = vrot.slane %v4524, 1
        %v4531 = vrot.slane %v4525, 1
        %v4532 = vsel %vm1094, %v4530, %v4531
        %v4533 = vrot.slane %v4526, 1
        %v4534 = vsel %vm1094, %v4531, %v4533
        %4535 = vrot.lane.b32.xlu0 %v4532, 126
        %v4536 = vpop.permute.xlu0 %4535
        %4537 = vrot.lane.b32.xlu0 %v4534, 126
        %v4538 = vpop.permute.xlu0 %4537
        %v4541 = vadd.f32 %v4457, %v4536
        %v4542 = vadd.f32 %v4458, %v4538
        %s4543 = sld [smem:[#allocation7 + $0x53]]
        %v4544 = vstv %s4543
        %v4545 = vmul.f32 %v4544, %v3299
        %v4546 = vmul.f32 %v4544, %v3300
        %v4547 = vmul.f32 %v4544, %v3301
        %v4551 = vrot.slane %v4545, 1
        %v4552 = vrot.slane %v4546, 1
        %v4553 = vsel %vm1094, %v4551, %v4552
        %v4554 = vrot.slane %v4547, 1
        %v4555 = vsel %vm1094, %v4552, %v4554
        %4556 = vrot.lane.b32.xlu0 %v4553, 126
        %v4557 = vpop.permute.xlu0 %4556
        %4558 = vrot.lane.b32.xlu0 %v4555, 126
        %v4559 = vpop.permute.xlu0 %4558
        %v4562 = vadd.f32 %v4478, %v4557
        %v4563 = vadd.f32 %v4479, %v4559
        %s4564 = sld [smem:[#allocation7 + $0x54]]
        %v4565 = vstv %s4564
        %v4566 = vmul.f32 %v4565, %v3305
        %v4567 = vmul.f32 %v4565, %v3306
        %v4568 = vmul.f32 %v4565, %v3307
        %v4572 = vrot.slane %v4566, 1
        %v4573 = vrot.slane %v4567, 1
        %v4574 = vsel %vm1094, %v4572, %v4573
        %v4575 = vrot.slane %v4568, 1
        %v4576 = vsel %vm1094, %v4573, %v4575
        %4577 = vrot.lane.b32.xlu0 %v4574, 126
        %v4578 = vpop.permute.xlu0 %4577
        %4579 = vrot.lane.b32.xlu0 %v4576, 126
        %v4580 = vpop.permute.xlu0 %4579
        %v4583 = vadd.f32 %v4499, %v4578
        %v4584 = vadd.f32 %v4500, %v4580
        %s4585 = sld [smem:[#allocation7 + $0x55]]
        %v4586 = vstv %s4585
        %v4587 = vmul.f32 %v4586, %v3305
        %v4588 = vmul.f32 %v4586, %v3306
        %v4589 = vmul.f32 %v4586, %v3307
        %v4593 = vrot.slane %v4587, 1
        %v4594 = vrot.slane %v4588, 1
        %v4595 = vsel %vm1094, %v4593, %v4594
        %v4596 = vrot.slane %v4589, 1
        %v4597 = vsel %vm1094, %v4594, %v4596
        %4598 = vrot.lane.b32.xlu0 %v4595, 126
        %v4599 = vpop.permute.xlu0 %4598
        %4600 = vrot.lane.b32.xlu0 %v4597, 126
        %v4601 = vpop.permute.xlu0 %4600
        %v4604 = vadd.f32 %v4520, %v4599
        %v4605 = vadd.f32 %v4521, %v4601
        %s4606 = sld [smem:[#allocation7 + $0x56]]
        %v4607 = vstv %s4606
        %v4608 = vmul.f32 %v4607, %v3305
        %v4609 = vmul.f32 %v4607, %v3306
        %v4610 = vmul.f32 %v4607, %v3307
        %v4614 = vrot.slane %v4608, 1
        %v4615 = vrot.slane %v4609, 1
        %v4616 = vsel %vm1094, %v4614, %v4615
        %v4617 = vrot.slane %v4610, 1
        %v4618 = vsel %vm1094, %v4615, %v4617
        %4619 = vrot.lane.b32.xlu0 %v4616, 126
        %v4620 = vpop.permute.xlu0 %4619
        %4621 = vrot.lane.b32.xlu0 %v4618, 126
        %v4622 = vpop.permute.xlu0 %4621
        %v4625 = vadd.f32 %v4541, %v4620
        %v4626 = vadd.f32 %v4542, %v4622
        %s4627 = sld [smem:[#allocation7 + $0x57]]
        %v4628 = vstv %s4627
        %v4629 = vmul.f32 %v4628, %v3305
        %v4630 = vmul.f32 %v4628, %v3306
        %v4631 = vmul.f32 %v4628, %v3307
        %v4635 = vrot.slane %v4629, 1
        %v4636 = vrot.slane %v4630, 1
        %v4637 = vsel %vm1094, %v4635, %v4636
        %v4638 = vrot.slane %v4631, 1
        %v4639 = vsel %vm1094, %v4636, %v4638
        %4640 = vrot.lane.b32.xlu0 %v4637, 126
        %v4641 = vpop.permute.xlu0 %4640
        %4642 = vrot.lane.b32.xlu0 %v4639, 126
        %v4643 = vpop.permute.xlu0 %4642
        %v4646 = vadd.f32 %v4562, %v4641
        %v4647 = vadd.f32 %v4563, %v4643
        %s4648 = sld [smem:[#allocation7 + $0x58]]
        %v4649 = vstv %s4648
        %v4650 = vmul.f32 %v4649, %v3311
        %v4651 = vmul.f32 %v4649, %v3312
        %v4652 = vmul.f32 %v4649, %v3313
        %v4656 = vrot.slane %v4650, 1
        %v4657 = vrot.slane %v4651, 1
        %v4658 = vsel %vm1094, %v4656, %v4657
        %v4659 = vrot.slane %v4652, 1
        %v4660 = vsel %vm1094, %v4657, %v4659
        %4661 = vrot.lane.b32.xlu0 %v4658, 126
        %v4662 = vpop.permute.xlu0 %4661
        %4663 = vrot.lane.b32.xlu0 %v4660, 126
        %v4664 = vpop.permute.xlu0 %4663
        %v4667 = vadd.f32 %v4583, %v4662
        %v4668 = vadd.f32 %v4584, %v4664
        %s4669 = sld [smem:[#allocation7 + $0x59]]
        %v4670 = vstv %s4669
        %v4671 = vmul.f32 %v4670, %v3311
        %v4672 = vmul.f32 %v4670, %v3312
        %v4673 = vmul.f32 %v4670, %v3313
        %v4677 = vrot.slane %v4671, 1
        %v4678 = vrot.slane %v4672, 1
        %v4679 = vsel %vm1094, %v4677, %v4678
        %v4680 = vrot.slane %v4673, 1
        %v4681 = vsel %vm1094, %v4678, %v4680
        %4682 = vrot.lane.b32.xlu0 %v4679, 126
        %v4683 = vpop.permute.xlu0 %4682
        %4684 = vrot.lane.b32.xlu0 %v4681, 126
        %v4685 = vpop.permute.xlu0 %4684
        %v4688 = vadd.f32 %v4604, %v4683
        %v4689 = vadd.f32 %v4605, %v4685
        %s4690 = sld [smem:[#allocation7 + $0x5a]]
        %v4691 = vstv %s4690
        %v4692 = vmul.f32 %v4691, %v3311
        %v4693 = vmul.f32 %v4691, %v3312
        %v4694 = vmul.f32 %v4691, %v3313
        %v4698 = vrot.slane %v4692, 1
        %v4699 = vrot.slane %v4693, 1
        %v4700 = vsel %vm1094, %v4698, %v4699
        %v4701 = vrot.slane %v4694, 1
        %v4702 = vsel %vm1094, %v4699, %v4701
        %4703 = vrot.lane.b32.xlu0 %v4700, 126
        %v4704 = vpop.permute.xlu0 %4703
        %4705 = vrot.lane.b32.xlu0 %v4702, 126
        %v4706 = vpop.permute.xlu0 %4705
        %v4709 = vadd.f32 %v4625, %v4704
        %v4710 = vadd.f32 %v4626, %v4706
        %s4711 = sld [smem:[#allocation7 + $0x5b]]
        %v4712 = vstv %s4711
        %v4713 = vmul.f32 %v4712, %v3311
        %v4714 = vmul.f32 %v4712, %v3312
        %v4715 = vmul.f32 %v4712, %v3313
        %v4719 = vrot.slane %v4713, 1
        %v4720 = vrot.slane %v4714, 1
        %v4721 = vsel %vm1094, %v4719, %v4720
        %v4722 = vrot.slane %v4715, 1
        %v4723 = vsel %vm1094, %v4720, %v4722
        %4724 = vrot.lane.b32.xlu0 %v4721, 126
        %v4725 = vpop.permute.xlu0 %4724
        %4726 = vrot.lane.b32.xlu0 %v4723, 126
        %v4727 = vpop.permute.xlu0 %4726
        %v4730 = vadd.f32 %v4646, %v4725
        %v4731 = vadd.f32 %v4647, %v4727
        %s4732 = sld [smem:[#allocation7 + $0x5c]]
        %v4733 = vstv %s4732
        %v4734 = vmul.f32 %v4733, %v3317
        %v4735 = vmul.f32 %v4733, %v3318
        %v4736 = vmul.f32 %v4733, %v3319
        %v4740 = vrot.slane %v4734, 1
        %v4741 = vrot.slane %v4735, 1
        %v4742 = vsel %vm1094, %v4740, %v4741
        %v4743 = vrot.slane %v4736, 1
        %v4744 = vsel %vm1094, %v4741, %v4743
        %4745 = vrot.lane.b32.xlu0 %v4742, 126
        %v4746 = vpop.permute.xlu0 %4745
        %4747 = vrot.lane.b32.xlu0 %v4744, 126
        %v4748 = vpop.permute.xlu0 %4747
        %v4751 = vadd.f32 %v4667, %v4746
        %v4752 = vadd.f32 %v4668, %v4748
        %s4753 = sld [smem:[#allocation7 + $0x5d]]
        %v4754 = vstv %s4753
        %v4755 = vmul.f32 %v4754, %v3317
        %v4756 = vmul.f32 %v4754, %v3318
        %v4757 = vmul.f32 %v4754, %v3319
        %v4761 = vrot.slane %v4755, 1
        %v4762 = vrot.slane %v4756, 1
        %v4763 = vsel %vm1094, %v4761, %v4762
        %v4764 = vrot.slane %v4757, 1
        %v4765 = vsel %vm1094, %v4762, %v4764
        %4766 = vrot.lane.b32.xlu0 %v4763, 126
        %v4767 = vpop.permute.xlu0 %4766
        %4768 = vrot.lane.b32.xlu0 %v4765, 126
        %v4769 = vpop.permute.xlu0 %4768
        %v4772 = vadd.f32 %v4688, %v4767
        %v4773 = vadd.f32 %v4689, %v4769
        %s4774 = sld [smem:[#allocation7 + $0x5e]]
        %v4775 = vstv %s4774
        %v4776 = vmul.f32 %v4775, %v3317
        %v4777 = vmul.f32 %v4775, %v3318
        %v4778 = vmul.f32 %v4775, %v3319
        %v4782 = vrot.slane %v4776, 1
        %v4783 = vrot.slane %v4777, 1
        %v4784 = vsel %vm1094, %v4782, %v4783
        %v4785 = vrot.slane %v4778, 1
        %v4786 = vsel %vm1094, %v4783, %v4785
        %4787 = vrot.lane.b32.xlu0 %v4784, 126
        %v4788 = vpop.permute.xlu0 %4787
        %4789 = vrot.lane.b32.xlu0 %v4786, 126
        %v4790 = vpop.permute.xlu0 %4789
        %v4793 = vadd.f32 %v4709, %v4788
        %v4794 = vadd.f32 %v4710, %v4790
        %s4795 = sld [smem:[#allocation7 + $0x5f]]
        %v4796 = vstv %s4795
        %v4797 = vmul.f32 %v4796, %v3317
        %v4798 = vmul.f32 %v4796, %v3318
        %v4799 = vmul.f32 %v4796, %v3319
        %v4803 = vrot.slane %v4797, 1
        %v4804 = vrot.slane %v4798, 1
        %v4805 = vsel %vm1094, %v4803, %v4804
        %v4806 = vrot.slane %v4799, 1
        %v4807 = vsel %vm1094, %v4804, %v4806
        %4808 = vrot.lane.b32.xlu0 %v4805, 126
        %v4809 = vpop.permute.xlu0 %4808
        %4810 = vrot.lane.b32.xlu0 %v4807, 126
        %v4811 = vpop.permute.xlu0 %4810
        %v4814 = vadd.f32 %v4730, %v4809
        %v4815 = vadd.f32 %v4731, %v4811
        %s4816 = sld [smem:[#allocation7 + $0x60]]
        %v4817 = vstv %s4816
        %v4818 = vmul.f32 %v4817, %v3299
        %v4819 = vmul.f32 %v4817, %v3300
        %v4820 = vmul.f32 %v4817, %v3301
        %v4824 = vrot.slane %v4818, 2
        %v4825 = vrot.slane %v4819, 2
        %v4826 = vsel %vm2199, %v4824, %v4825
        %v4827 = vrot.slane %v4820, 2
        %v4828 = vsel %vm2199, %v4825, %v4827
        %v4831 = vadd.f32 %v4751, %v4826
        %v4832 = vadd.f32 %v4752, %v4828
        %s4833 = sld [smem:[#allocation7 + $0x61]]
        %v4834 = vstv %s4833
        %v4835 = vmul.f32 %v4834, %v3299
        %v4836 = vmul.f32 %v4834, %v3300
        %v4837 = vmul.f32 %v4834, %v3301
        %v4841 = vrot.slane %v4835, 2
        %v4842 = vrot.slane %v4836, 2
        %v4843 = vsel %vm2199, %v4841, %v4842
        %v4844 = vrot.slane %v4837, 2
        %v4845 = vsel %vm2199, %v4842, %v4844
        %v4848 = vadd.f32 %v4772, %v4843
        %v4849 = vadd.f32 %v4773, %v4845
        %s4850 = sld [smem:[#allocation7 + $0x62]]
        %v4851 = vstv %s4850
        %v4852 = vmul.f32 %v4851, %v3299
        %v4853 = vmul.f32 %v4851, %v3300
        %v4854 = vmul.f32 %v4851, %v3301
        %v4858 = vrot.slane %v4852, 2
        %v4859 = vrot.slane %v4853, 2
        %v4860 = vsel %vm2199, %v4858, %v4859
        %v4861 = vrot.slane %v4854, 2
        %v4862 = vsel %vm2199, %v4859, %v4861
        %v4865 = vadd.f32 %v4793, %v4860
        %v4866 = vadd.f32 %v4794, %v4862
        %s4867 = sld [smem:[#allocation7 + $0x63]]
        %v4868 = vstv %s4867
        %v4869 = vmul.f32 %v4868, %v3299
        %v4870 = vmul.f32 %v4868, %v3300
        %v4871 = vmul.f32 %v4868, %v3301
        %v4875 = vrot.slane %v4869, 2
        %v4876 = vrot.slane %v4870, 2
        %v4877 = vsel %vm2199, %v4875, %v4876
        %v4878 = vrot.slane %v4871, 2
        %v4879 = vsel %vm2199, %v4876, %v4878
        %v4882 = vadd.f32 %v4814, %v4877
        %v4883 = vadd.f32 %v4815, %v4879
        %s4884 = sld [smem:[#allocation7 + $0x64]]
        %v4885 = vstv %s4884
        %v4886 = vmul.f32 %v4885, %v3305
        %v4887 = vmul.f32 %v4885, %v3306
        %v4888 = vmul.f32 %v4885, %v3307
        %v4892 = vrot.slane %v4886, 2
        %v4893 = vrot.slane %v4887, 2
        %v4894 = vsel %vm2199, %v4892, %v4893
        %v4895 = vrot.slane %v4888, 2
        %v4896 = vsel %vm2199, %v4893, %v4895
        %v4899 = vadd.f32 %v4831, %v4894
        %v4900 = vadd.f32 %v4832, %v4896
        %s4901 = sld [smem:[#allocation7 + $0x65]]
        %v4902 = vstv %s4901
        %v4903 = vmul.f32 %v4902, %v3305
        %v4904 = vmul.f32 %v4902, %v3306
        %v4905 = vmul.f32 %v4902, %v3307
        %v4909 = vrot.slane %v4903, 2
        %v4910 = vrot.slane %v4904, 2
        %v4911 = vsel %vm2199, %v4909, %v4910
        %v4912 = vrot.slane %v4905, 2
        %v4913 = vsel %vm2199, %v4910, %v4912
        %v4916 = vadd.f32 %v4848, %v4911
        %v4917 = vadd.f32 %v4849, %v4913
        %s4918 = sld [smem:[#allocation7 + $0x66]]
        %v4919 = vstv %s4918
        %v4920 = vmul.f32 %v4919, %v3305
        %v4921 = vmul.f32 %v4919, %v3306
        %v4922 = vmul.f32 %v4919, %v3307
        %v4926 = vrot.slane %v4920, 2
        %v4927 = vrot.slane %v4921, 2
        %v4928 = vsel %vm2199, %v4926, %v4927
        %v4929 = vrot.slane %v4922, 2
        %v4930 = vsel %vm2199, %v4927, %v4929
        %v4933 = vadd.f32 %v4865, %v4928
        %v4934 = vadd.f32 %v4866, %v4930
        %s4935 = sld [smem:[#allocation7 + $0x67]]
        %v4936 = vstv %s4935
        %v4937 = vmul.f32 %v4936, %v3305
        %v4938 = vmul.f32 %v4936, %v3306
        %v4939 = vmul.f32 %v4936, %v3307
        %v4943 = vrot.slane %v4937, 2
        %v4944 = vrot.slane %v4938, 2
        %v4945 = vsel %vm2199, %v4943, %v4944
        %v4946 = vrot.slane %v4939, 2
        %v4947 = vsel %vm2199, %v4944, %v4946
        %v4950 = vadd.f32 %v4882, %v4945
        %v4951 = vadd.f32 %v4883, %v4947
        %s4952 = sld [smem:[#allocation7 + $0x68]]
        %v4953 = vstv %s4952
        %v4954 = vmul.f32 %v4953, %v3311
        %v4955 = vmul.f32 %v4953, %v3312
        %v4956 = vmul.f32 %v4953, %v3313
        %v4960 = vrot.slane %v4954, 2
        %v4961 = vrot.slane %v4955, 2
        %v4962 = vsel %vm2199, %v4960, %v4961
        %v4963 = vrot.slane %v4956, 2
        %v4964 = vsel %vm2199, %v4961, %v4963
        %v4967 = vadd.f32 %v4899, %v4962
        %v4968 = vadd.f32 %v4900, %v4964
        %s4969 = sld [smem:[#allocation7 + $0x69]]
        %v4970 = vstv %s4969
        %v4971 = vmul.f32 %v4970, %v3311
        %v4972 = vmul.f32 %v4970, %v3312
        %v4973 = vmul.f32 %v4970, %v3313
        %v4977 = vrot.slane %v4971, 2
        %v4978 = vrot.slane %v4972, 2
        %v4979 = vsel %vm2199, %v4977, %v4978
        %v4980 = vrot.slane %v4973, 2
        %v4981 = vsel %vm2199, %v4978, %v4980
        %v4984 = vadd.f32 %v4916, %v4979
        %v4985 = vadd.f32 %v4917, %v4981
        %s4986 = sld [smem:[#allocation7 + $0x6a]]
        %v4987 = vstv %s4986
        %v4988 = vmul.f32 %v4987, %v3311
        %v4989 = vmul.f32 %v4987, %v3312
        %v4990 = vmul.f32 %v4987, %v3313
        %v4994 = vrot.slane %v4988, 2
        %v4995 = vrot.slane %v4989, 2
        %v4996 = vsel %vm2199, %v4994, %v4995
        %v4997 = vrot.slane %v4990, 2
        %v4998 = vsel %vm2199, %v4995, %v4997
        %v5001 = vadd.f32 %v4933, %v4996
        %v5002 = vadd.f32 %v4934, %v4998
        %s5003 = sld [smem:[#allocation7 + $0x6b]]
        %v5004 = vstv %s5003
        %v5005 = vmul.f32 %v5004, %v3311
        %v5006 = vmul.f32 %v5004, %v3312
        %v5007 = vmul.f32 %v5004, %v3313
        %v5011 = vrot.slane %v5005, 2
        %v5012 = vrot.slane %v5006, 2
        %v5013 = vsel %vm2199, %v5011, %v5012
        %v5014 = vrot.slane %v5007, 2
        %v5015 = vsel %vm2199, %v5012, %v5014
        %v5018 = vadd.f32 %v4950, %v5013
        %v5019 = vadd.f32 %v4951, %v5015
        %s5020 = sld [smem:[#allocation7 + $0x6c]]
        %v5021 = vstv %s5020
        %v5022 = vmul.f32 %v5021, %v3317
        %v5023 = vmul.f32 %v5021, %v3318
        %v5024 = vmul.f32 %v5021, %v3319
        %v5028 = vrot.slane %v5022, 2
        %v5029 = vrot.slane %v5023, 2
        %v5030 = vsel %vm2199, %v5028, %v5029
        %v5031 = vrot.slane %v5024, 2
        %v5032 = vsel %vm2199, %v5029, %v5031
        %v5035 = vadd.f32 %v4967, %v5030
        %v5036 = vadd.f32 %v4968, %v5032
        %s5037 = sld [smem:[#allocation7 + $0x6d]]
        %v5038 = vstv %s5037
        %v5039 = vmul.f32 %v5038, %v3317
        %v5040 = vmul.f32 %v5038, %v3318
        %v5041 = vmul.f32 %v5038, %v3319
        %v5045 = vrot.slane %v5039, 2
        %v5046 = vrot.slane %v5040, 2
        %v5047 = vsel %vm2199, %v5045, %v5046
        %v5048 = vrot.slane %v5041, 2
        %v5049 = vsel %vm2199, %v5046, %v5048
        %v5052 = vadd.f32 %v4984, %v5047
        %v5053 = vadd.f32 %v4985, %v5049
        %s5054 = sld [smem:[#allocation7 + $0x6e]]
        %v5055 = vstv %s5054
        %v5056 = vmul.f32 %v5055, %v3317
        %v5057 = vmul.f32 %v5055, %v3318
        %v5058 = vmul.f32 %v5055, %v3319
        %v5062 = vrot.slane %v5056, 2
        %v5063 = vrot.slane %v5057, 2
        %v5064 = vsel %vm2199, %v5062, %v5063
        %v5065 = vrot.slane %v5058, 2
        %v5066 = vsel %vm2199, %v5063, %v5065
        %v5069 = vadd.f32 %v5001, %v5064
        %v5070 = vadd.f32 %v5002, %v5066
        %s5071 = sld [smem:[#allocation7 + $0x6f]]
        %v5072 = vstv %s5071
        %v5073 = vmul.f32 %v5072, %v3317
        %v5074 = vmul.f32 %v5072, %v3318
        %v5075 = vmul.f32 %v5072, %v3319
        %v5079 = vrot.slane %v5073, 2
        %v5080 = vrot.slane %v5074, 2
        %v5081 = vsel %vm2199, %v5079, %v5080
        %v5082 = vrot.slane %v5075, 2
        %v5083 = vsel %vm2199, %v5080, %v5082
        %v5086 = vadd.f32 %v5018, %v5081
        %v5087 = vadd.f32 %v5019, %v5083
        %s5088 = sld [smem:[#allocation7 + $0x70]]
        %v5089 = vstv %s5088
        %v5090 = vmul.f32 %v5089, %v3299
        %v5091 = vmul.f32 %v5089, %v3300
        %v5092 = vmul.f32 %v5089, %v3301
        %v5096 = vrot.slane %v5090, 2
        %v5097 = vrot.slane %v5091, 2
        %v5098 = vsel %vm2199, %v5096, %v5097
        %v5099 = vrot.slane %v5092, 2
        %v5100 = vsel %vm2199, %v5097, %v5099
        %5101 = vrot.lane.b32.xlu0 %v5098, 127
        %v5102 = vpop.permute.xlu0 %5101
        %5103 = vrot.lane.b32.xlu0 %v5100, 127
        %v5104 = vpop.permute.xlu0 %5103
        %v5107 = vadd.f32 %v5035, %v5102
        %v5108 = vadd.f32 %v5036, %v5104
        %s5109 = sld [smem:[#allocation7 + $0x71]]
        %v5110 = vstv %s5109
        %v5111 = vmul.f32 %v5110, %v3299
        %v5112 = vmul.f32 %v5110, %v3300
        %v5113 = vmul.f32 %v5110, %v3301
        %v5117 = vrot.slane %v5111, 2
        %v5118 = vrot.slane %v5112, 2
        %v5119 = vsel %vm2199, %v5117, %v5118
        %v5120 = vrot.slane %v5113, 2
        %v5121 = vsel %vm2199, %v5118, %v5120
        %5122 = vrot.lane.b32.xlu0 %v5119, 127
        %v5123 = vpop.permute.xlu0 %5122
        %5124 = vrot.lane.b32.xlu0 %v5121, 127
        %v5125 = vpop.permute.xlu0 %5124
        %v5128 = vadd.f32 %v5052, %v5123
        %v5129 = vadd.f32 %v5053, %v5125
        %s5130 = sld [smem:[#allocation7 + $0x72]]
        %v5131 = vstv %s5130
        %v5132 = vmul.f32 %v5131, %v3299
        %v5133 = vmul.f32 %v5131, %v3300
        %v5134 = vmul.f32 %v5131, %v3301
        %v5138 = vrot.slane %v5132, 2
        %v5139 = vrot.slane %v5133, 2
        %v5140 = vsel %vm2199, %v5138, %v5139
        %v5141 = vrot.slane %v5134, 2
        %v5142 = vsel %vm2199, %v5139, %v5141
        %5143 = vrot.lane.b32.xlu0 %v5140, 127
        %v5144 = vpop.permute.xlu0 %5143
        %5145 = vrot.lane.b32.xlu0 %v5142, 127
        %v5146 = vpop.permute.xlu0 %5145
        %v5149 = vadd.f32 %v5069, %v5144
        %v5150 = vadd.f32 %v5070, %v5146
        %s5151 = sld [smem:[#allocation7 + $0x73]]
        %v5152 = vstv %s5151
        %v5153 = vmul.f32 %v5152, %v3299
        %v5154 = vmul.f32 %v5152, %v3300
        %v5155 = vmul.f32 %v5152, %v3301
        %v5159 = vrot.slane %v5153, 2
        %v5160 = vrot.slane %v5154, 2
        %v5161 = vsel %vm2199, %v5159, %v5160
        %v5162 = vrot.slane %v5155, 2
        %v5163 = vsel %vm2199, %v5160, %v5162
        %5164 = vrot.lane.b32.xlu0 %v5161, 127
        %v5165 = vpop.permute.xlu0 %5164
        %5166 = vrot.lane.b32.xlu0 %v5163, 127
        %v5167 = vpop.permute.xlu0 %5166
        %v5170 = vadd.f32 %v5086, %v5165
        %v5171 = vadd.f32 %v5087, %v5167
        %s5172 = sld [smem:[#allocation7 + $0x74]]
        %v5173 = vstv %s5172
        %v5174 = vmul.f32 %v5173, %v3305
        %v5175 = vmul.f32 %v5173, %v3306
        %v5176 = vmul.f32 %v5173, %v3307
        %v5180 = vrot.slane %v5174, 2
        %v5181 = vrot.slane %v5175, 2
        %v5182 = vsel %vm2199, %v5180, %v5181
        %v5183 = vrot.slane %v5176, 2
        %v5184 = vsel %vm2199, %v5181, %v5183
        %5185 = vrot.lane.b32.xlu0 %v5182, 127
        %v5186 = vpop.permute.xlu0 %5185
        %5187 = vrot.lane.b32.xlu0 %v5184, 127
        %v5188 = vpop.permute.xlu0 %5187
        %v5191 = vadd.f32 %v5107, %v5186
        %v5192 = vadd.f32 %v5108, %v5188
        %s5193 = sld [smem:[#allocation7 + $0x75]]
        %v5194 = vstv %s5193
        %v5195 = vmul.f32 %v5194, %v3305
        %v5196 = vmul.f32 %v5194, %v3306
        %v5197 = vmul.f32 %v5194, %v3307
        %v5201 = vrot.slane %v5195, 2
        %v5202 = vrot.slane %v5196, 2
        %v5203 = vsel %vm2199, %v5201, %v5202
        %v5204 = vrot.slane %v5197, 2
        %v5205 = vsel %vm2199, %v5202, %v5204
        %5206 = vrot.lane.b32.xlu0 %v5203, 127
        %v5207 = vpop.permute.xlu0 %5206
        %5208 = vrot.lane.b32.xlu0 %v5205, 127
        %v5209 = vpop.permute.xlu0 %5208
        %v5212 = vadd.f32 %v5128, %v5207
        %v5213 = vadd.f32 %v5129, %v5209
        %s5214 = sld [smem:[#allocation7 + $0x76]]
        %v5215 = vstv %s5214
        %v5216 = vmul.f32 %v5215, %v3305
        %v5217 = vmul.f32 %v5215, %v3306
        %v5218 = vmul.f32 %v5215, %v3307
        %v5222 = vrot.slane %v5216, 2
        %v5223 = vrot.slane %v5217, 2
        %v5224 = vsel %vm2199, %v5222, %v5223
        %v5225 = vrot.slane %v5218, 2
        %v5226 = vsel %vm2199, %v5223, %v5225
        %5227 = vrot.lane.b32.xlu0 %v5224, 127
        %v5228 = vpop.permute.xlu0 %5227
        %5229 = vrot.lane.b32.xlu0 %v5226, 127
        %v5230 = vpop.permute.xlu0 %5229
        %v5233 = vadd.f32 %v5149, %v5228
        %v5234 = vadd.f32 %v5150, %v5230
        %s5235 = sld [smem:[#allocation7 + $0x77]]
        %v5236 = vstv %s5235
        %v5237 = vmul.f32 %v5236, %v3305
        %v5238 = vmul.f32 %v5236, %v3306
        %v5239 = vmul.f32 %v5236, %v3307
        %v5243 = vrot.slane %v5237, 2
        %v5244 = vrot.slane %v5238, 2
        %v5245 = vsel %vm2199, %v5243, %v5244
        %v5246 = vrot.slane %v5239, 2
        %v5247 = vsel %vm2199, %v5244, %v5246
        %5248 = vrot.lane.b32.xlu0 %v5245, 127
        %v5249 = vpop.permute.xlu0 %5248
        %5250 = vrot.lane.b32.xlu0 %v5247, 127
        %v5251 = vpop.permute.xlu0 %5250
        %v5254 = vadd.f32 %v5170, %v5249
        %v5255 = vadd.f32 %v5171, %v5251
        %s5256 = sld [smem:[#allocation7 + $0x78]]
        %v5257 = vstv %s5256
        %v5258 = vmul.f32 %v5257, %v3311
        %v5259 = vmul.f32 %v5257, %v3312
        %v5260 = vmul.f32 %v5257, %v3313
        %v5264 = vrot.slane %v5258, 2
        %v5265 = vrot.slane %v5259, 2
        %v5266 = vsel %vm2199, %v5264, %v5265
        %v5267 = vrot.slane %v5260, 2
        %v5268 = vsel %vm2199, %v5265, %v5267
        %5269 = vrot.lane.b32.xlu0 %v5266, 127
        %v5270 = vpop.permute.xlu0 %5269
        %5271 = vrot.lane.b32.xlu0 %v5268, 127
        %v5272 = vpop.permute.xlu0 %5271
        %v5275 = vadd.f32 %v5191, %v5270
        %v5276 = vadd.f32 %v5192, %v5272
        %s5277 = sld [smem:[#allocation7 + $0x79]]
        %v5278 = vstv %s5277
        %v5279 = vmul.f32 %v5278, %v3311
        %v5280 = vmul.f32 %v5278, %v3312
        %v5281 = vmul.f32 %v5278, %v3313
        %v5285 = vrot.slane %v5279, 2
        %v5286 = vrot.slane %v5280, 2
        %v5287 = vsel %vm2199, %v5285, %v5286
        %v5288 = vrot.slane %v5281, 2
        %v5289 = vsel %vm2199, %v5286, %v5288
        %5290 = vrot.lane.b32.xlu0 %v5287, 127
        %v5291 = vpop.permute.xlu0 %5290
        %5292 = vrot.lane.b32.xlu0 %v5289, 127
        %v5293 = vpop.permute.xlu0 %5292
        %v5296 = vadd.f32 %v5212, %v5291
        %v5297 = vadd.f32 %v5213, %v5293
        %s5298 = sld [smem:[#allocation7 + $0x7a]]
        %v5299 = vstv %s5298
        %v5300 = vmul.f32 %v5299, %v3311
        %v5301 = vmul.f32 %v5299, %v3312
        %v5302 = vmul.f32 %v5299, %v3313
        %v5306 = vrot.slane %v5300, 2
        %v5307 = vrot.slane %v5301, 2
        %v5308 = vsel %vm2199, %v5306, %v5307
        %v5309 = vrot.slane %v5302, 2
        %v5310 = vsel %vm2199, %v5307, %v5309
        %5311 = vrot.lane.b32.xlu0 %v5308, 127
        %v5312 = vpop.permute.xlu0 %5311
        %5313 = vrot.lane.b32.xlu0 %v5310, 127
        %v5314 = vpop.permute.xlu0 %5313
        %v5317 = vadd.f32 %v5233, %v5312
        %v5318 = vadd.f32 %v5234, %v5314
        %s5319 = sld [smem:[#allocation7 + $0x7b]]
        %v5320 = vstv %s5319
        %v5321 = vmul.f32 %v5320, %v3311
        %v5322 = vmul.f32 %v5320, %v3312
        %v5323 = vmul.f32 %v5320, %v3313
        %v5327 = vrot.slane %v5321, 2
        %v5328 = vrot.slane %v5322, 2
        %v5329 = vsel %vm2199, %v5327, %v5328
        %v5330 = vrot.slane %v5323, 2
        %v5331 = vsel %vm2199, %v5328, %v5330
        %5332 = vrot.lane.b32.xlu0 %v5329, 127
        %v5333 = vpop.permute.xlu0 %5332
        %5334 = vrot.lane.b32.xlu0 %v5331, 127
        %v5335 = vpop.permute.xlu0 %5334
        %v5338 = vadd.f32 %v5254, %v5333
        %v5339 = vadd.f32 %v5255, %v5335
        %s5340 = sld [smem:[#allocation7 + $0x7c]]
        %v5341 = vstv %s5340
        %v5342 = vmul.f32 %v5341, %v3317
        %v5343 = vmul.f32 %v5341, %v3318
        %v5344 = vmul.f32 %v5341, %v3319
        %v5348 = vrot.slane %v5342, 2
        %v5349 = vrot.slane %v5343, 2
        %v5350 = vsel %vm2199, %v5348, %v5349
        %v5351 = vrot.slane %v5344, 2
        %v5352 = vsel %vm2199, %v5349, %v5351
        %5353 = vrot.lane.b32.xlu0 %v5350, 127
        %v5354 = vpop.permute.xlu0 %5353
        %5355 = vrot.lane.b32.xlu0 %v5352, 127
        %v5356 = vpop.permute.xlu0 %5355
        %v5359 = vadd.f32 %v5275, %v5354
        %v5360 = vadd.f32 %v5276, %v5356
        %s5361 = sld [smem:[#allocation7 + $0x7d]]
        %v5362 = vstv %s5361
        %v5363 = vmul.f32 %v5362, %v3317
        %v5364 = vmul.f32 %v5362, %v3318
        %v5365 = vmul.f32 %v5362, %v3319
        %v5369 = vrot.slane %v5363, 2
        %v5370 = vrot.slane %v5364, 2
        %v5371 = vsel %vm2199, %v5369, %v5370
        %v5372 = vrot.slane %v5365, 2
        %v5373 = vsel %vm2199, %v5370, %v5372
        %5374 = vrot.lane.b32.xlu0 %v5371, 127
        %v5375 = vpop.permute.xlu0 %5374
        %5376 = vrot.lane.b32.xlu0 %v5373, 127
        %v5377 = vpop.permute.xlu0 %5376
        %v5380 = vadd.f32 %v5296, %v5375
        %v5381 = vadd.f32 %v5297, %v5377
        %s5382 = sld [smem:[#allocation7 + $0x7e]]
        %v5383 = vstv %s5382
        %v5384 = vmul.f32 %v5383, %v3317
        %v5385 = vmul.f32 %v5383, %v3318
        %v5386 = vmul.f32 %v5383, %v3319
        %v5390 = vrot.slane %v5384, 2
        %v5391 = vrot.slane %v5385, 2
        %v5392 = vsel %vm2199, %v5390, %v5391
        %v5393 = vrot.slane %v5386, 2
        %v5394 = vsel %vm2199, %v5391, %v5393
        %5395 = vrot.lane.b32.xlu0 %v5392, 127
        %v5396 = vpop.permute.xlu0 %5395
        %5397 = vrot.lane.b32.xlu0 %v5394, 127
        %v5398 = vpop.permute.xlu0 %5397
        %v5401 = vadd.f32 %v5317, %v5396
        %v5402 = vadd.f32 %v5318, %v5398
        %s5403 = sld [smem:[#allocation7 + $0x7f]]
        %v5404 = vstv %s5403
        %v5405 = vmul.f32 %v5404, %v3317
        %v5406 = vmul.f32 %v5404, %v3318
        %v5407 = vmul.f32 %v5404, %v3319
        %v5411 = vrot.slane %v5405, 2
        %v5412 = vrot.slane %v5406, 2
        %v5413 = vsel %vm2199, %v5411, %v5412
        %v5414 = vrot.slane %v5407, 2
        %v5415 = vsel %vm2199, %v5412, %v5414
        %5416 = vrot.lane.b32.xlu0 %v5413, 127
        %v5417 = vpop.permute.xlu0 %5416
        %5418 = vrot.lane.b32.xlu0 %v5415, 127
        %v5419 = vpop.permute.xlu0 %5418
        %v5422 = vadd.f32 %v5338, %v5417
        %v5423 = vadd.f32 %v5339, %v5419
        %s5424 = sld [smem:[#allocation7 + $0x80]]
        %v5425 = vstv %s5424
        %v5426 = vmul.f32 %v5425, %v3299
        %v5427 = vmul.f32 %v5425, %v3300
        %v5428 = vmul.f32 %v5425, %v3301
        %v5432 = vrot.slane %v5426, 2
        %v5433 = vrot.slane %v5427, 2
        %v5434 = vsel %vm2199, %v5432, %v5433
        %v5435 = vrot.slane %v5428, 2
        %v5436 = vsel %vm2199, %v5433, %v5435
        %5437 = vrot.lane.b32.xlu0 %v5434, 126
        %v5438 = vpop.permute.xlu0 %5437
        %5439 = vrot.lane.b32.xlu0 %v5436, 126
        %v5440 = vpop.permute.xlu0 %5439
        %v5443 = vadd.f32 %v5359, %v5438
        %v5444 = vadd.f32 %v5360, %v5440
        %s5445 = sld [smem:[#allocation7 + $0x81]]
        %v5446 = vstv %s5445
        %v5447 = vmul.f32 %v5446, %v3299
        %v5448 = vmul.f32 %v5446, %v3300
        %v5449 = vmul.f32 %v5446, %v3301
        %v5453 = vrot.slane %v5447, 2
        %v5454 = vrot.slane %v5448, 2
        %v5455 = vsel %vm2199, %v5453, %v5454
        %v5456 = vrot.slane %v5449, 2
        %v5457 = vsel %vm2199, %v5454, %v5456
        %5458 = vrot.lane.b32.xlu0 %v5455, 126
        %v5459 = vpop.permute.xlu0 %5458
        %5460 = vrot.lane.b32.xlu0 %v5457, 126
        %v5461 = vpop.permute.xlu0 %5460
        %v5464 = vadd.f32 %v5380, %v5459
        %v5465 = vadd.f32 %v5381, %v5461
        %s5466 = sld [smem:[#allocation7 + $0x82]]
        %v5467 = vstv %s5466
        %v5468 = vmul.f32 %v5467, %v3299
        %v5469 = vmul.f32 %v5467, %v3300
        %v5470 = vmul.f32 %v5467, %v3301
        %v5474 = vrot.slane %v5468, 2
        %v5475 = vrot.slane %v5469, 2
        %v5476 = vsel %vm2199, %v5474, %v5475
        %v5477 = vrot.slane %v5470, 2
        %v5478 = vsel %vm2199, %v5475, %v5477
        %5479 = vrot.lane.b32.xlu0 %v5476, 126
        %v5480 = vpop.permute.xlu0 %5479
        %5481 = vrot.lane.b32.xlu0 %v5478, 126
        %v5482 = vpop.permute.xlu0 %5481
        %v5485 = vadd.f32 %v5401, %v5480
        %v5486 = vadd.f32 %v5402, %v5482
        %s5487 = sld [smem:[#allocation7 + $0x83]]
        %v5488 = vstv %s5487
        %v5489 = vmul.f32 %v5488, %v3299
        %v5490 = vmul.f32 %v5488, %v3300
        %v5491 = vmul.f32 %v5488, %v3301
        %v5495 = vrot.slane %v5489, 2
        %v5496 = vrot.slane %v5490, 2
        %v5497 = vsel %vm2199, %v5495, %v5496
        %v5498 = vrot.slane %v5491, 2
        %v5499 = vsel %vm2199, %v5496, %v5498
        %5500 = vrot.lane.b32.xlu0 %v5497, 126
        %v5501 = vpop.permute.xlu0 %5500
        %5502 = vrot.lane.b32.xlu0 %v5499, 126
        %v5503 = vpop.permute.xlu0 %5502
        %v5506 = vadd.f32 %v5422, %v5501
        %v5507 = vadd.f32 %v5423, %v5503
        %s5508 = sld [smem:[#allocation7 + $0x84]]
        %v5509 = vstv %s5508
        %v5510 = vmul.f32 %v5509, %v3305
        %v5511 = vmul.f32 %v5509, %v3306
        %v5512 = vmul.f32 %v5509, %v3307
        %v5516 = vrot.slane %v5510, 2
        %v5517 = vrot.slane %v5511, 2
        %v5518 = vsel %vm2199, %v5516, %v5517
        %v5519 = vrot.slane %v5512, 2
        %v5520 = vsel %vm2199, %v5517, %v5519
        %5521 = vrot.lane.b32.xlu0 %v5518, 126
        %v5522 = vpop.permute.xlu0 %5521
        %5523 = vrot.lane.b32.xlu0 %v5520, 126
        %v5524 = vpop.permute.xlu0 %5523
        %v5527 = vadd.f32 %v5443, %v5522
        %v5528 = vadd.f32 %v5444, %v5524
        %s5529 = sld [smem:[#allocation7 + $0x85]]
        %v5530 = vstv %s5529
        %v5531 = vmul.f32 %v5530, %v3305
        %v5532 = vmul.f32 %v5530, %v3306
        %v5533 = vmul.f32 %v5530, %v3307
        %v5537 = vrot.slane %v5531, 2
        %v5538 = vrot.slane %v5532, 2
        %v5539 = vsel %vm2199, %v5537, %v5538
        %v5540 = vrot.slane %v5533, 2
        %v5541 = vsel %vm2199, %v5538, %v5540
        %5542 = vrot.lane.b32.xlu0 %v5539, 126
        %v5543 = vpop.permute.xlu0 %5542
        %5544 = vrot.lane.b32.xlu0 %v5541, 126
        %v5545 = vpop.permute.xlu0 %5544
        %v5548 = vadd.f32 %v5464, %v5543
        %v5549 = vadd.f32 %v5465, %v5545
        %s5550 = sld [smem:[#allocation7 + $0x86]]
        %v5551 = vstv %s5550
        %v5552 = vmul.f32 %v5551, %v3305
        %v5553 = vmul.f32 %v5551, %v3306
        %v5554 = vmul.f32 %v5551, %v3307
        %v5558 = vrot.slane %v5552, 2
        %v5559 = vrot.slane %v5553, 2
        %v5560 = vsel %vm2199, %v5558, %v5559
        %v5561 = vrot.slane %v5554, 2
        %v5562 = vsel %vm2199, %v5559, %v5561
        %5563 = vrot.lane.b32.xlu0 %v5560, 126
        %v5564 = vpop.permute.xlu0 %5563
        %5565 = vrot.lane.b32.xlu0 %v5562, 126
        %v5566 = vpop.permute.xlu0 %5565
        %v5569 = vadd.f32 %v5485, %v5564
        %v5570 = vadd.f32 %v5486, %v5566
        %s5571 = sld [smem:[#allocation7 + $0x87]]
        %v5572 = vstv %s5571
        %v5573 = vmul.f32 %v5572, %v3305
        %v5574 = vmul.f32 %v5572, %v3306
        %v5575 = vmul.f32 %v5572, %v3307
        %v5579 = vrot.slane %v5573, 2
        %v5580 = vrot.slane %v5574, 2
        %v5581 = vsel %vm2199, %v5579, %v5580
        %v5582 = vrot.slane %v5575, 2
        %v5583 = vsel %vm2199, %v5580, %v5582
        %5584 = vrot.lane.b32.xlu0 %v5581, 126
        %v5585 = vpop.permute.xlu0 %5584
        %5586 = vrot.lane.b32.xlu0 %v5583, 126
        %v5587 = vpop.permute.xlu0 %5586
        %v5590 = vadd.f32 %v5506, %v5585
        %v5591 = vadd.f32 %v5507, %v5587
        %s5592 = sld [smem:[#allocation7 + $0x88]]
        %v5593 = vstv %s5592
        %v5594 = vmul.f32 %v5593, %v3311
        %v5595 = vmul.f32 %v5593, %v3312
        %v5596 = vmul.f32 %v5593, %v3313
        %v5600 = vrot.slane %v5594, 2
        %v5601 = vrot.slane %v5595, 2
        %v5602 = vsel %vm2199, %v5600, %v5601
        %v5603 = vrot.slane %v5596, 2
        %v5604 = vsel %vm2199, %v5601, %v5603
        %5605 = vrot.lane.b32.xlu0 %v5602, 126
        %v5606 = vpop.permute.xlu0 %5605
        %5607 = vrot.lane.b32.xlu0 %v5604, 126
        %v5608 = vpop.permute.xlu0 %5607
        %v5611 = vadd.f32 %v5527, %v5606
        %v5612 = vadd.f32 %v5528, %v5608
        %s5613 = sld [smem:[#allocation7 + $0x89]]
        %v5614 = vstv %s5613
        %v5615 = vmul.f32 %v5614, %v3311
        %v5616 = vmul.f32 %v5614, %v3312
        %v5617 = vmul.f32 %v5614, %v3313
        %v5621 = vrot.slane %v5615, 2
        %v5622 = vrot.slane %v5616, 2
        %v5623 = vsel %vm2199, %v5621, %v5622
        %v5624 = vrot.slane %v5617, 2
        %v5625 = vsel %vm2199, %v5622, %v5624
        %5626 = vrot.lane.b32.xlu0 %v5623, 126
        %v5627 = vpop.permute.xlu0 %5626
        %5628 = vrot.lane.b32.xlu0 %v5625, 126
        %v5629 = vpop.permute.xlu0 %5628
        %v5632 = vadd.f32 %v5548, %v5627
        %v5633 = vadd.f32 %v5549, %v5629
        %s5634 = sld [smem:[#allocation7 + $0x8a]]
        %v5635 = vstv %s5634
        %v5636 = vmul.f32 %v5635, %v3311
        %v5637 = vmul.f32 %v5635, %v3312
        %v5638 = vmul.f32 %v5635, %v3313
        %v5642 = vrot.slane %v5636, 2
        %v5643 = vrot.slane %v5637, 2
        %v5644 = vsel %vm2199, %v5642, %v5643
        %v5645 = vrot.slane %v5638, 2
        %v5646 = vsel %vm2199, %v5643, %v5645
        %5647 = vrot.lane.b32.xlu0 %v5644, 126
        %v5648 = vpop.permute.xlu0 %5647
        %5649 = vrot.lane.b32.xlu0 %v5646, 126
        %v5650 = vpop.permute.xlu0 %5649
        %v5653 = vadd.f32 %v5569, %v5648
        %v5654 = vadd.f32 %v5570, %v5650
        %s5655 = sld [smem:[#allocation7 + $0x8b]]
        %v5656 = vstv %s5655
        %v5657 = vmul.f32 %v5656, %v3311
        %v5658 = vmul.f32 %v5656, %v3312
        %v5659 = vmul.f32 %v5656, %v3313
        %v5663 = vrot.slane %v5657, 2
        %v5664 = vrot.slane %v5658, 2
        %v5665 = vsel %vm2199, %v5663, %v5664
        %v5666 = vrot.slane %v5659, 2
        %v5667 = vsel %vm2199, %v5664, %v5666
        %5668 = vrot.lane.b32.xlu0 %v5665, 126
        %v5669 = vpop.permute.xlu0 %5668
        %5670 = vrot.lane.b32.xlu0 %v5667, 126
        %v5671 = vpop.permute.xlu0 %5670
        %v5674 = vadd.f32 %v5590, %v5669
        %v5675 = vadd.f32 %v5591, %v5671
        %s5676 = sld [smem:[#allocation7 + $0x8c]]
        %v5677 = vstv %s5676
        %v5678 = vmul.f32 %v5677, %v3317
        %v5679 = vmul.f32 %v5677, %v3318
        %v5680 = vmul.f32 %v5677, %v3319
        %v5684 = vrot.slane %v5678, 2
        %v5685 = vrot.slane %v5679, 2
        %v5686 = vsel %vm2199, %v5684, %v5685
        %v5687 = vrot.slane %v5680, 2
        %v5688 = vsel %vm2199, %v5685, %v5687
        %5689 = vrot.lane.b32.xlu0 %v5686, 126
        %v5690 = vpop.permute.xlu0 %5689
        %5691 = vrot.lane.b32.xlu0 %v5688, 126
        %v5692 = vpop.permute.xlu0 %5691
        %v5695 = vadd.f32 %v5611, %v5690
        %v5696 = vadd.f32 %v5612, %v5692
        %s5697 = sld [smem:[#allocation7 + $0x8d]]
        %v5698 = vstv %s5697
        %v5699 = vmul.f32 %v5698, %v3317
        %v5700 = vmul.f32 %v5698, %v3318
        %v5701 = vmul.f32 %v5698, %v3319
        %v5705 = vrot.slane %v5699, 2
        %v5706 = vrot.slane %v5700, 2
        %v5707 = vsel %vm2199, %v5705, %v5706
        %v5708 = vrot.slane %v5701, 2
        %v5709 = vsel %vm2199, %v5706, %v5708
        %5710 = vrot.lane.b32.xlu0 %v5707, 126
        %v5711 = vpop.permute.xlu0 %5710
        %5712 = vrot.lane.b32.xlu0 %v5709, 126
        %v5713 = vpop.permute.xlu0 %5712
        %v5716 = vadd.f32 %v5632, %v5711
        %v5717 = vadd.f32 %v5633, %v5713
        %s5718 = sld [smem:[#allocation7 + $0x8e]]
        %v5719 = vstv %s5718
        %v5720 = vmul.f32 %v5719, %v3317
        %v5721 = vmul.f32 %v5719, %v3318
        %v5722 = vmul.f32 %v5719, %v3319
        %v5726 = vrot.slane %v5720, 2
        %v5727 = vrot.slane %v5721, 2
        %v5728 = vsel %vm2199, %v5726, %v5727
        %v5729 = vrot.slane %v5722, 2
        %v5730 = vsel %vm2199, %v5727, %v5729
        %5731 = vrot.lane.b32.xlu0 %v5728, 126
        %v5732 = vpop.permute.xlu0 %5731
        %5733 = vrot.lane.b32.xlu0 %v5730, 126
        %v5734 = vpop.permute.xlu0 %5733
        %v5737 = vadd.f32 %v5653, %v5732
        %v5738 = vadd.f32 %v5654, %v5734
        %s5739 = sld [smem:[#allocation7 + $0x8f]]
        %v5740 = vstv %s5739
        %v5741 = vmul.f32 %v5740, %v3317
        %v5742 = vmul.f32 %v5740, %v3318
        %v5743 = vmul.f32 %v5740, %v3319
        %v5747 = vrot.slane %v5741, 2
        %v5748 = vrot.slane %v5742, 2
        %v5749 = vsel %vm2199, %v5747, %v5748
        %v5750 = vrot.slane %v5743, 2
        %v5751 = vsel %vm2199, %v5748, %v5750
        %5752 = vrot.lane.b32.xlu0 %v5749, 126
        %v5753 = vpop.permute.xlu0 %5752
        %5754 = vrot.lane.b32.xlu0 %v5751, 126
        %v5755 = vpop.permute.xlu0 %5754
        %v5758 = vadd.f32 %v5674, %v5753
        %v5759 = vadd.f32 %v5675, %v5755
        %v5763 = vrot.slane %v275, 2
        %v5764 = vrot.slane %v276, 2
        %v5765 = vsel %vm2199, %v5763, %v5764
        %v5766 = vrot.slane %v277, 2
        %v5767 = vsel %vm2199, %v5764, %v5766
        %5768 = vrot.lane.b32.xlu0 %v5765, 126
        %v5769 = vpop.permute.xlu0 %5768
        %5770 = vrot.lane.b32.xlu0 %v5767, 126
        %v5771 = vpop.permute.xlu0 %5770
        %v5774 = vadd.f32 %v5695, %v5769
        %v5775 = vadd.f32 %v5696, %v5771
        %vm5776 = vcmask 130048
        %5777 = vst.msk [vmem:[%s269] sm:$0xff] %vm5776, %v5774
        %5778 = vst.msk [vmem:[%s269 + $0x8] sm:$0xff] %vm5776, %v5775
        %v5782 = vrot.slane %v278, 2
        %v5783 = vrot.slane %v279, 2
        %v5784 = vsel %vm2199, %v5782, %v5783
        %v5785 = vrot.slane %v280, 2
        %v5786 = vsel %vm2199, %v5783, %v5785
        %5787 = vrot.lane.b32.xlu0 %v5784, 126
        %v5788 = vpop.permute.xlu0 %5787
        %5789 = vrot.lane.b32.xlu0 %v5786, 126
        %v5790 = vpop.permute.xlu0 %5789
        %v5793 = vadd.f32 %v5716, %v5788
        %v5794 = vadd.f32 %v5717, %v5790
        %s5795 = scalar_lea.vmem %s269, 16 [#allocation10]
        %5796 = vst.msk [vmem:[%s5795] sm:$0xff] %vm5776, %v5793
        %5797 = vst.msk [vmem:[%s5795 + $0x8] sm:$0xff] %vm5776, %v5794
        %v5801 = vrot.slane %v281, 2
        %v5802 = vrot.slane %v282, 2
        %v5803 = vsel %vm2199, %v5801, %v5802
        %v5804 = vrot.slane %v283, 2
        %v5805 = vsel %vm2199, %v5802, %v5804
        %5806 = vrot.lane.b32.xlu0 %v5803, 126
        %v5807 = vpop.permute.xlu0 %5806
        %5808 = vrot.lane.b32.xlu0 %v5805, 126
        %v5809 = vpop.permute.xlu0 %5808
        %v5812 = vadd.f32 %v5737, %v5807
        %v5813 = vadd.f32 %v5738, %v5809
        %s5814 = scalar_lea.vmem %s269, 32 [#allocation10]
        %5815 = vst.msk [vmem:[%s5814] sm:$0xff] %vm5776, %v5812
        %5816 = vst.msk [vmem:[%s5814 + $0x8] sm:$0xff] %vm5776, %v5813
        %v5820 = vrot.slane %v284, 2
        %v5821 = vrot.slane %v285, 2
        %v5822 = vsel %vm2199, %v5820, %v5821
        %v5823 = vrot.slane %v286, 2
        %v5824 = vsel %vm2199, %v5821, %v5823
        %5825 = vrot.lane.b32.xlu0 %v5822, 126
        %v5826 = vpop.permute.xlu0 %5825
        %5827 = vrot.lane.b32.xlu0 %v5824, 126
        %v5828 = vpop.permute.xlu0 %5827
        %v5831 = vadd.f32 %v5758, %v5826
        %v5832 = vadd.f32 %v5759, %v5828
        %s5833 = scalar_lea.vmem %s269, 48 [#allocation10]
        %5834 = vst.msk [vmem:[%s5833] sm:$0xff] %vm5776, %v5831
        %5835 = vst.msk [vmem:[%s5833 + $0x8] sm:$0xff] %vm5776, %v5832
        %s5836 = sand.u32 %s140, 1
        %s5837 = scalar_lea.sflag [#allocation3], %s5836
        %s5838 = sand.u32 %s140, 1
        %s5839 = smul.addr %s5838, 64
        %s5840 = scalar_lea.vmem [#allocation10], %s5839
        // Predicated region
        $region57: #{residual_block.1} parent=39 // pred_check
          %p5841 = pneg %p150
        $region58: #{residual_block.1} parent=39 // pred_check_branch
          %5843 = sbr.rel (%p5841) target = $region60
        $region59: #{residual_block.1} parent=39 // pred_region
          %s5845 = ssub.s32 1024, 1024
          %5846 = vsyncadd %s5837, %s5845
          %s5847 = smul.addr %s22, 8
          %s5848 = smul.addr %s5847, 128
          %s5849 = scalar_lea.hbm %s5, %s5848
          %s5850 = sshll.u32 %s5840, 4
          %s5851 = int_to_ptr.vmem [resolvable:$true] %s5850
          %5856 = dma.vmem_to_hbm [thread:$0]  %s5851, 1024, %s5849, %s5837, 128, 128, 8
        $region60: #{residual_block.1} parent=39 // pred_fallthru
          _
      $region40: #{residual_block.1} parent=5 // pred_fallthru
        _
      %p5857 = scmp.le.s32.totalorder 2, %s17
      // Predicated region
      $region61: #{residual_block.1} parent=5 // pred_check
        %p5858 = pneg %p5857
      $region62: #{residual_block.1} parent=5 // pred_check_branch
        %5860 = sbr.rel (%p5858) target = $region64
      $region63: #{residual_block.1} parent=5 // pred_region
        %s5861 = ssub.s32 %s17, 2
        // Predicated region
        $region65: #{residual_block.1} parent=63 // pred_check
          %p5862 = pneg %p156
        $region66: #{residual_block.1} parent=63 // pred_check_branch
          %5864 = sbr.rel (%p5862) target = $region68
        $region67: #{residual_block.1} parent=63 // pred_region
          %s5865 = sand.u32 %s141, 1
          %s5866 = scalar_lea.sflag [#allocation3], %s5865
          %s5867 = sand.u32 %s141, 1
          %s5868 = smul.addr %s5867, 64
          %s5869 = scalar_lea.vmem [#allocation10], %s5868
          %5870 = dma.done %s5866, 1024
        $region68: #{residual_block.1} parent=63 // pred_fallthru
          _
      $region64: #{residual_block.1} parent=5 // pred_fallthru
        _
    $region6: #{residual_block.1} parent=1 // loop_footer
      %s21 = sadd.s32 1, %s17
    $region7: #{residual_block.1} parent=1 // loop_footer_branch
      %16 = sbr.rel target = $region3
    $region8: #{residual_block.1} parent=1 // loop_exit
      _
    %5871 = vsyncpa [#allocation3], 1
    %s5872 = scalar_lea.sflag [#allocation3], 1
    %5873 = vsyncpa %s5872, 1
    %5874 = vsyncpa [#allocation4], 1
    %s5875 = scalar_lea.sflag [#allocation4], 1
    %5876 = vsyncpa %s5875, 1
    %5877 = vsyncpa [#allocation6], 1
    %5878 = vsyncpa [#allocation9], 1

</llo_original>
